<compile_context>
chip_gen: v7x
topology: tpu7x:2x2x1
jax: 0.10.0
libtpu: 0.0.40
codegen_flags: <defaults>
</compile_context>

<pallas_src>
import functools
import math

import jax
import jax.numpy as jnp
from jax.experimental import pallas as pl
from jax.experimental.pallas import tpu as pltpu

LANE = 128        # TPU lane width: predictor scores are written lane-dense
BN_EPS = 1e-5
AGG_EPS = 1e-6


def _dot(a, b):
    return jnp.dot(a, b, preferred_element_type=jnp.float32)


# ---------------------------------------------------------------------------
# Fused forward kernel
# ---------------------------------------------------------------------------
def _fused_forward_kernel(
        # graph + raw features (resident in VMEM for the whole pass)
        x_ref, eraw_ref, src_ref, dst_ref, src_t_ref, dst_t_ref,
        # encoder weights (resident, tiny, f32)
        nw1_ref, nb1_ref, nw2_ref, nb2_ref,
        ew1_ref, eb1_ref, ew2_ref, eb2_ref,
        # processor weights (streamed per layer; bf16 weights, f32 biases;
        # eval-mode BatchNorm pre-folded)
        wn_ref, bnode_ref, we_ref, be_ref, sh_ref, se_ref,
        # predictor weights (resident; bf16 weights, f32 biases)
        pw1s_ref, pw1d_ref, pw1e_ref, pb1_ref, pw2_ref, pb2_ref,
        # output
        out_ref,
        # scratch: h / e stay resident across all layers; msg is the shared
        # (E, 2H) bf16 message buffer for the two gated-mean scatter matmuls
        h_scr, e_scr, msg_scr,
        *, hidden):
    H = hidden
    layer = pl.program_id(0)

    # ---- encoder: runs only on the first grid step ------------------------
    @pl.when(layer == 0)
    def _encode():
        tn = jnp.maximum(_dot(x_ref[...], nw1_ref[...]) + nb1_ref[...], 0.0)
        h_scr[...] = _dot(tn, nw2_ref[...]) + nb2_ref[...]
        te = jnp.maximum(_dot(eraw_ref[...], ew1_ref[...]) + eb1_ref[...], 0.0)
        e_scr[...] = _dot(te, ew2_ref[...]) + eb2_ref[...]

    # one-hot incidence kept in bf16 end-to-end (exact for {0,1}); fed to the
    # MXU as-is — no per-layer f32 upcast, no extra (E,N)/(N,E) f32 buffers.
    src = src_ref[...]        # (E, N) bf16
    dst = dst_ref[...]        # (E, N) bf16
    src_t = src_t_ref[...]    # (N, E) bf16
    dst_t = dst_t_ref[...]    # (N, E) bf16

    h = h_scr[...]            # (N, H) f32 — elementwise math stays f32 (v5e)
    e = e_scr[...]            # (E, H) f32

    # ---- SymGAT processor layer (BatchNorm folded into weights) -----------
    # five node-side projections share LHS h -> one (H, 5H) bf16 matmul,
    # column order [A1 | A2 | B2 | A3 | B1] so the src- and dst-gathered
    # pairs are contiguous 2H-wide (lane-aligned) blocks.
    all5 = _dot(h.astype(jnp.bfloat16), wn_ref[...]) + bnode_ref[...]  # (N,5H) f32
    a1h = all5[:, :H]
    src_blk = all5[:, H:3 * H].astype(jnp.bfloat16)    # [A2h | B2h] bf16
    dst_blk = all5[:, 3 * H:].astype(jnp.bfloat16)     # [A3h | B1h] bf16

    g_src = _dot(src, src_blk)                          # (E,2H) f32 [A2h_s|B2h_s]
    g_dst = _dot(dst, dst_blk)                          # (E,2H) f32 [A3h_d|B1h_d]
    b3e = _dot(e.astype(jnp.bfloat16), we_ref[...]) + be_ref[...]     # (E, H) f32

    # edge update: e <- e + relu(bn_e(B1 h_dst + B2 h_src + B3 e)) (BN folded)
    e_new = e + jnp.maximum(
        g_dst[:, H:] + g_src[:, H:] + b3e + se_ref[...], 0.0)
    sigma = jax.nn.sigmoid(e_new)                        # (E, H) f32 edge gates

    # symmetric gated-mean aggregation via the shared (E, 2H) bf16 scratch:
    # denominator half (sigma) written once, numerator half overwritten
    # between the two scatter matmuls (no concats, one fewer (E,H) copy).
    msg_scr[:, H:] = sigma.astype(jnp.bfloat16)
    msg_scr[:, :H] = (g_src[:, :H] * sigma).astype(jnp.bfloat16)
    fwd = _dot(dst_t, msg_scr[...])                      # (N, 2H) f32 [num|den]
    msg_scr[:, :H] = (g_dst[:, :H] * sigma).astype(jnp.bfloat16)
    bwd = _dot(src_t, msg_scr[...])                      # (N, 2H) f32 [num|den]

    # keep multiply order num * recip(den): degree-0 rows give 0 * recip(eps).
    h_fwd = fwd[:, :H] * pl.reciprocal(fwd[:, H:] + AGG_EPS, approx=True)
    h_bwd = bwd[:, :H] * pl.reciprocal(bwd[:, H:] + AGG_EPS, approx=True)

    h_new = h + jnp.maximum(a1h + h_fwd + h_bwd + sh_ref[...], 0.0)

    h_scr[...] = h_new
    e_scr[...] = e_new

    # ---- predictor: runs only on the last grid step -----------------------
    @pl.when(layer == pl.num_programs(0) - 1)
    def _predict():
        h_bf = h_new.astype(jnp.bfloat16)
        hs = _dot(src, h_bf)                             # (E, H) f32 h at src
        hd = _dot(dst, h_bf)                             # (E, H) f32 h at dst
        z = jnp.maximum(
            _dot(hs.astype(jnp.bfloat16), pw1s_ref[...])
            + _dot(hd.astype(jnp.bfloat16), pw1d_ref[...])
            + _dot(e_new.astype(jnp.bfloat16), pw1e_ref[...])
            + pb1_ref[...], 0.0)
        # pw2 is an (S, 128) bf16 slab with the real weights in column 0, so
        # the final store is a full-lane vst instead of a masked (E, 1) store.
        # TODO(synk): at production E, pack scores (ceil(E/128), 128) instead.
        out_ref[...] = _dot(z.astype(jnp.bfloat16), pw2_ref[...]) + pb2_ref[...]


# ---------------------------------------------------------------------------
# BlockSpec helpers + VMEM budgeting + wrapper
# ---------------------------------------------------------------------------
def _const_index_map(ndim):
    def imap(l):
        del l
        return (0,) * ndim
    return imap


def _layer_index_map(ndim_tail):
    def imap(l):
        return (l,) + (0,) * ndim_tail
    return imap


def _resident_spec(a):
    # whole array, constant block index -> DMA'd once, stays in VMEM
    return pl.BlockSpec(a.shape, _const_index_map(a.ndim))


def _per_layer_spec(a):
    # leading (layer) axis squeezed, indexed by the grid step
    return pl.BlockSpec((None,) + a.shape[1:], _layer_index_map(a.ndim - 1))


def _padded_block_bytes(shape, dtype):
    """Conservative VMEM bytes of one block after (sublane, lane) tiling."""
    itemsize = jnp.dtype(dtype).itemsize
    dims = list(shape)
    if dims:
        dims[-1] = -(-dims[-1] // 128) * 128
    if len(dims) >= 2:
        sub = max(8, 32 // itemsize)          # 8 for f32, 16 for bf16
        dims[-2] = -(-dims[-2] // sub) * sub
    return math.prod(dims) * itemsize if dims else itemsize


@jax.jit
def forward_pallas(kp, x, e, src_oh, dst_oh, src_t, dst_t):
    n_nodes, n_edges = x.shape[0], e.shape[0]
    n_layers, hidden = kp["w_node"].shape[0], kp["w_node"].shape[1]

    resident_a = (x, e, src_oh, dst_oh, src_t, dst_t,
                  kp["n_w1"], kp["n_b1"], kp["n_w2"], kp["n_b2"],
                  kp["e_w1"], kp["e_b1"], kp["e_w2"], kp["e_b2"])
    streamed = (kp["w_node"], kp["b_node"], kp["w_edge"], kp["b_edge"],
                kp["shift_h"], kp["shift_e"])
    resident_b = (kp["w1s"], kp["w1d"], kp["w1e"], kp["b1"],
                  kp["w2_slab"], kp["b2_slab"])
    args = resident_a + streamed + resident_b
    in_specs = ([_resident_spec(a) for a in resident_a]
                + [_per_layer_spec(a) for a in streamed]
                + [_resident_spec(a) for a in resident_b])

    # Explicit VMEM budget (re-derived for v7x's 64 MiB): 2x double-buffered
    # input/output blocks + persistent scratch + headroom for intermediates.
    in_bytes = (sum(_padded_block_bytes(a.shape, a.dtype)
                    for a in resident_a + resident_b)
                + sum(_padded_block_bytes(a.shape[1:], a.dtype)
                      for a in streamed))
    out_bytes = _padded_block_bytes((n_edges, LANE), jnp.float32)
    scratch_bytes = (_padded_block_bytes((n_nodes, hidden), jnp.float32)
                     + _padded_block_bytes((n_edges, hidden), jnp.float32)
                     + _padded_block_bytes((n_edges, 2 * hidden), jnp.bfloat16))
    vmem_limit = 2 * (in_bytes + out_bytes) + scratch_bytes + (16 << 20)
    vmem_limit = int(min(max(vmem_limit, 32 << 20), 100 << 20))

    # TODO(synk): for v7x megacore add a "parallel" edge/node tile axis; the
    # single layer axis must stay "arbitrary" (sequential dependence).
    scores_slab = pl.pallas_call(
        functools.partial(_fused_forward_kernel, hidden=hidden),
        out_shape=jax.ShapeDtypeStruct((n_edges, LANE), jnp.float32),
        grid=(n_layers,),
        in_specs=in_specs,
        out_specs=pl.BlockSpec((n_edges, LANE), lambda l: (0, 0)),
        scratch_shapes=[pltpu.VMEM((n_nodes, hidden), jnp.float32),
                        pltpu.VMEM((n_edges, hidden), jnp.float32),
                        pltpu.VMEM((n_edges, 2 * hidden), jnp.bfloat16)],
        compiler_params=pltpu.CompilerParams(
            dimension_semantics=("arbitrary",),
            vmem_limit_bytes=vmem_limit),
    )(*args)
    return scores_slab[:, :1]                      # squeeze lane-dense slab


# ---------------------------------------------------------------------------
# Pure-JAX reference (unfused, f32, explicit eval-mode BatchNorm)
# ---------------------------------------------------------------------------
def _bn_eval(x, p):  # p: (4, 1, H) = [gamma, beta, running_mean, running_var]
    gamma, beta, mean, var = p[0], p[1], p[2], p[3]
    return (x - mean) * gamma * jax.lax.rsqrt(var + BN_EPS) + beta


@jax.jit
def forward_ref(raw, x, e, src_oh, dst_oh):
    enc = raw["encoder"]
    h = jnp.maximum(x @ enc["n_w1"] + enc["n_b1"], 0.0) @ enc["n_w2"] + enc["n_b2"]
    eh = jnp.maximum(e @ enc["e_w1"] + enc["e_b1"], 0.0) @ enc["e_w2"] + enc["e_b2"]
    src_t, dst_t = src_oh.T, dst_oh.T
    for lp in raw["gnn"]:
        w, b = lp["w"], lp["b"]
        A1h = h @ w[0] + b[0]
        A2h = h @ w[1] + b[1]
        A3h = h @ w[2] + b[2]
        B1h = h @ w[3] + b[3]
        B2h = h @ w[4] + b[4]
        B3e = eh @ w[5] + b[5]
        e_tmp = dst_oh @ B1h + src_oh @ B2h + B3e
        e_new = eh + jnp.maximum(_bn_eval(e_tmp, lp["bn_e"]), 0.0)
        sigma = jax.nn.sigmoid(e_new)
        A2h_src = src_oh @ A2h
        A3h_dst = dst_oh @ A3h
        h_fwd = (dst_t @ (A2h_src * sigma)) / (dst_t @ sigma + AGG_EPS)
        h_bwd = (src_t @ (A3h_dst * sigma)) / (src_t @ sigma + AGG_EPS)
        h = h + jnp.maximum(_bn_eval(A1h + h_fwd + h_bwd, lp["bn_h"]), 0.0)
        eh = e_new
    pr = raw["predictor"]
    hs = src_oh @ h
    hd = dst_oh @ h
    z = jnp.maximum(hs @ pr["w1s"] + hd @ pr["w1d"] + eh @ pr["w1e"] + pr["b1"], 0.0)
    return z @ pr["w2"] + pr["b2"]


# ---------------------------------------------------------------------------
# Parameters: PyTorch-style init + kernel-side prep (BN fold + matmul fusion
# + bf16 weight storage for all MXU-bound operands)
# ---------------------------------------------------------------------------
def init_raw_params(key, f_node, f_edge, f_inter, hidden, n_layers, n_scores):
    keys = iter(jax.random.split(key, 64))

    def u(shape, fan_in):
        s = float(fan_in) ** -0.5
        return jax.random.uniform(next(keys), shape, jnp.float32, -s, s)

    def bn_params(h):  # non-trivial running stats so the BN fold is exercised
        gamma = 1.0 + 0.5 * jax.random.uniform(next(keys), (1, h), jnp.float32, -1., 1.)
        beta = 0.5 * jax.random.uniform(next(keys), (1, h), jnp.float32, -1., 1.)
        mean = 0.5 * jax.random.uniform(next(keys), (1, h), jnp.float32, -1., 1.)
        var = 1.0 + 0.5 * jax.random.uniform(next(keys), (1, h), jnp.float32, -1., 1.)
        return jnp.stack([gamma, beta, mean, var])     # (4, 1, H)

    enc = {
        "n_w1": u((f_node, f_inter), f_node), "n_b1": u((1, f_inter), f_node),
        "n_w2": u((f_inter, hidden), f_inter), "n_b2": u((1, hidden), f_inter),
        "e_w1": u((f_edge, f_inter), f_edge), "e_b1": u((1, f_inter), f_edge),
        "e_w2": u((f_inter, hidden), f_inter), "e_b2": u((1, hidden), f_inter),
    }
    gnn = []
    for _ in range(n_layers):
        gnn.append({
            "w": u((6, hidden, hidden), hidden),   # [A1, A2, A3, B1, B2, B3]
            "b": u((6, 1, hidden), hidden),
            "bn_h": bn_params(hidden),
            "bn_e": bn_params(hidden),
        })
    pred = {
        "w1s": u((hidden, n_scores), 3 * hidden),
        "w1d": u((hidden, n_scores), 3 * hidden),
        "w1e": u((hidden, n_scores), 3 * hidden),
        "b1": u((1, n_scores), 3 * hidden),
        "w2": u((n_scores, 1), n_scores),
        "b2": u((1, 1), n_scores),
    }
    return {"encoder": enc, "gnn": gnn, "predictor": pred}


def prepare_kernel_params(raw):
    """Fold eval-mode BatchNorm into the processor weights, fuse the five
    node-side projections into one (H, 5H) matrix per layer (column order
    [A1 | A2 | B2 | A3 | B1]), store all streamed / predictor matmul weights
    in bf16 (biases stay f32), and pad the predictor output to a lane-dense
    (S, 128) slab."""
    kp = dict(raw["encoder"])          # encoder weights stay f32 (tiny, resident)
    w_node, b_node, w_edge, b_edge, shift_h, shift_e = [], [], [], [], [], []
    for lp in raw["gnn"]:
        w, b = lp["w"], lp["b"]
        g_h, bt_h, m_h, v_h = lp["bn_h"]
        g_e, bt_e, m_e, v_e = lp["bn_e"]
        s_h = g_h * jax.lax.rsqrt(v_h + BN_EPS)
        s_e = g_e * jax.lax.rsqrt(v_e + BN_EPS)
        # raw order: [A1, A2, A3, B1, B2, B3]; fused order [A1 | A2 | B2 | A3 | B1]
        w_node.append(jnp.concatenate(
            [w[0] * s_h, w[1] * s_h, w[4] * s_e, w[2] * s_h, w[3] * s_e], axis=1))
        b_node.append(jnp.concatenate(
            [b[0] * s_h, b[1] * s_h, b[4] * s_e, b[2] * s_h, b[3] * s_e], axis=1))
        w_edge.append(w[5] * s_e)
        b_edge.append(b[5] * s_e)
        shift_h.append(bt_h - m_h * s_h)
        shift_e.append(bt_e - m_e * s_e)
    kp["w_node"] = jnp.stack(w_node).astype(jnp.bfloat16)   # (L, H, 5H) bf16
    kp["b_node"] = jnp.stack(b_node)                         # (L, 1, 5H) f32
    kp["w_edge"] = jnp.stack(w_edge).astype(jnp.bfloat16)    # (L, H, H)  bf16
    kp["b_edge"] = jnp.stack(b_edge)                         # (L, 1, H)  f32
    kp["shift_h"] = jnp.stack(shift_h)                       # (L, 1, H)  f32
    kp["shift_e"] = jnp.stack(shift_e)                       # (L, 1, H)  f32

    pred = raw["predictor"]
    n_scores = pred["w2"].shape[0]
    kp["w1s"] = pred["w1s"].astype(jnp.bfloat16)
    kp["w1d"] = pred["w1d"].astype(jnp.bfloat16)
    kp["w1e"] = pred["w1e"].astype(jnp.bfloat16)
    kp["b1"] = pred["b1"]
    kp["w2_slab"] = jnp.zeros((n_scores, LANE), jnp.float32).at[:, :1].set(
        pred["w2"]).astype(jnp.bfloat16)
    kp["b2_slab"] = jnp.zeros((1, LANE), jnp.float32).at[:, :1].set(pred["b2"])
    return kp


# ---------------------------------------------------------------------------
if __name__ == "__main__":
    N_NODES, N_EDGES = 64, 128
    F_NODE, F_EDGE = 2, 2
    F_INTER, HIDDEN = 16, 128     # GNNome-style hidden size; 128 keeps every
    N_LAYERS = 2                  # fused-matmul slice / scratch-slice lane-aligned
    N_SCORES = 128                # lane-dense hidden edge-score width

    key = jax.random.PRNGKey(0)
    k_par, k_x, k_e, k_s, k_d = jax.random.split(key, 5)

    raw = init_raw_params(k_par, F_NODE, F_EDGE, F_INTER, HIDDEN,
                          N_LAYERS, N_SCORES)
    kparams = prepare_kernel_params(raw)

    x = jax.random.normal(k_x, (N_NODES, F_NODE), jnp.float32)
    e = jax.random.normal(k_e, (N_EDGES, F_EDGE), jnp.float32)
    src_idx = jax.random.randint(k_s, (N_EDGES,), 0, N_NODES)
    dst_idx = jax.random.randint(k_d, (N_EDGES,), 0, N_NODES)
    # dense one-hot incidence (toy graphs only); bf16 is exact for {0,1} and
    # runs the gather/scatter matmuls at the bf16 MXU rate.
    src_oh = jax.nn.one_hot(src_idx, N_NODES, dtype=jnp.bfloat16)   # (E, N)
    dst_oh = jax.nn.one_hot(dst_idx, N_NODES, dtype=jnp.bfloat16)   # (E, N)
    src_t, dst_t = src_oh.T, dst_oh.T                               # (N, E)

    scores = forward_pallas(kparams, x, e, src_oh, dst_oh, src_t, dst_t)
    scores = jax.block_until_ready(scores)

    ref = jax.block_until_ready(
        forward_ref(raw, x, e,
                    src_oh.astype(jnp.float32), dst_oh.astype(jnp.float32)))

    assert scores.shape == (N_EDGES, 1), scores.shape
    assert bool(jnp.all(jnp.isfinite(scores))), "non-finite scores"
    max_abs_ref = float(jnp.max(jnp.abs(ref)))
    max_diff = float(jnp.max(jnp.abs(scores - ref)))
    # bf16 matmul operands + approx reciprocal vs exact-f32 reference
    assert max_diff < 5e-2 * (1.0 + max_abs_ref), (
        f"kernel vs reference mismatch: {max_diff} (|ref|max={max_abs_ref})")

    print("KERNEL_OK")
</pallas_src>

<mosaic_0001>
module attributes {stable_mosaic.version = 11 : i64} {
  func.func @_fused_forward_kernel(%arg0: i32, %arg1: memref<64x2xf32, #tpu.memory_space<vmem>>, %arg2: memref<128x2xf32, #tpu.memory_space<vmem>>, %arg3: memref<128x64xbf16, #tpu.memory_space<vmem>>, %arg4: memref<128x64xbf16, #tpu.memory_space<vmem>>, %arg5: memref<64x128xbf16, #tpu.memory_space<vmem>>, %arg6: memref<64x128xbf16, #tpu.memory_space<vmem>>, %arg7: memref<2x16xf32, #tpu.memory_space<vmem>>, %arg8: memref<1x16xf32, #tpu.memory_space<vmem>>, %arg9: memref<16x128xf32, #tpu.memory_space<vmem>>, %arg10: memref<1x128xf32, #tpu.memory_space<vmem>>, %arg11: memref<2x16xf32, #tpu.memory_space<vmem>>, %arg12: memref<1x16xf32, #tpu.memory_space<vmem>>, %arg13: memref<16x128xf32, #tpu.memory_space<vmem>>, %arg14: memref<1x128xf32, #tpu.memory_space<vmem>>, %arg15: memref<1x128x640xbf16, #tpu.memory_space<vmem>>, %arg16: memref<1x1x640xf32, #tpu.memory_space<vmem>>, %arg17: memref<1x128x128xbf16, #tpu.memory_space<vmem>>, %arg18: memref<1x1x128xf32, #tpu.memory_space<vmem>>, %arg19: memref<1x1x128xf32, #tpu.memory_space<vmem>>, %arg20: memref<1x1x128xf32, #tpu.memory_space<vmem>>, %arg21: memref<128x128xbf16, #tpu.memory_space<vmem>>, %arg22: memref<128x128xbf16, #tpu.memory_space<vmem>>, %arg23: memref<128x128xbf16, #tpu.memory_space<vmem>>, %arg24: memref<1x128xf32, #tpu.memory_space<vmem>>, %arg25: memref<128x128xbf16, #tpu.memory_space<vmem>>, %arg26: memref<1x128xf32, #tpu.memory_space<vmem>>, %arg27: memref<128x128xf32, #tpu.memory_space<vmem>>, %arg28: memref<64x128xf32, #tpu.memory_space<vmem>>, %arg29: memref<128x128xf32, #tpu.memory_space<vmem>>, %arg30: memref<128x256xbf16, #tpu.memory_space<vmem>>) attributes {dimension_semantics = [#tpu.dimension_semantics<arbitrary>], iteration_bounds = array<i64: 2>, scalar_prefetch = 0 : i64, scratch_operands = 3 : i64, tpu.core_type = #tpu.core_type<tc>, window_params = [{pipeline_mode = #tpu.pipeline_mode<synchronous>, transform_indices = @transform_0, window_bounds = array<i64: 64, 2>}, {pipeline_mode = #tpu.pipeline_mode<synchronous>, transform_indices = @transform_1, window_bounds = array<i64: 128, 2>}, {pipeline_mode = #tpu.pipeline_mode<synchronous>, transform_indices = @transform_2, window_bounds = array<i64: 128, 64>}, {pipeline_mode = #tpu.pipeline_mode<synchronous>, transform_indices = @transform_3, window_bounds = array<i64: 128, 64>}, {pipeline_mode = #tpu.pipeline_mode<synchronous>, transform_indices = @transform_4, window_bounds = array<i64: 64, 128>}, {pipeline_mode = #tpu.pipeline_mode<synchronous>, transform_indices = @transform_5, window_bounds = array<i64: 64, 128>}, {pipeline_mode = #tpu.pipeline_mode<synchronous>, transform_indices = @transform_6, window_bounds = array<i64: 2, 16>}, {pipeline_mode = #tpu.pipeline_mode<synchronous>, transform_indices = @transform_7, window_bounds = array<i64: 1, 16>}, {pipeline_mode = #tpu.pipeline_mode<synchronous>, transform_indices = @transform_8, window_bounds = array<i64: 16, 128>}, {pipeline_mode = #tpu.pipeline_mode<synchronous>, transform_indices = @transform_9, window_bounds = array<i64: 1, 128>}, {pipeline_mode = #tpu.pipeline_mode<synchronous>, transform_indices = @transform_10, window_bounds = array<i64: 2, 16>}, {pipeline_mode = #tpu.pipeline_mode<synchronous>, transform_indices = @transform_11, window_bounds = array<i64: 1, 16>}, {pipeline_mode = #tpu.pipeline_mode<synchronous>, transform_indices = @transform_12, window_bounds = array<i64: 16, 128>}, {pipeline_mode = #tpu.pipeline_mode<synchronous>, transform_indices = @transform_13, window_bounds = array<i64: 1, 128>}, {transform_indices = @transform_14, window_bounds = array<i64: 1, 128, 640>}, {transform_indices = @transform_15, window_bounds = array<i64: 1, 1, 640>}, {transform_indices = @transform_16, window_bounds = array<i64: 1, 128, 128>}, {transform_indices = @transform_17, window_bounds = array<i64: 1, 1, 128>}, {transform_indices = @transform_18, window_bounds = array<i64: 1, 1, 128>}, {transform_indices = @transform_19, window_bounds = array<i64: 1, 1, 128>}, {pipeline_mode = #tpu.pipeline_mode<synchronous>, transform_indices = @transform_20, window_bounds = array<i64: 128, 128>}, {pipeline_mode = #tpu.pipeline_mode<synchronous>, transform_indices = @transform_21, window_bounds = array<i64: 128, 128>}, {pipeline_mode = #tpu.pipeline_mode<synchronous>, transform_indices = @transform_22, window_bounds = array<i64: 128, 128>}, {pipeline_mode = #tpu.pipeline_mode<synchronous>, transform_indices = @transform_23, window_bounds = array<i64: 1, 128>}, {pipeline_mode = #tpu.pipeline_mode<synchronous>, transform_indices = @transform_24, window_bounds = array<i64: 128, 128>}, {pipeline_mode = #tpu.pipeline_mode<synchronous>, transform_indices = @transform_25, window_bounds = array<i64: 1, 128>}, {pipeline_mode = #tpu.pipeline_mode<synchronous>, transform_indices = @transform_26, window_bounds = array<i64: 128, 128>}]} {
    %c0_i32 = arith.constant 0 : i32
    %0 = arith.cmpi eq, %arg0, %c0_i32 : i32
    %1 = arith.extui %0 : i1 to i32
    %c0_i32_0 = arith.constant 0 : i32
    %2 = arith.cmpi ne, %1, %c0_i32_0 : i32
    scf.if %2 {
      %c0_54 = arith.constant 0 : index
      %c0_55 = arith.constant 0 : index
      %88 = vector.load %arg1[%c0_54, %c0_55] : memref<64x2xf32, #tpu.memory_space<vmem>>, vector<64x2xf32>
      %c0_56 = arith.constant 0 : index
      %c0_57 = arith.constant 0 : index
      %89 = vector.load %arg7[%c0_56, %c0_57] : memref<2x16xf32, #tpu.memory_space<vmem>>, vector<2x16xf32>
      %cst_58 = arith.constant dense<0.000000e+00> : vector<64x16xf32>
      %90 = tpu.matmul %88, %89, %cst_58 {dimension_numbers = #tpu.dot_dimension_numbers<[1], [0], [0], [1], [0, 0, 1, 1], [], []>} : vector<64x2xf32>, vector<2x16xf32>, vector<64x16xf32> -> vector<64x16xf32>
      %c0_59 = arith.constant 0 : index
      %c0_60 = arith.constant 0 : index
      %91 = vector.load %arg8[%c0_59, %c0_60] : memref<1x16xf32, #tpu.memory_space<vmem>>, vector<1x16xf32>
      %92 = vector.broadcast %91 : vector<1x16xf32> to vector<64x16xf32>
      %93 = arith.addf %90, %92 : vector<64x16xf32>
      %cst_61 = arith.constant 0.000000e+00 : f32
      %94 = vector.broadcast %cst_61 : f32 to vector<64x16xf32>
      %95 = arith.maximumf %93, %94 : vector<64x16xf32>
      %c0_62 = arith.constant 0 : index
      %c0_63 = arith.constant 0 : index
      %96 = vector.load %arg9[%c0_62, %c0_63] : memref<16x128xf32, #tpu.memory_space<vmem>>, vector<16x128xf32>
      %cst_64 = arith.constant dense<0.000000e+00> : vector<64x128xf32>
      %97 = tpu.matmul %95, %96, %cst_64 {dimension_numbers = #tpu.dot_dimension_numbers<[1], [0], [0], [1], [0, 0, 1, 1], [], []>} : vector<64x16xf32>, vector<16x128xf32>, vector<64x128xf32> -> vector<64x128xf32>
      %c0_65 = arith.constant 0 : index
      %c0_66 = arith.constant 0 : index
      %98 = vector.load %arg10[%c0_65, %c0_66] : memref<1x128xf32, #tpu.memory_space<vmem>>, vector<1x128xf32>
      %99 = vector.broadcast %98 : vector<1x128xf32> to vector<64x128xf32>
      %100 = arith.addf %97, %99 : vector<64x128xf32>
      %c0_67 = arith.constant 0 : index
      %c0_68 = arith.constant 0 : index
      %101 = vector.load %arg28[%c0_67, %c0_68] : memref<64x128xf32, #tpu.memory_space<vmem>>, vector<64x128xf32>
      tpu.vector_store %arg28[%c0_67, %c0_68], %100 {strides = array<i32>} : memref<64x128xf32, #tpu.memory_space<vmem>>, vector<64x128xf32>,
      %c0_69 = arith.constant 0 : index
      %c0_70 = arith.constant 0 : index
      %102 = vector.load %arg2[%c0_69, %c0_70] : memref<128x2xf32, #tpu.memory_space<vmem>>, vector<128x2xf32>
      %c0_71 = arith.constant 0 : index
      %c0_72 = arith.constant 0 : index
      %103 = vector.load %arg11[%c0_71, %c0_72] : memref<2x16xf32, #tpu.memory_space<vmem>>, vector<2x16xf32>
      %cst_73 = arith.constant dense<0.000000e+00> : vector<128x16xf32>
      %104 = tpu.matmul %102, %103, %cst_73 {dimension_numbers = #tpu.dot_dimension_numbers<[1], [0], [0], [1], [0, 0, 1, 1], [], []>} : vector<128x2xf32>, vector<2x16xf32>, vector<128x16xf32> -> vector<128x16xf32>
      %c0_74 = arith.constant 0 : index
      %c0_75 = arith.constant 0 : index
      %105 = vector.load %arg12[%c0_74, %c0_75] : memref<1x16xf32, #tpu.memory_space<vmem>>, vector<1x16xf32>
      %106 = vector.broadcast %105 : vector<1x16xf32> to vector<128x16xf32>
      %107 = arith.addf %104, %106 : vector<128x16xf32>
      %cst_76 = arith.constant 0.000000e+00 : f32
      %108 = vector.broadcast %cst_76 : f32 to vector<128x16xf32>
      %109 = arith.maximumf %107, %108 : vector<128x16xf32>
      %c0_77 = arith.constant 0 : index
      %c0_78 = arith.constant 0 : index
      %110 = vector.load %arg13[%c0_77, %c0_78] : memref<16x128xf32, #tpu.memory_space<vmem>>, vector<16x128xf32>
      %cst_79 = arith.constant dense<0.000000e+00> : vector<128x128xf32>
      %111 = tpu.matmul %109, %110, %cst_79 {dimension_numbers = #tpu.dot_dimension_numbers<[1], [0], [0], [1], [0, 0, 1, 1], [], []>} : vector<128x16xf32>, vector<16x128xf32>, vector<128x128xf32> -> vector<128x128xf32>
      %c0_80 = arith.constant 0 : index
      %c0_81 = arith.constant 0 : index
      %112 = vector.load %arg14[%c0_80, %c0_81] : memref<1x128xf32, #tpu.memory_space<vmem>>, vector<1x128xf32>
      %113 = vector.broadcast %112 : vector<1x128xf32> to vector<128x128xf32>
      %114 = arith.addf %111, %113 : vector<128x128xf32>
      %c0_82 = arith.constant 0 : index
      %c0_83 = arith.constant 0 : index
      %115 = vector.load %arg29[%c0_82, %c0_83] : memref<128x128xf32, #tpu.memory_space<vmem>>, vector<128x128xf32>
      tpu.vector_store %arg29[%c0_82, %c0_83], %114 {strides = array<i32>} : memref<128x128xf32, #tpu.memory_space<vmem>>, vector<128x128xf32>,
    } else {
    }
    %c0 = arith.constant 0 : index
    %c0_1 = arith.constant 0 : index
    %3 = vector.load %arg3[%c0, %c0_1] : memref<128x64xbf16, #tpu.memory_space<vmem>>, vector<128x64xbf16>
    %c0_2 = arith.constant 0 : index
    %c0_3 = arith.constant 0 : index
    %4 = vector.load %arg4[%c0_2, %c0_3] : memref<128x64xbf16, #tpu.memory_space<vmem>>, vector<128x64xbf16>
    %c0_4 = arith.constant 0 : index
    %c0_5 = arith.constant 0 : index
    %5 = vector.load %arg5[%c0_4, %c0_5] : memref<64x128xbf16, #tpu.memory_space<vmem>>, vector<64x128xbf16>
    %c0_6 = arith.constant 0 : index
    %c0_7 = arith.constant 0 : index
    %6 = vector.load %arg6[%c0_6, %c0_7] : memref<64x128xbf16, #tpu.memory_space<vmem>>, vector<64x128xbf16>
    %c0_8 = arith.constant 0 : index
    %c0_9 = arith.constant 0 : index
    %7 = vector.load %arg28[%c0_8, %c0_9] : memref<64x128xf32, #tpu.memory_space<vmem>>, vector<64x128xf32>
    %c0_10 = arith.constant 0 : index
    %c0_11 = arith.constant 0 : index
    %8 = vector.load %arg29[%c0_10, %c0_11] : memref<128x128xf32, #tpu.memory_space<vmem>>, vector<128x128xf32>
    %9 = arith.truncf %7 : vector<64x128xf32> to vector<64x128xbf16>
    %c0_12 = arith.constant 0 : index
    %c0_13 = arith.constant 0 : index
    %c0_14 = arith.constant 0 : index
    %10 = vector.load %arg15[%c0_12, %c0_13, %c0_14] : memref<1x128x640xbf16, #tpu.memory_space<vmem>>, vector<1x128x640xbf16>
    %11 = vector.shape_cast %10 : vector<1x128x640xbf16> to vector<128x640xbf16>
    %cst = arith.constant dense<0.000000e+00> : vector<64x640xf32>
    %12 = tpu.matmul %9, %11, %cst {dimension_numbers = #tpu.dot_dimension_numbers<[1], [0], [0], [1], [0, 0, 1, 1], [], []>} : vector<64x128xbf16>, vector<128x640xbf16>, vector<64x640xf32> -> vector<64x640xf32>
    %c0_15 = arith.constant 0 : index
    %c0_16 = arith.constant 0 : index
    %c0_17 = arith.constant 0 : index
    %13 = vector.load %arg16[%c0_15, %c0_16, %c0_17] : memref<1x1x640xf32, #tpu.memory_space<vmem>>, vector<1x1x640xf32>
    %14 = vector.shape_cast %13 : vector<1x1x640xf32> to vector<1x640xf32>
    %15 = vector.broadcast %14 : vector<1x640xf32> to vector<64x640xf32>
    %16 = arith.addf %12, %15 : vector<64x640xf32>
    %17 = vector.extract_strided_slice %16 {offsets = [0, 0], sizes = [64, 128], strides = [1, 1]} : vector<64x640xf32> to vector<64x128xf32>
    %18 = vector.extract_strided_slice %16 {offsets = [0, 128], sizes = [64, 256], strides = [1, 1]} : vector<64x640xf32> to vector<64x256xf32>
    %19 = arith.truncf %18 : vector<64x256xf32> to vector<64x256xbf16>
    %20 = vector.extract_strided_slice %16 {offsets = [0, 384], sizes = [64, 256], strides = [1, 1]} : vector<64x640xf32> to vector<64x256xf32>
    %21 = arith.truncf %20 : vector<64x256xf32> to vector<64x256xbf16>
    %cst_18 = arith.constant dense<0.000000e+00> : vector<128x256xf32>
    %22 = tpu.matmul %3, %19, %cst_18 {dimension_numbers = #tpu.dot_dimension_numbers<[1], [0], [0], [1], [0, 0, 1, 1], [], []>} : vector<128x64xbf16>, vector<64x256xbf16>, vector<128x256xf32> -> vector<128x256xf32>
    %cst_19 = arith.constant dense<0.000000e+00> : vector<128x256xf32>
    %23 = tpu.matmul %4, %21, %cst_19 {dimension_numbers = #tpu.dot_dimension_numbers<[1], [0], [0], [1], [0, 0, 1, 1], [], []>} : vector<128x64xbf16>, vector<64x256xbf16>, vector<128x256xf32> -> vector<128x256xf32>
    %24 = arith.truncf %8 : vector<128x128xf32> to vector<128x128xbf16>
    %c0_20 = arith.constant 0 : index
    %c0_21 = arith.constant 0 : index
    %c0_22 = arith.constant 0 : index
    %25 = vector.load %arg17[%c0_20, %c0_21, %c0_22] : memref<1x128x128xbf16, #tpu.memory_space<vmem>>, vector<1x128x128xbf16>
    %26 = vector.shape_cast %25 : vector<1x128x128xbf16> to vector<128x128xbf16>
    %cst_23 = arith.constant dense<0.000000e+00> : vector<128x128xf32>
    %27 = tpu.matmul %24, %26, %cst_23 {dimension_numbers = #tpu.dot_dimension_numbers<[1], [0], [0], [1], [0, 0, 1, 1], [], []>} : vector<128x128xbf16>, vector<128x128xbf16>, vector<128x128xf32> -> vector<128x128xf32>
    %c0_24 = arith.constant 0 : index
    %c0_25 = arith.constant 0 : index
    %c0_26 = arith.constant 0 : index
    %28 = vector.load %arg18[%c0_24, %c0_25, %c0_26] : memref<1x1x128xf32, #tpu.memory_space<vmem>>, vector<1x1x128xf32>
    %29 = vector.shape_cast %28 : vector<1x1x128xf32> to vector<1x128xf32>
    %30 = vector.broadcast %29 : vector<1x128xf32> to vector<128x128xf32>
    %31 = arith.addf %27, %30 : vector<128x128xf32>
    %32 = vector.extract_strided_slice %23 {offsets = [0, 128], sizes = [128, 128], strides = [1, 1]} : vector<128x256xf32> to vector<128x128xf32>
    %33 = vector.extract_strided_slice %22 {offsets = [0, 128], sizes = [128, 128], strides = [1, 1]} : vector<128x256xf32> to vector<128x128xf32>
    %34 = arith.addf %32, %33 : vector<128x128xf32>
    %35 = arith.addf %34, %31 : vector<128x128xf32>
    %c0_27 = arith.constant 0 : index
    %c0_28 = arith.constant 0 : index
    %c0_29 = arith.constant 0 : index
    %36 = vector.load %arg20[%c0_27, %c0_28, %c0_29] : memref<1x1x128xf32, #tpu.memory_space<vmem>>, vector<1x1x128xf32>
    %37 = vector.shape_cast %36 : vector<1x1x128xf32> to vector<1x128xf32>
    %38 = vector.broadcast %37 : vector<1x128xf32> to vector<128x128xf32>
    %39 = arith.addf %35, %38 : vector<128x128xf32>
    %cst_30 = arith.constant 0.000000e+00 : f32
    %40 = vector.broadcast %cst_30 : f32 to vector<128x128xf32>
    %41 = arith.maximumf %39, %40 : vector<128x128xf32>
    %42 = arith.addf %8, %41 : vector<128x128xf32>
    %43 = arith.negf %42 : vector<128x128xf32>
    %44 = math.exp %43 : vector<128x128xf32>
    %cst_31 = arith.constant 1.000000e+00 : f32
    %45 = vector.broadcast %cst_31 : f32 to vector<128x128xf32>
    %46 = arith.addf %45, %44 : vector<128x128xf32>
    %47 = arith.divf %45, %46 : vector<128x128xf32>
    %48 = arith.truncf %47 : vector<128x128xf32> to vector<128x128xbf16>
    %c0_32 = arith.constant 0 : index
    %c128 = arith.constant 128 : index
    %49 = vector.load %arg30[%c0_32, %c128] : memref<128x256xbf16, #tpu.memory_space<vmem>>, vector<128x128xbf16>
    tpu.vector_store %arg30[%c0_32, %c128], %48 {strides = array<i32>} : memref<128x256xbf16, #tpu.memory_space<vmem>>, vector<128x128xbf16>,
    %50 = vector.extract_strided_slice %22 {offsets = [0, 0], sizes = [128, 128], strides = [1, 1]} : vector<128x256xf32> to vector<128x128xf32>
    %51 = arith.mulf %50, %47 : vector<128x128xf32>
    %52 = arith.truncf %51 : vector<128x128xf32> to vector<128x128xbf16>
    %c0_33 = arith.constant 0 : index
    %c0_34 = arith.constant 0 : index
    %53 = vector.load %arg30[%c0_33, %c0_34] : memref<128x256xbf16, #tpu.memory_space<vmem>>, vector<128x128xbf16>
    tpu.vector_store %arg30[%c0_33, %c0_34], %52 {strides = array<i32>} : memref<128x256xbf16, #tpu.memory_space<vmem>>, vector<128x128xbf16>,
    %c0_35 = arith.constant 0 : index
    %c0_36 = arith.constant 0 : index
    %54 = vector.load %arg30[%c0_35, %c0_36] : memref<128x256xbf16, #tpu.memory_space<vmem>>, vector<128x256xbf16>
    %cst_37 = arith.constant dense<0.000000e+00> : vector<64x256xf32>
    %55 = tpu.matmul %6, %54, %cst_37 {dimension_numbers = #tpu.dot_dimension_numbers<[1], [0], [0], [1], [0, 0, 1, 1], [], []>} : vector<64x128xbf16>, vector<128x256xbf16>, vector<64x256xf32> -> vector<64x256xf32>
    %56 = vector.extract_strided_slice %23 {offsets = [0, 0], sizes = [128, 128], strides = [1, 1]} : vector<128x256xf32> to vector<128x128xf32>
    %57 = arith.mulf %56, %47 : vector<128x128xf32>
    %58 = arith.truncf %57 : vector<128x128xf32> to vector<128x128xbf16>
    %c0_38 = arith.constant 0 : index
    %c0_39 = arith.constant 0 : index
    %59 = vector.load %arg30[%c0_38, %c0_39] : memref<128x256xbf16, #tpu.memory_space<vmem>>, vector<128x128xbf16>
    tpu.vector_store %arg30[%c0_38, %c0_39], %58 {strides = array<i32>} : memref<128x256xbf16, #tpu.memory_space<vmem>>, vector<128x128xbf16>,
    %c0_40 = arith.constant 0 : index
    %c0_41 = arith.constant 0 : index
    %60 = vector.load %arg30[%c0_40, %c0_41] : memref<128x256xbf16, #tpu.memory_space<vmem>>, vector<128x256xbf16>
    %cst_42 = arith.constant dense<0.000000e+00> : vector<64x256xf32>
    %61 = tpu.matmul %5, %60, %cst_42 {dimension_numbers = #tpu.dot_dimension_numbers<[1], [0], [0], [1], [0, 0, 1, 1], [], []>} : vector<64x128xbf16>, vector<128x256xbf16>, vector<64x256xf32> -> vector<64x256xf32>
    %62 = vector.extract_strided_slice %55 {offsets = [0, 0], sizes = [64, 128], strides = [1, 1]} : vector<64x256xf32> to vector<64x128xf32>
    %63 = vector.extract_strided_slice %55 {offsets = [0, 128], sizes = [64, 128], strides = [1, 1]} : vector<64x256xf32> to vector<64x128xf32>
    %cst_43 = arith.constant 9.99999997E-7 : f32
    %64 = vector.broadcast %cst_43 : f32 to vector<64x128xf32>
    %65 = arith.addf %63, %64 : vector<64x128xf32>
    %66 = tpu.reciprocal %65 {approx = true} : vector<64x128xf32> -> vector<64x128xf32>
    %67 = arith.mulf %62, %66 : vector<64x128xf32>
    %68 = vector.extract_strided_slice %61 {offsets = [0, 0], sizes = [64, 128], strides = [1, 1]} : vector<64x256xf32> to vector<64x128xf32>
    %69 = vector.extract_strided_slice %61 {offsets = [0, 128], sizes = [64, 128], strides = [1, 1]} : vector<64x256xf32> to vector<64x128xf32>
    %cst_44 = arith.constant 9.99999997E-7 : f32
    %70 = vector.broadcast %cst_44 : f32 to vector<64x128xf32>
    %71 = arith.addf %69, %70 : vector<64x128xf32>
    %72 = tpu.reciprocal %71 {approx = true} : vector<64x128xf32> -> vector<64x128xf32>
    %73 = arith.mulf %68, %72 : vector<64x128xf32>
    %74 = arith.addf %17, %67 : vector<64x128xf32>
    %75 = arith.addf %74, %73 : vector<64x128xf32>
    %c0_45 = arith.constant 0 : index
    %c0_46 = arith.constant 0 : index
    %c0_47 = arith.constant 0 : index
    %76 = vector.load %arg19[%c0_45, %c0_46, %c0_47] : memref<1x1x128xf32, #tpu.memory_space<vmem>>, vector<1x1x128xf32>
    %77 = vector.shape_cast %76 : vector<1x1x128xf32> to vector<1x128xf32>
    %78 = vector.broadcast %77 : vector<1x128xf32> to vector<64x128xf32>
    %79 = arith.addf %75, %78 : vector<64x128xf32>
    %cst_48 = arith.constant 0.000000e+00 : f32
    %80 = vector.broadcast %cst_48 : f32 to vector<64x128xf32>
    %81 = arith.maximumf %79, %80 : vector<64x128xf32>
    %82 = arith.addf %7, %81 : vector<64x128xf32>
    %c0_49 = arith.constant 0 : index
    %c0_50 = arith.constant 0 : index
    %83 = vector.load %arg28[%c0_49, %c0_50] : memref<64x128xf32, #tpu.memory_space<vmem>>, vector<64x128xf32>
    tpu.vector_store %arg28[%c0_49, %c0_50], %82 {strides = array<i32>} : memref<64x128xf32, #tpu.memory_space<vmem>>, vector<64x128xf32>,
    %c0_51 = arith.constant 0 : index
    %c0_52 = arith.constant 0 : index
    %84 = vector.load %arg29[%c0_51, %c0_52] : memref<128x128xf32, #tpu.memory_space<vmem>>, vector<128x128xf32>
    tpu.vector_store %arg29[%c0_51, %c0_52], %42 {strides = array<i32>} : memref<128x128xf32, #tpu.memory_space<vmem>>, vector<128x128xf32>,
    %c1_i32 = arith.constant 1 : i32
    %85 = arith.cmpi eq, %arg0, %c1_i32 : i32
    %86 = arith.extui %85 : i1 to i32
    %c0_i32_53 = arith.constant 0 : i32
    %87 = arith.cmpi ne, %86, %c0_i32_53 : i32
    scf.if %87 {
      %88 = arith.truncf %82 : vector<64x128xf32> to vector<64x128xbf16>
      %cst_54 = arith.constant dense<0.000000e+00> : vector<128x128xf32>
      %89 = tpu.matmul %3, %88, %cst_54 {dimension_numbers = #tpu.dot_dimension_numbers<[1], [0], [0], [1], [0, 0, 1, 1], [], []>} : vector<128x64xbf16>, vector<64x128xbf16>, vector<128x128xf32> -> vector<128x128xf32>
      %cst_55 = arith.constant dense<0.000000e+00> : vector<128x128xf32>
      %90 = tpu.matmul %4, %88, %cst_55 {dimension_numbers = #tpu.dot_dimension_numbers<[1], [0], [0], [1], [0, 0, 1, 1], [], []>} : vector<128x64xbf16>, vector<64x128xbf16>, vector<128x128xf32> -> vector<128x128xf32>
      %91 = arith.truncf %89 : vector<128x128xf32> to vector<128x128xbf16>
      %c0_56 = arith.constant 0 : index
      %c0_57 = arith.constant 0 : index
      %92 = vector.load %arg21[%c0_56, %c0_57] : memref<128x128xbf16, #tpu.memory_space<vmem>>, vector<128x128xbf16>
      %cst_58 = arith.constant dense<0.000000e+00> : vector<128x128xf32>
      %93 = tpu.matmul %91, %92, %cst_58 {dimension_numbers = #tpu.dot_dimension_numbers<[1], [0], [0], [1], [0, 0, 1, 1], [], []>} : vector<128x128xbf16>, vector<128x128xbf16>, vector<128x128xf32> -> vector<128x128xf32>
      %94 = arith.truncf %90 : vector<128x128xf32> to vector<128x128xbf16>
      %c0_59 = arith.constant 0 : index
      %c0_60 = arith.constant 0 : index
      %95 = vector.load %arg22[%c0_59, %c0_60] : memref<128x128xbf16, #tpu.memory_space<vmem>>, vector<128x128xbf16>
      %cst_61 = arith.constant dense<0.000000e+00> : vector<128x128xf32>
      %96 = tpu.matmul %94, %95, %cst_61 {dimension_numbers = #tpu.dot_dimension_numbers<[1], [0], [0], [1], [0, 0, 1, 1], [], []>} : vector<128x128xbf16>, vector<128x128xbf16>, vector<128x128xf32> -> vector<128x128xf32>
      %97 = arith.addf %93, %96 : vector<128x128xf32>
      %98 = arith.truncf %42 : vector<128x128xf32> to vector<128x128xbf16>
      %c0_62 = arith.constant 0 : index
      %c0_63 = arith.constant 0 : index
      %99 = vector.load %arg23[%c0_62, %c0_63] : memref<128x128xbf16, #tpu.memory_space<vmem>>, vector<128x128xbf16>
      %cst_64 = arith.constant dense<0.000000e+00> : vector<128x128xf32>
      %100 = tpu.matmul %98, %99, %cst_64 {dimension_numbers = #tpu.dot_dimension_numbers<[1], [0], [0], [1], [0, 0, 1, 1], [], []>} : vector<128x128xbf16>, vector<128x128xbf16>, vector<128x128xf32> -> vector<128x128xf32>
      %101 = arith.addf %97, %100 : vector<128x128xf32>
      %c0_65 = arith.constant 0 : index
      %c0_66 = arith.constant 0 : index
      %102 = vector.load %arg24[%c0_65, %c0_66] : memref<1x128xf32, #tpu.memory_space<vmem>>, vector<1x128xf32>
      %103 = vector.broadcast %102 : vector<1x128xf32> to vector<128x128xf32>
      %104 = arith.addf %101, %103 : vector<128x128xf32>
      %cst_67 = arith.constant 0.000000e+00 : f32
      %105 = vector.broadcast %cst_67 : f32 to vector<128x128xf32>
      %106 = arith.maximumf %104, %105 : vector<128x128xf32>
      %107 = arith.truncf %106 : vector<128x128xf32> to vector<128x128xbf16>
      %c0_68 = arith.constant 0 : index
      %c0_69 = arith.constant 0 : index
      %108 = vector.load %arg25[%c0_68, %c0_69] : memref<128x128xbf16, #tpu.memory_space<vmem>>, vector<128x128xbf16>
      %cst_70 = arith.constant dense<0.000000e+00> : vector<128x128xf32>
      %109 = tpu.matmul %107, %108, %cst_70 {dimension_numbers = #tpu.dot_dimension_numbers<[1], [0], [0], [1], [0, 0, 1, 1], [], []>} : vector<128x128xbf16>, vector<128x128xbf16>, vector<128x128xf32> -> vector<128x128xf32>
      %c0_71 = arith.constant 0 : index
      %c0_72 = arith.constant 0 : index
      %110 = vector.load %arg26[%c0_71, %c0_72] : memref<1x128xf32, #tpu.memory_space<vmem>>, vector<1x128xf32>
      %111 = vector.broadcast %110 : vector<1x128xf32> to vector<128x128xf32>
      %112 = arith.addf %109, %111 : vector<128x128xf32>
      %c0_73 = arith.constant 0 : index
      %c0_74 = arith.constant 0 : index
      %113 = vector.load %arg27[%c0_73, %c0_74] : memref<128x128xf32, #tpu.memory_space<vmem>>, vector<128x128xf32>
      tpu.vector_store %arg27[%c0_73, %c0_74], %112 {strides = array<i32>} : memref<128x128xf32, #tpu.memory_space<vmem>>, vector<128x128xf32>,
    } else {
    }
    return
  }
  func.func @transform_0(%arg0: i32) -> (i32, i32) {
    %c0_i32 = arith.constant 0 : i32
    %c0_i32_0 = arith.constant 0 : i32
    %c0_i32_1 = arith.constant 0 : i32
    return %c0_i32, %c0_i32_0 : i32, i32
  }
  func.func @transform_1(%arg0: i32) -> (i32, i32) {
    %c0_i32 = arith.constant 0 : i32
    %c0_i32_0 = arith.constant 0 : i32
    %c0_i32_1 = arith.constant 0 : i32
    return %c0_i32, %c0_i32_0 : i32, i32
  }
  func.func @transform_2(%arg0: i32) -> (i32, i32) {
    %c0_i32 = arith.constant 0 : i32
    %c0_i32_0 = arith.constant 0 : i32
    %c0_i32_1 = arith.constant 0 : i32
    return %c0_i32, %c0_i32_0 : i32, i32
  }
  func.func @transform_3(%arg0: i32) -> (i32, i32) {
    %c0_i32 = arith.constant 0 : i32
    %c0_i32_0 = arith.constant 0 : i32
    %c0_i32_1 = arith.constant 0 : i32
    return %c0_i32, %c0_i32_0 : i32, i32
  }
  func.func @transform_4(%arg0: i32) -> (i32, i32) {
    %c0_i32 = arith.constant 0 : i32
    %c0_i32_0 = arith.constant 0 : i32
    %c0_i32_1 = arith.constant 0 : i32
    return %c0_i32, %c0_i32_0 : i32, i32
  }
  func.func @transform_5(%arg0: i32) -> (i32, i32) {
    %c0_i32 = arith.constant 0 : i32
    %c0_i32_0 = arith.constant 0 : i32
    %c0_i32_1 = arith.constant 0 : i32
    return %c0_i32, %c0_i32_0 : i32, i32
  }
  func.func @transform_6(%arg0: i32) -> (i32, i32) {
    %c0_i32 = arith.constant 0 : i32
    %c0_i32_0 = arith.constant 0 : i32
    %c0_i32_1 = arith.constant 0 : i32
    return %c0_i32, %c0_i32_0 : i32, i32
  }
  func.func @transform_7(%arg0: i32) -> (i32, i32) {
    %c0_i32 = arith.constant 0 : i32
    %c0_i32_0 = arith.constant 0 : i32
    %c0_i32_1 = arith.constant 0 : i32
    return %c0_i32, %c0_i32_0 : i32, i32
  }
  func.func @transform_8(%arg0: i32) -> (i32, i32) {
    %c0_i32 = arith.constant 0 : i32
    %c0_i32_0 = arith.constant 0 : i32
    %c0_i32_1 = arith.constant 0 : i32
    return %c0_i32, %c0_i32_0 : i32, i32
  }
  func.func @transform_9(%arg0: i32) -> (i32, i32) {
    %c0_i32 = arith.constant 0 : i32
    %c0_i32_0 = arith.constant 0 : i32
    %c0_i32_1 = arith.constant 0 : i32
    return %c0_i32, %c0_i32_0 : i32, i32
  }
  func.func @transform_10(%arg0: i32) -> (i32, i32) {
    %c0_i32 = arith.constant 0 : i32
    %c0_i32_0 = arith.constant 0 : i32
    %c0_i32_1 = arith.constant 0 : i32
    return %c0_i32, %c0_i32_0 : i32, i32
  }
  func.func @transform_11(%arg0: i32) -> (i32, i32) {
    %c0_i32 = arith.constant 0 : i32
    %c0_i32_0 = arith.constant 0 : i32
    %c0_i32_1 = arith.constant 0 : i32
    return %c0_i32, %c0_i32_0 : i32, i32
  }
  func.func @transform_12(%arg0: i32) -> (i32, i32) {
    %c0_i32 = arith.constant 0 : i32
    %c0_i32_0 = arith.constant 0 : i32
    %c0_i32_1 = arith.constant 0 : i32
    return %c0_i32, %c0_i32_0 : i32, i32
  }
  func.func @transform_13(%arg0: i32) -> (i32, i32) {
    %c0_i32 = arith.constant 0 : i32
    %c0_i32_0 = arith.constant 0 : i32
    %c0_i32_1 = arith.constant 0 : i32
    return %c0_i32, %c0_i32_0 : i32, i32
  }
  func.func @transform_14(%arg0: i32) -> (i32, i32, i32) {
    %c0_i32 = arith.constant 0 : i32
    %c0_i32_0 = arith.constant 0 : i32
    %c0_i32_1 = arith.constant 0 : i32
    return %arg0, %c0_i32, %c0_i32_0 : i32, i32, i32
  }
  func.func @transform_15(%arg0: i32) -> (i32, i32, i32) {
    %c0_i32 = arith.constant 0 : i32
    %c0_i32_0 = arith.constant 0 : i32
    %c0_i32_1 = arith.constant 0 : i32
    return %arg0, %c0_i32, %c0_i32_0 : i32, i32, i32
  }
  func.func @transform_16(%arg0: i32) -> (i32, i32, i32) {
    %c0_i32 = arith.constant 0 : i32
    %c0_i32_0 = arith.constant 0 : i32
    %c0_i32_1 = arith.constant 0 : i32
    return %arg0, %c0_i32, %c0_i32_0 : i32, i32, i32
  }
  func.func @transform_17(%arg0: i32) -> (i32, i32, i32) {
    %c0_i32 = arith.constant 0 : i32
    %c0_i32_0 = arith.constant 0 : i32
    %c0_i32_1 = arith.constant 0 : i32
    return %arg0, %c0_i32, %c0_i32_0 : i32, i32, i32
  }
  func.func @transform_18(%arg0: i32) -> (i32, i32, i32) {
    %c0_i32 = arith.constant 0 : i32
    %c0_i32_0 = arith.constant 0 : i32
    %c0_i32_1 = arith.constant 0 : i32
    return %arg0, %c0_i32, %c0_i32_0 : i32, i32, i32
  }
  func.func @transform_19(%arg0: i32) -> (i32, i32, i32) {
    %c0_i32 = arith.constant 0 : i32
    %c0_i32_0 = arith.constant 0 : i32
    %c0_i32_1 = arith.constant 0 : i32
    return %arg0, %c0_i32, %c0_i32_0 : i32, i32, i32
  }
  func.func @transform_20(%arg0: i32) -> (i32, i32) {
    %c0_i32 = arith.constant 0 : i32
    %c0_i32_0 = arith.constant 0 : i32
    %c0_i32_1 = arith.constant 0 : i32
    return %c0_i32, %c0_i32_0 : i32, i32
  }
  func.func @transform_21(%arg0: i32) -> (i32, i32) {
    %c0_i32 = arith.constant 0 : i32
    %c0_i32_0 = arith.constant 0 : i32
    %c0_i32_1 = arith.constant 0 : i32
    return %c0_i32, %c0_i32_0 : i32, i32
  }
  func.func @transform_22(%arg0: i32) -> (i32, i32) {
    %c0_i32 = arith.constant 0 : i32
    %c0_i32_0 = arith.constant 0 : i32
    %c0_i32_1 = arith.constant 0 : i32
    return %c0_i32, %c0_i32_0 : i32, i32
  }
  func.func @transform_23(%arg0: i32) -> (i32, i32) {
    %c0_i32 = arith.constant 0 : i32
    %c0_i32_0 = arith.constant 0 : i32
    %c0_i32_1 = arith.constant 0 : i32
    return %c0_i32, %c0_i32_0 : i32, i32
  }
  func.func @transform_24(%arg0: i32) -> (i32, i32) {
    %c0_i32 = arith.constant 0 : i32
    %c0_i32_0 = arith.constant 0 : i32
    %c0_i32_1 = arith.constant 0 : i32
    return %c0_i32, %c0_i32_0 : i32, i32
  }
  func.func @transform_25(%arg0: i32) -> (i32, i32) {
    %c0_i32 = arith.constant 0 : i32
    %c0_i32_0 = arith.constant 0 : i32
    %c0_i32_1 = arith.constant 0 : i32
    return %c0_i32, %c0_i32_0 : i32, i32
  }
  func.func @transform_26(%arg0: i32) -> (i32, i32) {
    %c0_i32 = arith.constant 0 : i32
    %c0_i32_0 = arith.constant 0 : i32
    %c0_i32_1 = arith.constant 0 : i32
    return %c0_i32, %c0_i32_0 : i32, i32
  }
}

</mosaic_0001>

<llo_original>
// kernel: forward_pallas.1
$region0: #{forward_pallas.1}
  #allocation0 [shape = 'u32[]', space=smem, size = 0x4, offset = 0x4, fixed_abs, tag = 'smem constant byte address 0x4 - core index']
  #allocation1 [shape = 'u32[144,128]{1,0:T(1,128)}', space=vmem, size = 0x12000, scoped, tag = 'internal scratch']
  #allocation2 [shape = 'f32[64,128]{1,0:T(8,128)}', space=vmem, size = 0x8000, scoped, tag = 'scratch operand']
  #allocation3 [shape = 'f32[128,128]{1,0:T(8,128)}', space=vmem, size = 0x10000, scoped, tag = 'scratch operand']
  #allocation4 [shape = 'bf16[128,256]{1,0:T(16,128)(2,1)}', space=vmem, size = 0x10000, scoped, tag = 'scratch operand']
  %s0 = inlined_call_operand.vmem [shape: f32[64,2], index: 0, kind: input, shape index: {}]
  %s1 = inlined_call_operand.vmem [shape: f32[128,2], index: 1, kind: input, shape index: {}]
  %s2 = inlined_call_operand.vmem [shape: bf16[128,64], index: 2, kind: input, shape index: {}]
  %s3 = inlined_call_operand.vmem [shape: bf16[128,64], index: 3, kind: input, shape index: {}]
  %s4 = inlined_call_operand.hbm [shape: bf16[64,128], index: 4, kind: input, shape index: {}]
  %s5 = inlined_call_operand.hbm [shape: bf16[64,128], index: 5, kind: input, shape index: {}]
  %s6 = inlined_call_operand.hbm [shape: f32[2,16], index: 6, kind: input, shape index: {}]
  %s7 = inlined_call_operand.hbm [shape: f32[1,16], index: 7, kind: input, shape index: {}]
  %s8 = inlined_call_operand.hbm [shape: f32[16,128], index: 8, kind: input, shape index: {}]
  %s9 = inlined_call_operand.hbm [shape: f32[1,128], index: 9, kind: input, shape index: {}]
  %s10 = inlined_call_operand.hbm [shape: f32[2,16], index: 10, kind: input, shape index: {}]
  %s11 = inlined_call_operand.hbm [shape: f32[1,16], index: 11, kind: input, shape index: {}]
  %s12 = inlined_call_operand.hbm [shape: f32[16,128], index: 12, kind: input, shape index: {}]
  %s13 = inlined_call_operand.hbm [shape: f32[1,128], index: 13, kind: input, shape index: {}]
  %s14 = inlined_call_operand.hbm [shape: bf16[2,128,640], index: 14, kind: input, shape index: {}]
  %s15 = inlined_call_operand.hbm [shape: f32[2,1,640], index: 15, kind: input, shape index: {}]
  %s16 = inlined_call_operand.vmem [shape: bf16[2,128,128], index: 16, kind: input, shape index: {}]
  %s17 = inlined_call_operand.hbm [shape: f32[2,1,128], index: 17, kind: input, shape index: {}]
  %s18 = inlined_call_operand.hbm [shape: f32[2,1,128], index: 18, kind: input, shape index: {}]
  %s19 = inlined_call_operand.hbm [shape: f32[2,1,128], index: 19, kind: input, shape index: {}]
  %s20 = inlined_call_operand.vmem [shape: bf16[128,128], index: 20, kind: input, shape index: {}]
  %s21 = inlined_call_operand.vmem [shape: bf16[128,128], index: 21, kind: input, shape index: {}]
  %s22 = inlined_call_operand.vmem [shape: bf16[128,128], index: 22, kind: input, shape index: {}]
  %s23 = inlined_call_operand.hbm [shape: f32[1,128], index: 23, kind: input, shape index: {}]
  %s24 = inlined_call_operand.vmem [shape: bf16[128,128], index: 24, kind: input, shape index: {}]
  %s25 = inlined_call_operand.hbm [shape: f32[1,128], index: 25, kind: input, shape index: {}]
  %s26 = inlined_call_operand.vmem [shape: f32[128,128], index: 26, kind: output, shape index: {}]
  %s27 = sld [smem:[#allocation0]]
  $region213: #{forward_pallas.1} parent=0
    _
  %s29 = ssub.s32 1, %s27
  %s30 = scalar_select 0, %s29, %s27
  $region1: #{forward_pallas.1} parent=0
    #allocation5 [shape = 'u8[16384]{0}', space=vmem, size = 0x4000, scoped, tag = 'input window, operand 4, single buffered']
    #allocation6 [shape = 's32[2]{0}', space=sflag, size = 0x8, scoped, tag = 'scoped memory for forward_pallas.1']
    #allocation7 [shape = 'u8[16384]{0}', space=vmem, size = 0x4000, scoped, tag = 'input window, operand 5, single buffered']
    #allocation8 [shape = 's32[1]{0}', space=sflag, size = 0x4, scoped, tag = 'scoped memory for forward_pallas.1']
    #allocation9 [shape = 'u8[1024]{0}', space=vmem, size = 0x400, scoped, tag = 'input window, operand 6, single buffered']
    #allocation10 [shape = 'u8[512]{0}', space=vmem, size = 0x400, scoped, tag = 'input window, operand 7, single buffered']
    #allocation11 [shape = 's32[1]{0}', space=sflag, size = 0x4, scoped, tag = 'scoped memory for forward_pallas.1']
    #allocation12 [shape = 'u8[8192]{0}', space=vmem, size = 0x2000, scoped, tag = 'input window, operand 8, single buffered']
    #allocation13 [shape = 'u8[512]{0}', space=vmem, size = 0x400, scoped, tag = 'input window, operand 9, single buffered']
    #allocation14 [shape = 's32[1]{0}', space=sflag, size = 0x4, scoped, tag = 'scoped memory for forward_pallas.1']
    #allocation15 [shape = 'u8[1024]{0}', space=vmem, size = 0x400, scoped, tag = 'input window, operand 10, single buffered']
    #allocation16 [shape = 'u8[512]{0}', space=vmem, size = 0x400, scoped, tag = 'input window, operand 11, single buffered']
    #allocation17 [shape = 's32[1]{0}', space=sflag, size = 0x4, scoped, tag = 'scoped memory for forward_pallas.1']
    #allocation18 [shape = 'u8[8192]{0}', space=vmem, size = 0x2000, scoped, tag = 'input window, operand 12, single buffered']
    #allocation19 [shape = 'u8[512]{0}', space=vmem, size = 0x400, scoped, tag = 'input window, operand 13, single buffered']
    #allocation20 [shape = 's32[1]{0}', space=sflag, size = 0x4, scoped, tag = 'scoped memory for forward_pallas.1']
    #allocation21 [shape = 'u8[327680]{0}', space=vmem, size = 0x50000, scoped, tag = 'input window, operand 14']
    #allocation22 [shape = 'u8[5120]{0}', space=vmem, size = 0x1400, scoped, tag = 'input window, operand 15']
    #allocation23 [shape = 'u8[1024]{0}', space=vmem, size = 0x400, scoped, tag = 'input window, operand 17']
    #allocation24 [shape = 'u8[1024]{0}', space=vmem, size = 0x400, scoped, tag = 'input window, operand 18']
    #allocation25 [shape = 'u8[1024]{0}', space=vmem, size = 0x400, scoped, tag = 'input window, operand 19']
    #allocation26 [shape = 'u8[512]{0}', space=vmem, size = 0x400, scoped, tag = 'input window, operand 23, single buffered']
    #allocation27 [shape = 'u8[512]{0}', space=vmem, size = 0x400, scoped, tag = 'input window, operand 25, single buffered']
    %31 = vsyncpa [#allocation6], 0
    %32 = vsyncpa [#allocation8], 0
    %33 = vsyncpa [#allocation11], 0
    %34 = vsyncpa [#allocation14], 0
    %35 = vsyncpa [#allocation17], 0
    %36 = vsyncpa [#allocation20], 0
    loop: start=0, step=1, limit=4
    $region2: #{forward_pallas.1} parent=1 // loop_pre_header
      _
    $region3: #{forward_pallas.1} parent=1 // loop_header
      %s38 = sphi 0, %s42
      %p39 = scmp.ge.s32.totalorder %s38, 4
      %s46 = sphi 0, %s46
      %s48 = sphi 0, %s46
      %s49 = sphi 0, %s48
      %s63 = sphi 0, %s49
      %s67 = sphi 0, %s67
      %s69 = sphi 0, %s67
      %s70 = sphi 0, %s69
      %s84 = sphi 0, %s70
      %s88 = sphi 0, %s88
      %s90 = sphi 0, %s88
      %s91 = sphi 0, %s90
      %s105 = sphi 0, %s91
      %s109 = sphi 0, %s109
      %s111 = sphi 0, %s109
      %s112 = sphi 0, %s111
      %s126 = sphi 0, %s112
      %s130 = sphi 0, %s130
      %s132 = sphi 0, %s130
      %s133 = sphi 0, %s132
      %s147 = sphi 0, %s133
      %s151 = sphi 0, %s151
      %s153 = sphi 0, %s151
      %s154 = sphi 0, %s153
      %s168 = sphi 0, %s154
      %s172 = sphi 0, %s172
      %s174 = sphi 0, %s172
      %s175 = sphi 0, %s174
      %s189 = sphi 0, %s175
      %s193 = sphi 0, %s193
      %s195 = sphi 0, %s193
      %s196 = sphi 0, %s195
      %s210 = sphi 0, %s196
      %s214 = sphi 0, %s214
      %s216 = sphi 0, %s214
      %s217 = sphi 0, %s216
      %s231 = sphi 0, %s217
      %s235 = sphi 0, %s235
      %s237 = sphi 0, %s235
      %s238 = sphi 0, %s237
      %s252 = sphi 0, %s238
      %s256 = sphi 0, %s256
      %s258 = sphi 0, %s256
      %s259 = sphi 0, %s258
      %s273 = sphi 0, %s259
      %s277 = sphi 0, %s277
      %s279 = sphi 0, %s277
      %s280 = sphi 0, %s279
      %s294 = sphi 0, %s280
      %s298 = sphi 0, %s298
      %s300 = sphi 0, %s298
      %s301 = sphi 0, %s300
      %s315 = sphi 0, %s301
      %s319 = sphi 0, %s319
      %s321 = sphi 0, %s319
      %s322 = sphi 0, %s321
      %s336 = sphi 0, %s322
      %s342 = sphi 0, %s344
      %s345 = sphi 0, %s342
      %s346 = sphi 0, %s345
      %s362 = sphi 0, %s346
      %s368 = sphi 0, %s370
      %s371 = sphi 0, %s368
      %s372 = sphi 0, %s371
      %s388 = sphi 0, %s372
      %s394 = sphi 0, %s396
      %s397 = sphi 0, %s394
      %s398 = sphi 0, %s397
      %s414 = sphi 0, %s398
      %s420 = sphi 0, %s422
      %s423 = sphi 0, %s420
      %s424 = sphi 0, %s423
      %s440 = sphi 0, %s424
      %s446 = sphi 0, %s448
      %s449 = sphi 0, %s446
      %s450 = sphi 0, %s449
      %s466 = sphi 0, %s450
      %s472 = sphi 0, %s474
      %s475 = sphi 0, %s472
      %s476 = sphi 0, %s475
      %s492 = sphi 0, %s476
      %s496 = sphi 0, %s496
      %s498 = sphi 0, %s496
      %s499 = sphi 0, %s498
      %s513 = sphi 0, %s499
      %s517 = sphi 0, %s517
      %s519 = sphi 0, %s517
      %s520 = sphi 0, %s519
      %s534 = sphi 0, %s520
      %s538 = sphi 0, %s538
      %s540 = sphi 0, %s538
      %s541 = sphi 0, %s540
      %s555 = sphi 0, %s541
      %s559 = sphi 0, %s559
      %s561 = sphi 0, %s559
      %s562 = sphi 0, %s561
      %s576 = sphi 0, %s562
      %s580 = sphi 0, %s580
      %s582 = sphi 0, %s580
      %s583 = sphi 0, %s582
      %s597 = sphi 0, %s583
      %s601 = sphi 0, %s601
      %s603 = sphi 0, %s601
      %s604 = sphi 0, %s603
      %s618 = sphi 0, %s604
      %s622 = sphi 0, %s622
      %s624 = sphi 0, %s622
      %s625 = sphi 0, %s624
      %s639 = sphi 0, %s625
    $region4: #{forward_pallas.1} parent=1 // loop_header_branch
      %41 = sbr.rel (%p39) target = $region8
    $region5: #{forward_pallas.1} parent=1 // loop_body
      %s43 = ssub.s32 %s38, 1
      %s44 = ssub.s32 %s38, 2
      %s45 = sadd.s32 %s38, 1
      %s47 = sadd.s32 %s46, 1
      %p50 = scmp.eq.s32.totalorder %s38, 1
      %p51 = scmp.ne.s32.totalorder %s46, %s48
      %p52 = scmp.eq.s32.totalorder %s38, 0
      %p53 = por %p51, %p52
      %p54 = scmp.ne.s32.totalorder %s46, %s48
      %p55 = scmp.eq.s32.totalorder %s43, 1
      %p56 = por %p54, %p55
      %p57 = scmp.ne.s32.totalorder %s48, %s49
      %p58 = scmp.eq.s32.totalorder %s43, 0
      %p59 = por %p57, %p58
      %p60 = scmp.ne.s32.totalorder %s48, %s49
      %p61 = scmp.eq.s32.totalorder %s44, 1
      %p62 = por %p60, %p61
      %p64 = scmp.ne.s32.totalorder %s49, %s63
      %p65 = scmp.eq.s32.totalorder %s44, 0
      %p66 = por %p64, %p65
      %s68 = sadd.s32 %s67, 1
      %p71 = scmp.eq.s32.totalorder %s38, 1
      %p72 = scmp.ne.s32.totalorder %s67, %s69
      %p73 = scmp.eq.s32.totalorder %s38, 0
      %p74 = por %p72, %p73
      %p75 = scmp.ne.s32.totalorder %s67, %s69
      %p76 = scmp.eq.s32.totalorder %s43, 1
      %p77 = por %p75, %p76
      %p78 = scmp.ne.s32.totalorder %s69, %s70
      %p79 = scmp.eq.s32.totalorder %s43, 0
      %p80 = por %p78, %p79
      %p81 = scmp.ne.s32.totalorder %s69, %s70
      %p82 = scmp.eq.s32.totalorder %s44, 1
      %p83 = por %p81, %p82
      %p85 = scmp.ne.s32.totalorder %s70, %s84
      %p86 = scmp.eq.s32.totalorder %s44, 0
      %p87 = por %p85, %p86
      %s89 = sadd.s32 %s88, 1
      %p92 = scmp.eq.s32.totalorder %s38, 1
      %p93 = scmp.ne.s32.totalorder %s88, %s90
      %p94 = scmp.eq.s32.totalorder %s38, 0
      %p95 = por %p93, %p94
      %p96 = scmp.ne.s32.totalorder %s88, %s90
      %p97 = scmp.eq.s32.totalorder %s43, 1
      %p98 = por %p96, %p97
      %p99 = scmp.ne.s32.totalorder %s90, %s91
      %p100 = scmp.eq.s32.totalorder %s43, 0
      %p101 = por %p99, %p100
      %p102 = scmp.ne.s32.totalorder %s90, %s91
      %p103 = scmp.eq.s32.totalorder %s44, 1
      %p104 = por %p102, %p103
      %p106 = scmp.ne.s32.totalorder %s91, %s105
      %p107 = scmp.eq.s32.totalorder %s44, 0
      %p108 = por %p106, %p107
      %s110 = sadd.s32 %s109, 1
      %p113 = scmp.eq.s32.totalorder %s38, 1
      %p114 = scmp.ne.s32.totalorder %s109, %s111
      %p115 = scmp.eq.s32.totalorder %s38, 0
      %p116 = por %p114, %p115
      %p117 = scmp.ne.s32.totalorder %s109, %s111
      %p118 = scmp.eq.s32.totalorder %s43, 1
      %p119 = por %p117, %p118
      %p120 = scmp.ne.s32.totalorder %s111, %s112
      %p121 = scmp.eq.s32.totalorder %s43, 0
      %p122 = por %p120, %p121
      %p123 = scmp.ne.s32.totalorder %s111, %s112
      %p124 = scmp.eq.s32.totalorder %s44, 1
      %p125 = por %p123, %p124
      %p127 = scmp.ne.s32.totalorder %s112, %s126
      %p128 = scmp.eq.s32.totalorder %s44, 0
      %p129 = por %p127, %p128
      %s131 = sadd.s32 %s130, 1
      %p134 = scmp.eq.s32.totalorder %s38, 1
      %p135 = scmp.ne.s32.totalorder %s130, %s132
      %p136 = scmp.eq.s32.totalorder %s38, 0
      %p137 = por %p135, %p136
      %p138 = scmp.ne.s32.totalorder %s130, %s132
      %p139 = scmp.eq.s32.totalorder %s43, 1
      %p140 = por %p138, %p139
      %p141 = scmp.ne.s32.totalorder %s132, %s133
      %p142 = scmp.eq.s32.totalorder %s43, 0
      %p143 = por %p141, %p142
      %p144 = scmp.ne.s32.totalorder %s132, %s133
      %p145 = scmp.eq.s32.totalorder %s44, 1
      %p146 = por %p144, %p145
      %p148 = scmp.ne.s32.totalorder %s133, %s147
      %p149 = scmp.eq.s32.totalorder %s44, 0
      %p150 = por %p148, %p149
      %s152 = sadd.s32 %s151, 1
      %p155 = scmp.eq.s32.totalorder %s38, 1
      %p156 = scmp.ne.s32.totalorder %s151, %s153
      %p157 = scmp.eq.s32.totalorder %s38, 0
      %p158 = por %p156, %p157
      %p159 = scmp.ne.s32.totalorder %s151, %s153
      %p160 = scmp.eq.s32.totalorder %s43, 1
      %p161 = por %p159, %p160
      %p162 = scmp.ne.s32.totalorder %s153, %s154
      %p163 = scmp.eq.s32.totalorder %s43, 0
      %p164 = por %p162, %p163
      %p165 = scmp.ne.s32.totalorder %s153, %s154
      %p166 = scmp.eq.s32.totalorder %s44, 1
      %p167 = por %p165, %p166
      %p169 = scmp.ne.s32.totalorder %s154, %s168
      %p170 = scmp.eq.s32.totalorder %s44, 0
      %p171 = por %p169, %p170
      %s173 = sadd.s32 %s172, 1
      %p176 = scmp.eq.s32.totalorder %s38, 1
      %p177 = scmp.ne.s32.totalorder %s172, %s174
      %p178 = scmp.eq.s32.totalorder %s38, 0
      %p179 = por %p177, %p178
      %p180 = scmp.ne.s32.totalorder %s172, %s174
      %p181 = scmp.eq.s32.totalorder %s43, 1
      %p182 = por %p180, %p181
      %p183 = scmp.ne.s32.totalorder %s174, %s175
      %p184 = scmp.eq.s32.totalorder %s43, 0
      %p185 = por %p183, %p184
      %p186 = scmp.ne.s32.totalorder %s174, %s175
      %p187 = scmp.eq.s32.totalorder %s44, 1
      %p188 = por %p186, %p187
      %p190 = scmp.ne.s32.totalorder %s175, %s189
      %p191 = scmp.eq.s32.totalorder %s44, 0
      %p192 = por %p190, %p191
      %s194 = sadd.s32 %s193, 1
      %p197 = scmp.eq.s32.totalorder %s38, 1
      %p198 = scmp.ne.s32.totalorder %s193, %s195
      %p199 = scmp.eq.s32.totalorder %s38, 0
      %p200 = por %p198, %p199
      %p201 = scmp.ne.s32.totalorder %s193, %s195
      %p202 = scmp.eq.s32.totalorder %s43, 1
      %p203 = por %p201, %p202
      %p204 = scmp.ne.s32.totalorder %s195, %s196
      %p205 = scmp.eq.s32.totalorder %s43, 0
      %p206 = por %p204, %p205
      %p207 = scmp.ne.s32.totalorder %s195, %s196
      %p208 = scmp.eq.s32.totalorder %s44, 1
      %p209 = por %p207, %p208
      %p211 = scmp.ne.s32.totalorder %s196, %s210
      %p212 = scmp.eq.s32.totalorder %s44, 0
      %p213 = por %p211, %p212
      %s215 = sadd.s32 %s214, 1
      %p218 = scmp.eq.s32.totalorder %s38, 1
      %p219 = scmp.ne.s32.totalorder %s214, %s216
      %p220 = scmp.eq.s32.totalorder %s38, 0
      %p221 = por %p219, %p220
      %p222 = scmp.ne.s32.totalorder %s214, %s216
      %p223 = scmp.eq.s32.totalorder %s43, 1
      %p224 = por %p222, %p223
      %p225 = scmp.ne.s32.totalorder %s216, %s217
      %p226 = scmp.eq.s32.totalorder %s43, 0
      %p227 = por %p225, %p226
      %p228 = scmp.ne.s32.totalorder %s216, %s217
      %p229 = scmp.eq.s32.totalorder %s44, 1
      %p230 = por %p228, %p229
      %p232 = scmp.ne.s32.totalorder %s217, %s231
      %p233 = scmp.eq.s32.totalorder %s44, 0
      %p234 = por %p232, %p233
      %s236 = sadd.s32 %s235, 1
      %p239 = scmp.eq.s32.totalorder %s38, 1
      %p240 = scmp.ne.s32.totalorder %s235, %s237
      %p241 = scmp.eq.s32.totalorder %s38, 0
      %p242 = por %p240, %p241
      %p243 = scmp.ne.s32.totalorder %s235, %s237
      %p244 = scmp.eq.s32.totalorder %s43, 1
      %p245 = por %p243, %p244
      %p246 = scmp.ne.s32.totalorder %s237, %s238
      %p247 = scmp.eq.s32.totalorder %s43, 0
      %p248 = por %p246, %p247
      %p249 = scmp.ne.s32.totalorder %s237, %s238
      %p250 = scmp.eq.s32.totalorder %s44, 1
      %p251 = por %p249, %p250
      %p253 = scmp.ne.s32.totalorder %s238, %s252
      %p254 = scmp.eq.s32.totalorder %s44, 0
      %p255 = por %p253, %p254
      %s257 = sadd.s32 %s256, 1
      %p260 = scmp.eq.s32.totalorder %s38, 1
      %p261 = scmp.ne.s32.totalorder %s256, %s258
      %p262 = scmp.eq.s32.totalorder %s38, 0
      %p263 = por %p261, %p262
      %p264 = scmp.ne.s32.totalorder %s256, %s258
      %p265 = scmp.eq.s32.totalorder %s43, 1
      %p266 = por %p264, %p265
      %p267 = scmp.ne.s32.totalorder %s258, %s259
      %p268 = scmp.eq.s32.totalorder %s43, 0
      %p269 = por %p267, %p268
      %p270 = scmp.ne.s32.totalorder %s258, %s259
      %p271 = scmp.eq.s32.totalorder %s44, 1
      %p272 = por %p270, %p271
      %p274 = scmp.ne.s32.totalorder %s259, %s273
      %p275 = scmp.eq.s32.totalorder %s44, 0
      %p276 = por %p274, %p275
      %s278 = sadd.s32 %s277, 1
      %p281 = scmp.eq.s32.totalorder %s38, 1
      %p282 = scmp.ne.s32.totalorder %s277, %s279
      %p283 = scmp.eq.s32.totalorder %s38, 0
      %p284 = por %p282, %p283
      %p285 = scmp.ne.s32.totalorder %s277, %s279
      %p286 = scmp.eq.s32.totalorder %s43, 1
      %p287 = por %p285, %p286
      %p288 = scmp.ne.s32.totalorder %s279, %s280
      %p289 = scmp.eq.s32.totalorder %s43, 0
      %p290 = por %p288, %p289
      %p291 = scmp.ne.s32.totalorder %s279, %s280
      %p292 = scmp.eq.s32.totalorder %s44, 1
      %p293 = por %p291, %p292
      %p295 = scmp.ne.s32.totalorder %s280, %s294
      %p296 = scmp.eq.s32.totalorder %s44, 0
      %p297 = por %p295, %p296
      %s299 = sadd.s32 %s298, 1
      %p302 = scmp.eq.s32.totalorder %s38, 1
      %p303 = scmp.ne.s32.totalorder %s298, %s300
      %p304 = scmp.eq.s32.totalorder %s38, 0
      %p305 = por %p303, %p304
      %p306 = scmp.ne.s32.totalorder %s298, %s300
      %p307 = scmp.eq.s32.totalorder %s43, 1
      %p308 = por %p306, %p307
      %p309 = scmp.ne.s32.totalorder %s300, %s301
      %p310 = scmp.eq.s32.totalorder %s43, 0
      %p311 = por %p309, %p310
      %p312 = scmp.ne.s32.totalorder %s300, %s301
      %p313 = scmp.eq.s32.totalorder %s44, 1
      %p314 = por %p312, %p313
      %p316 = scmp.ne.s32.totalorder %s301, %s315
      %p317 = scmp.eq.s32.totalorder %s44, 0
      %p318 = por %p316, %p317
      %s320 = sadd.s32 %s319, 1
      %p323 = scmp.eq.s32.totalorder %s38, 1
      %p324 = scmp.ne.s32.totalorder %s319, %s321
      %p325 = scmp.eq.s32.totalorder %s38, 0
      %p326 = por %p324, %p325
      %p327 = scmp.ne.s32.totalorder %s319, %s321
      %p328 = scmp.eq.s32.totalorder %s43, 1
      %p329 = por %p327, %p328
      %p330 = scmp.ne.s32.totalorder %s321, %s322
      %p331 = scmp.eq.s32.totalorder %s43, 0
      %p332 = por %p330, %p331
      %p333 = scmp.ne.s32.totalorder %s321, %s322
      %p334 = scmp.eq.s32.totalorder %s44, 1
      %p335 = por %p333, %p334
      %p337 = scmp.ne.s32.totalorder %s322, %s336
      %p338 = scmp.eq.s32.totalorder %s44, 0
      %p339 = por %p337, %p338
      %s340 = ssub.s32 %s38, %s45
      %p341 = scmp.eq.s32.totalorder %s340, 0
      %s343 = sadd.s32 %s342, 1
      %s344 = scalar_select %p341, %s342, %s343
      %p347 = pneg %p341
      %p348 = scmp.eq.s32.totalorder %s38, 1
      %p349 = por %p347, %p348
      %p350 = scmp.ne.s32.totalorder %s342, %s345
      %p351 = scmp.eq.s32.totalorder %s38, 0
      %p352 = por %p350, %p351
      %p353 = scmp.ne.s32.totalorder %s342, %s345
      %p354 = scmp.eq.s32.totalorder %s43, 1
      %p355 = por %p353, %p354
      %p356 = scmp.ne.s32.totalorder %s345, %s346
      %p357 = scmp.eq.s32.totalorder %s43, 0
      %p358 = por %p356, %p357
      %p359 = scmp.ne.s32.totalorder %s345, %s346
      %p360 = scmp.eq.s32.totalorder %s44, 1
      %p361 = por %p359, %p360
      %p363 = scmp.ne.s32.totalorder %s346, %s362
      %p364 = scmp.eq.s32.totalorder %s44, 0
      %p365 = por %p363, %p364
      %s366 = ssub.s32 %s38, %s45
      %p367 = scmp.eq.s32.totalorder %s366, 0
      %s369 = sadd.s32 %s368, 1
      %s370 = scalar_select %p367, %s368, %s369
      %p373 = pneg %p367
      %p374 = scmp.eq.s32.totalorder %s38, 1
      %p375 = por %p373, %p374
      %p376 = scmp.ne.s32.totalorder %s368, %s371
      %p377 = scmp.eq.s32.totalorder %s38, 0
      %p378 = por %p376, %p377
      %p379 = scmp.ne.s32.totalorder %s368, %s371
      %p380 = scmp.eq.s32.totalorder %s43, 1
      %p381 = por %p379, %p380
      %p382 = scmp.ne.s32.totalorder %s371, %s372
      %p383 = scmp.eq.s32.totalorder %s43, 0
      %p384 = por %p382, %p383
      %p385 = scmp.ne.s32.totalorder %s371, %s372
      %p386 = scmp.eq.s32.totalorder %s44, 1
      %p387 = por %p385, %p386
      %p389 = scmp.ne.s32.totalorder %s372, %s388
      %p390 = scmp.eq.s32.totalorder %s44, 0
      %p391 = por %p389, %p390
      %s392 = ssub.s32 %s38, %s45
      %p393 = scmp.eq.s32.totalorder %s392, 0
      %s395 = sadd.s32 %s394, 1
      %s396 = scalar_select %p393, %s394, %s395
      %p399 = pneg %p393
      %p400 = scmp.eq.s32.totalorder %s38, 1
      %p401 = por %p399, %p400
      %p402 = scmp.ne.s32.totalorder %s394, %s397
      %p403 = scmp.eq.s32.totalorder %s38, 0
      %p404 = por %p402, %p403
      %p405 = scmp.ne.s32.totalorder %s394, %s397
      %p406 = scmp.eq.s32.totalorder %s43, 1
      %p407 = por %p405, %p406
      %p408 = scmp.ne.s32.totalorder %s397, %s398
      %p409 = scmp.eq.s32.totalorder %s43, 0
      %p410 = por %p408, %p409
      %p411 = scmp.ne.s32.totalorder %s397, %s398
      %p412 = scmp.eq.s32.totalorder %s44, 1
      %p413 = por %p411, %p412
      %p415 = scmp.ne.s32.totalorder %s398, %s414
      %p416 = scmp.eq.s32.totalorder %s44, 0
      %p417 = por %p415, %p416
      %s418 = ssub.s32 %s38, %s45
      %p419 = scmp.eq.s32.totalorder %s418, 0
      %s421 = sadd.s32 %s420, 1
      %s422 = scalar_select %p419, %s420, %s421
      %p425 = pneg %p419
      %p426 = scmp.eq.s32.totalorder %s38, 1
      %p427 = por %p425, %p426
      %p428 = scmp.ne.s32.totalorder %s420, %s423
      %p429 = scmp.eq.s32.totalorder %s38, 0
      %p430 = por %p428, %p429
      %p431 = scmp.ne.s32.totalorder %s420, %s423
      %p432 = scmp.eq.s32.totalorder %s43, 1
      %p433 = por %p431, %p432
      %p434 = scmp.ne.s32.totalorder %s423, %s424
      %p435 = scmp.eq.s32.totalorder %s43, 0
      %p436 = por %p434, %p435
      %p437 = scmp.ne.s32.totalorder %s423, %s424
      %p438 = scmp.eq.s32.totalorder %s44, 1
      %p439 = por %p437, %p438
      %p441 = scmp.ne.s32.totalorder %s424, %s440
      %p442 = scmp.eq.s32.totalorder %s44, 0
      %p443 = por %p441, %p442
      %s444 = ssub.s32 %s38, %s45
      %p445 = scmp.eq.s32.totalorder %s444, 0
      %s447 = sadd.s32 %s446, 1
      %s448 = scalar_select %p445, %s446, %s447
      %p451 = pneg %p445
      %p452 = scmp.eq.s32.totalorder %s38, 1
      %p453 = por %p451, %p452
      %p454 = scmp.ne.s32.totalorder %s446, %s449
      %p455 = scmp.eq.s32.totalorder %s38, 0
      %p456 = por %p454, %p455
      %p457 = scmp.ne.s32.totalorder %s446, %s449
      %p458 = scmp.eq.s32.totalorder %s43, 1
      %p459 = por %p457, %p458
      %p460 = scmp.ne.s32.totalorder %s449, %s450
      %p461 = scmp.eq.s32.totalorder %s43, 0
      %p462 = por %p460, %p461
      %p463 = scmp.ne.s32.totalorder %s449, %s450
      %p464 = scmp.eq.s32.totalorder %s44, 1
      %p465 = por %p463, %p464
      %p467 = scmp.ne.s32.totalorder %s450, %s466
      %p468 = scmp.eq.s32.totalorder %s44, 0
      %p469 = por %p467, %p468
      %s470 = ssub.s32 %s38, %s45
      %p471 = scmp.eq.s32.totalorder %s470, 0
      %s473 = sadd.s32 %s472, 1
      %s474 = scalar_select %p471, %s472, %s473
      %p477 = pneg %p471
      %p478 = scmp.eq.s32.totalorder %s38, 1
      %p479 = por %p477, %p478
      %p480 = scmp.ne.s32.totalorder %s472, %s475
      %p481 = scmp.eq.s32.totalorder %s38, 0
      %p482 = por %p480, %p481
      %p483 = scmp.ne.s32.totalorder %s472, %s475
      %p484 = scmp.eq.s32.totalorder %s43, 1
      %p485 = por %p483, %p484
      %p486 = scmp.ne.s32.totalorder %s475, %s476
      %p487 = scmp.eq.s32.totalorder %s43, 0
      %p488 = por %p486, %p487
      %p489 = scmp.ne.s32.totalorder %s475, %s476
      %p490 = scmp.eq.s32.totalorder %s44, 1
      %p491 = por %p489, %p490
      %p493 = scmp.ne.s32.totalorder %s476, %s492
      %p494 = scmp.eq.s32.totalorder %s44, 0
      %p495 = por %p493, %p494
      %s497 = sadd.s32 %s496, 1
      %p500 = scmp.eq.s32.totalorder %s38, 1
      %p501 = scmp.ne.s32.totalorder %s496, %s498
      %p502 = scmp.eq.s32.totalorder %s38, 0
      %p503 = por %p501, %p502
      %p504 = scmp.ne.s32.totalorder %s496, %s498
      %p505 = scmp.eq.s32.totalorder %s43, 1
      %p506 = por %p504, %p505
      %p507 = scmp.ne.s32.totalorder %s498, %s499
      %p508 = scmp.eq.s32.totalorder %s43, 0
      %p509 = por %p507, %p508
      %p510 = scmp.ne.s32.totalorder %s498, %s499
      %p511 = scmp.eq.s32.totalorder %s44, 1
      %p512 = por %p510, %p511
      %p514 = scmp.ne.s32.totalorder %s499, %s513
      %p515 = scmp.eq.s32.totalorder %s44, 0
      %p516 = por %p514, %p515
      %s518 = sadd.s32 %s517, 1
      %p521 = scmp.eq.s32.totalorder %s38, 1
      %p522 = scmp.ne.s32.totalorder %s517, %s519
      %p523 = scmp.eq.s32.totalorder %s38, 0
      %p524 = por %p522, %p523
      %p525 = scmp.ne.s32.totalorder %s517, %s519
      %p526 = scmp.eq.s32.totalorder %s43, 1
      %p527 = por %p525, %p526
      %p528 = scmp.ne.s32.totalorder %s519, %s520
      %p529 = scmp.eq.s32.totalorder %s43, 0
      %p530 = por %p528, %p529
      %p531 = scmp.ne.s32.totalorder %s519, %s520
      %p532 = scmp.eq.s32.totalorder %s44, 1
      %p533 = por %p531, %p532
      %p535 = scmp.ne.s32.totalorder %s520, %s534
      %p536 = scmp.eq.s32.totalorder %s44, 0
      %p537 = por %p535, %p536
      %s539 = sadd.s32 %s538, 1
      %p542 = scmp.eq.s32.totalorder %s38, 1
      %p543 = scmp.ne.s32.totalorder %s538, %s540
      %p544 = scmp.eq.s32.totalorder %s38, 0
      %p545 = por %p543, %p544
      %p546 = scmp.ne.s32.totalorder %s538, %s540
      %p547 = scmp.eq.s32.totalorder %s43, 1
      %p548 = por %p546, %p547
      %p549 = scmp.ne.s32.totalorder %s540, %s541
      %p550 = scmp.eq.s32.totalorder %s43, 0
      %p551 = por %p549, %p550
      %p552 = scmp.ne.s32.totalorder %s540, %s541
      %p553 = scmp.eq.s32.totalorder %s44, 1
      %p554 = por %p552, %p553
      %p556 = scmp.ne.s32.totalorder %s541, %s555
      %p557 = scmp.eq.s32.totalorder %s44, 0
      %p558 = por %p556, %p557
      %s560 = sadd.s32 %s559, 1
      %p563 = scmp.eq.s32.totalorder %s38, 1
      %p564 = scmp.ne.s32.totalorder %s559, %s561
      %p565 = scmp.eq.s32.totalorder %s38, 0
      %p566 = por %p564, %p565
      %p567 = scmp.ne.s32.totalorder %s559, %s561
      %p568 = scmp.eq.s32.totalorder %s43, 1
      %p569 = por %p567, %p568
      %p570 = scmp.ne.s32.totalorder %s561, %s562
      %p571 = scmp.eq.s32.totalorder %s43, 0
      %p572 = por %p570, %p571
      %p573 = scmp.ne.s32.totalorder %s561, %s562
      %p574 = scmp.eq.s32.totalorder %s44, 1
      %p575 = por %p573, %p574
      %p577 = scmp.ne.s32.totalorder %s562, %s576
      %p578 = scmp.eq.s32.totalorder %s44, 0
      %p579 = por %p577, %p578
      %s581 = sadd.s32 %s580, 1
      %p584 = scmp.eq.s32.totalorder %s38, 1
      %p585 = scmp.ne.s32.totalorder %s580, %s582
      %p586 = scmp.eq.s32.totalorder %s38, 0
      %p587 = por %p585, %p586
      %p588 = scmp.ne.s32.totalorder %s580, %s582
      %p589 = scmp.eq.s32.totalorder %s43, 1
      %p590 = por %p588, %p589
      %p591 = scmp.ne.s32.totalorder %s582, %s583
      %p592 = scmp.eq.s32.totalorder %s43, 0
      %p593 = por %p591, %p592
      %p594 = scmp.ne.s32.totalorder %s582, %s583
      %p595 = scmp.eq.s32.totalorder %s44, 1
      %p596 = por %p594, %p595
      %p598 = scmp.ne.s32.totalorder %s583, %s597
      %p599 = scmp.eq.s32.totalorder %s44, 0
      %p600 = por %p598, %p599
      %s602 = sadd.s32 %s601, 1
      %p605 = scmp.eq.s32.totalorder %s38, 1
      %p606 = scmp.ne.s32.totalorder %s601, %s603
      %p607 = scmp.eq.s32.totalorder %s38, 0
      %p608 = por %p606, %p607
      %p609 = scmp.ne.s32.totalorder %s601, %s603
      %p610 = scmp.eq.s32.totalorder %s43, 1
      %p611 = por %p609, %p610
      %p612 = scmp.ne.s32.totalorder %s603, %s604
      %p613 = scmp.eq.s32.totalorder %s43, 0
      %p614 = por %p612, %p613
      %p615 = scmp.ne.s32.totalorder %s603, %s604
      %p616 = scmp.eq.s32.totalorder %s44, 1
      %p617 = por %p615, %p616
      %p619 = scmp.ne.s32.totalorder %s604, %s618
      %p620 = scmp.eq.s32.totalorder %s44, 0
      %p621 = por %p619, %p620
      %s623 = sadd.s32 %s622, 1
      %p626 = scmp.eq.s32.totalorder %s38, 1
      %p627 = scmp.ne.s32.totalorder %s622, %s624
      %p628 = scmp.eq.s32.totalorder %s38, 0
      %p629 = por %p627, %p628
      %p630 = scmp.ne.s32.totalorder %s622, %s624
      %p631 = scmp.eq.s32.totalorder %s43, 1
      %p632 = por %p630, %p631
      %p633 = scmp.ne.s32.totalorder %s624, %s625
      %p634 = scmp.eq.s32.totalorder %s43, 0
      %p635 = por %p633, %p634
      %p636 = scmp.ne.s32.totalorder %s624, %s625
      %p637 = scmp.eq.s32.totalorder %s44, 1
      %p638 = por %p636, %p637
      %p640 = scmp.ne.s32.totalorder %s625, %s639
      %p641 = scmp.eq.s32.totalorder %s44, 0
      %p642 = por %p640, %p641
      %p643 = scmp.le.s32.totalorder 1, %s38
      %p644 = scmp.lt.s32.totalorder %s38, 3
      %p645 = pnand %p643, %p644
      %p646 = pneg %p645
      // Predicated region
      $region9: #{forward_pallas.1} parent=5 // pred_check
        _
      $region10: #{forward_pallas.1} parent=5 // pred_check_branch
        %648 = sbr.rel (%p645) target = $region12
      $region11: #{forward_pallas.1} parent=5 // pred_region
        %s649 = ssub.s32 %s38, 1
        // Predicated region
        $region13: #{forward_pallas.1} parent=11 // pred_check
          %p650 = pneg %p59
        $region14: #{forward_pallas.1} parent=11 // pred_check_branch
          %652 = sbr.rel (%p650) target = $region16
        $region15: #{forward_pallas.1} parent=11 // pred_region
          _
        $region16: #{forward_pallas.1} parent=11 // pred_fallthru
          _
        // Predicated region
        $region17: #{forward_pallas.1} parent=11 // pred_check
          %p653 = pneg %p80
        $region18: #{forward_pallas.1} parent=11 // pred_check_branch
          %655 = sbr.rel (%p653) target = $region20
        $region19: #{forward_pallas.1} parent=11 // pred_region
          _
        $region20: #{forward_pallas.1} parent=11 // pred_fallthru
          _
        // Predicated region
        $region21: #{forward_pallas.1} parent=11 // pred_check
          %p656 = pneg %p101
        $region22: #{forward_pallas.1} parent=11 // pred_check_branch
          %658 = sbr.rel (%p656) target = $region24
        $region23: #{forward_pallas.1} parent=11 // pred_region
          _
        $region24: #{forward_pallas.1} parent=11 // pred_fallthru
          _
        // Predicated region
        $region25: #{forward_pallas.1} parent=11 // pred_check
          %p659 = pneg %p122
        $region26: #{forward_pallas.1} parent=11 // pred_check_branch
          %661 = sbr.rel (%p659) target = $region28
        $region27: #{forward_pallas.1} parent=11 // pred_region
          _
        $region28: #{forward_pallas.1} parent=11 // pred_fallthru
          _
        // Predicated region
        $region29: #{forward_pallas.1} parent=11 // pred_check
          %p662 = pneg %p143
        $region30: #{forward_pallas.1} parent=11 // pred_check_branch
          %664 = sbr.rel (%p662) target = $region32
        $region31: #{forward_pallas.1} parent=11 // pred_region
          %s666 = ssub.s32 512, 512
          %667 = vsyncadd [#allocation6], %s666
          %s668 = sshll.u32 [#allocation5], 4
          %s669 = int_to_ptr.vmem [resolvable:$true] %s668
          %674 = dma.hbm_to_vmem [thread:$0]  %s4, 512, %s669, [#allocation6], 64, 64, 4
        $region32: #{forward_pallas.1} parent=11 // pred_fallthru
          _
        // Predicated region
        $region33: #{forward_pallas.1} parent=11 // pred_check
          %p675 = pneg %p164
        $region34: #{forward_pallas.1} parent=11 // pred_check_branch
          %677 = sbr.rel (%p675) target = $region36
        $region35: #{forward_pallas.1} parent=11 // pred_region
          %s679 = ssub.s32 512, 512
          %680 = vsyncadd [#allocation8], %s679
          %s681 = sshll.u32 [#allocation7], 4
          %s682 = int_to_ptr.vmem [resolvable:$true] %s681
          %687 = dma.hbm_to_vmem [thread:$0]  %s5, 512, %s682, [#allocation8], 64, 64, 4
        $region36: #{forward_pallas.1} parent=11 // pred_fallthru
          _
        // Predicated region
        $region37: #{forward_pallas.1} parent=11 // pred_check
          %p688 = pneg %p185
        $region38: #{forward_pallas.1} parent=11 // pred_check_branch
          %690 = sbr.rel (%p688) target = $region40
        $region39: #{forward_pallas.1} parent=11 // pred_region
          %s692 = ssub.s32 32, 32
          %693 = vsyncadd [#allocation8], %s692
          %s695 = sshll.u32 [#allocation9], 4
          %s696 = int_to_ptr.vmem [resolvable:$true] %s695
          %698 = dma.hbm_to_vmem [thread:$0]  %s6, 32, %s696, [#allocation8]
        $region40: #{forward_pallas.1} parent=11 // pred_fallthru
          _
        // Predicated region
        $region41: #{forward_pallas.1} parent=11 // pred_check
          %p699 = pneg %p206
        $region42: #{forward_pallas.1} parent=11 // pred_check_branch
          %701 = sbr.rel (%p699) target = $region44
        $region43: #{forward_pallas.1} parent=11 // pred_region
          %s703 = ssub.s32 16, 16
          %704 = vsyncadd [#allocation11], %s703
          %s706 = sshll.u32 [#allocation10], 4
          %s707 = int_to_ptr.vmem [resolvable:$true] %s706
          %709 = dma.hbm_to_vmem [thread:$0]  %s7, 16, %s707, [#allocation11]
        $region44: #{forward_pallas.1} parent=11 // pred_fallthru
          _
        // Predicated region
        $region45: #{forward_pallas.1} parent=11 // pred_check
          %p710 = pneg %p227
        $region46: #{forward_pallas.1} parent=11 // pred_check_branch
          %712 = sbr.rel (%p710) target = $region48
        $region47: #{forward_pallas.1} parent=11 // pred_region
          %s714 = ssub.s32 256, 256
          %715 = vsyncadd [#allocation11], %s714
          %s716 = sshll.u32 [#allocation12], 4
          %s717 = int_to_ptr.vmem [resolvable:$true] %s716
          %722 = dma.hbm_to_vmem [thread:$0]  %s8, 256, %s717, [#allocation11], 128, 128, 8
        $region48: #{forward_pallas.1} parent=11 // pred_fallthru
          _
        // Predicated region
        $region49: #{forward_pallas.1} parent=11 // pred_check
          %p723 = pneg %p248
        $region50: #{forward_pallas.1} parent=11 // pred_check_branch
          %725 = sbr.rel (%p723) target = $region52
        $region51: #{forward_pallas.1} parent=11 // pred_region
          %s727 = ssub.s32 16, 16
          %728 = vsyncadd [#allocation14], %s727
          %s730 = sshll.u32 [#allocation13], 4
          %s731 = int_to_ptr.vmem [resolvable:$true] %s730
          %733 = dma.hbm_to_vmem [thread:$0]  %s9, 16, %s731, [#allocation14]
        $region52: #{forward_pallas.1} parent=11 // pred_fallthru
          _
        // Predicated region
        $region53: #{forward_pallas.1} parent=11 // pred_check
          %p734 = pneg %p269
        $region54: #{forward_pallas.1} parent=11 // pred_check_branch
          %736 = sbr.rel (%p734) target = $region56
        $region55: #{forward_pallas.1} parent=11 // pred_region
          %s738 = ssub.s32 32, 32
          %739 = vsyncadd [#allocation14], %s738
          %s741 = sshll.u32 [#allocation15], 4
          %s742 = int_to_ptr.vmem [resolvable:$true] %s741
          %744 = dma.hbm_to_vmem [thread:$0]  %s10, 32, %s742, [#allocation14]
        $region56: #{forward_pallas.1} parent=11 // pred_fallthru
          _
        // Predicated region
        $region57: #{forward_pallas.1} parent=11 // pred_check
          %p745 = pneg %p290
        $region58: #{forward_pallas.1} parent=11 // pred_check_branch
          %747 = sbr.rel (%p745) target = $region60
        $region59: #{forward_pallas.1} parent=11 // pred_region
          %s749 = ssub.s32 16, 16
          %750 = vsyncadd [#allocation17], %s749
          %s752 = sshll.u32 [#allocation16], 4
          %s753 = int_to_ptr.vmem [resolvable:$true] %s752
          %755 = dma.hbm_to_vmem [thread:$0]  %s11, 16, %s753, [#allocation17]
        $region60: #{forward_pallas.1} parent=11 // pred_fallthru
          _
        // Predicated region
        $region61: #{forward_pallas.1} parent=11 // pred_check
          %p756 = pneg %p311
        $region62: #{forward_pallas.1} parent=11 // pred_check_branch
          %758 = sbr.rel (%p756) target = $region64
        $region63: #{forward_pallas.1} parent=11 // pred_region
          %s760 = ssub.s32 256, 256
          %761 = vsyncadd [#allocation17], %s760
          %s762 = sshll.u32 [#allocation18], 4
          %s763 = int_to_ptr.vmem [resolvable:$true] %s762
          %768 = dma.hbm_to_vmem [thread:$0]  %s12, 256, %s763, [#allocation17], 128, 128, 8
        $region64: #{forward_pallas.1} parent=11 // pred_fallthru
          _
        // Predicated region
        $region65: #{forward_pallas.1} parent=11 // pred_check
          %p769 = pneg %p332
        $region66: #{forward_pallas.1} parent=11 // pred_check_branch
          %771 = sbr.rel (%p769) target = $region68
        $region67: #{forward_pallas.1} parent=11 // pred_region
          %s773 = ssub.s32 16, 16
          %774 = vsyncadd [#allocation20], %s773
          %s776 = sshll.u32 [#allocation19], 4
          %s777 = int_to_ptr.vmem [resolvable:$true] %s776
          %779 = dma.hbm_to_vmem [thread:$0]  %s13, 16, %s777, [#allocation20]
        $region68: #{forward_pallas.1} parent=11 // pred_fallthru
          _
        // Predicated region
        $region69: #{forward_pallas.1} parent=11 // pred_check
          %p780 = pneg %p509
        $region70: #{forward_pallas.1} parent=11 // pred_check_branch
          %782 = sbr.rel (%p780) target = $region72
        $region71: #{forward_pallas.1} parent=11 // pred_region
          _
        $region72: #{forward_pallas.1} parent=11 // pred_fallthru
          _
        // Predicated region
        $region73: #{forward_pallas.1} parent=11 // pred_check
          %p783 = pneg %p530
        $region74: #{forward_pallas.1} parent=11 // pred_check_branch
          %785 = sbr.rel (%p783) target = $region76
        $region75: #{forward_pallas.1} parent=11 // pred_region
          _
        $region76: #{forward_pallas.1} parent=11 // pred_fallthru
          _
        // Predicated region
        $region77: #{forward_pallas.1} parent=11 // pred_check
          %p786 = pneg %p551
        $region78: #{forward_pallas.1} parent=11 // pred_check_branch
          %788 = sbr.rel (%p786) target = $region80
        $region79: #{forward_pallas.1} parent=11 // pred_region
          _
        $region80: #{forward_pallas.1} parent=11 // pred_fallthru
          _
        // Predicated region
        $region81: #{forward_pallas.1} parent=11 // pred_check
          %p789 = pneg %p572
        $region82: #{forward_pallas.1} parent=11 // pred_check_branch
          %791 = sbr.rel (%p789) target = $region84
        $region83: #{forward_pallas.1} parent=11 // pred_region
          %s793 = ssub.s32 16, 16
          %794 = vsyncadd [#allocation8], %s793
          %s796 = sshll.u32 [#allocation26], 4
          %s797 = int_to_ptr.vmem [resolvable:$true] %s796
          %799 = dma.hbm_to_vmem [thread:$0]  %s23, 16, %s797, [#allocation8]
        $region84: #{forward_pallas.1} parent=11 // pred_fallthru
          _
        // Predicated region
        $region85: #{forward_pallas.1} parent=11 // pred_check
          %p800 = pneg %p593
        $region86: #{forward_pallas.1} parent=11 // pred_check_branch
          %802 = sbr.rel (%p800) target = $region88
        $region87: #{forward_pallas.1} parent=11 // pred_region
          _
        $region88: #{forward_pallas.1} parent=11 // pred_fallthru
          _
        // Predicated region
        $region89: #{forward_pallas.1} parent=11 // pred_check
          %p803 = pneg %p614
        $region90: #{forward_pallas.1} parent=11 // pred_check_branch
          %805 = sbr.rel (%p803) target = $region92
        $region91: #{forward_pallas.1} parent=11 // pred_region
          %s807 = ssub.s32 16, 16
          %808 = vsyncadd [#allocation11], %s807
          %s810 = sshll.u32 [#allocation27], 4
          %s811 = int_to_ptr.vmem [resolvable:$true] %s810
          %813 = dma.hbm_to_vmem [thread:$0]  %s25, 16, %s811, [#allocation11]
        $region92: #{forward_pallas.1} parent=11 // pred_fallthru
          _
      $region12: #{forward_pallas.1} parent=5 // pred_fallthru
        _
      %p814 = scmp.lt.s32.totalorder %s38, 2
      // Predicated region
      $region93: #{forward_pallas.1} parent=5 // pred_check
        %p815 = pneg %p814
      $region94: #{forward_pallas.1} parent=5 // pred_check_branch
        %817 = sbr.rel (%p815) target = $region96
      $region95: #{forward_pallas.1} parent=5 // pred_region
        // Predicated region
        $region97: #{forward_pallas.1} parent=95 // pred_check
          %p818 = pneg %p352
        $region98: #{forward_pallas.1} parent=95 // pred_check_branch
          %820 = sbr.rel (%p818) target = $region100
        $region99: #{forward_pallas.1} parent=95 // pred_region
          %s821 = sand.u32 %s38, 1
          %s822 = scalar_lea.sflag [#allocation6], %s821
          %s823 = sand.u32 %s342, 1
          %s824 = smul.addr %s823, 320
          %s825 = scalar_lea.vmem [#allocation21], %s824
          %s827 = ssub.s32 5120, 5120
          %828 = vsyncadd %s822, %s827
          %s829 = smul.addr %s38, 80
          %s830 = smul.addr %s829, 64
          %s831 = scalar_lea.hbm %s14, %s830
          %s832 = sshll.u32 %s825, 4
          %s833 = int_to_ptr.vmem [resolvable:$true] %s832
          %838 = dma.hbm_to_vmem [thread:$0]  %s831, 5120, %s833, %s822, 320, 320, 20
        $region100: #{forward_pallas.1} parent=95 // pred_fallthru
          _
        // Predicated region
        $region101: #{forward_pallas.1} parent=95 // pred_check
          %p839 = pneg %p378
        $region102: #{forward_pallas.1} parent=95 // pred_check_branch
          %841 = sbr.rel (%p839) target = $region104
        $region103: #{forward_pallas.1} parent=95 // pred_region
          %s842 = sand.u32 %s38, 1
          %s843 = scalar_lea.sflag [#allocation6], %s842
          %s844 = sand.u32 %s368, 1
          %s845 = smul.addr %s844, 5
          %s846 = scalar_lea.vmem [#allocation22], %s845
          %s848 = ssub.s32 80, 80
          %849 = vsyncadd %s843, %s848
          %s850 = smul.addr %s38, 5
          %s851 = smul.addr %s850, 16
          %s852 = scalar_lea.hbm %s15, %s851
          %s854 = sshll.u32 %s846, 4
          %s855 = int_to_ptr.vmem [resolvable:$true] %s854
          %857 = dma.hbm_to_vmem [thread:$0]  %s852, 80, %s855, %s843
        $region104: #{forward_pallas.1} parent=95 // pred_fallthru
          _
        // Predicated region
        $region105: #{forward_pallas.1} parent=95 // pred_check
          %p858 = pneg %p404
        $region106: #{forward_pallas.1} parent=95 // pred_check_branch
          %860 = sbr.rel (%p858) target = $region108
        $region107: #{forward_pallas.1} parent=95 // pred_region
          %p861 = scmp.lt.s32.totalorder %s38, 1
          %s862 = scalar_select %p861, %s38, 1
          %s863 = smul.addr %s862, 16
          %s864 = smul.addr %s863, 4
          %s865 = scalar_lea.vmem %s16, %s864
        $region108: #{forward_pallas.1} parent=95 // pred_fallthru
          _
        // Predicated region
        $region109: #{forward_pallas.1} parent=95 // pred_check
          %p866 = pneg %p430
        $region110: #{forward_pallas.1} parent=95 // pred_check_branch
          %868 = sbr.rel (%p866) target = $region112
        $region111: #{forward_pallas.1} parent=95 // pred_region
          %s869 = sand.u32 %s38, 1
          %s870 = scalar_lea.sflag [#allocation6], %s869
          %s871 = sand.u32 %s420, 1
          %s872 = scalar_lea.vmem [#allocation23], %s871
          %s874 = ssub.s32 16, 16
          %875 = vsyncadd %s870, %s874
          %s876 = smul.addr %s38, 16
          %s877 = scalar_lea.hbm %s17, %s876
          %s879 = sshll.u32 %s872, 4
          %s880 = int_to_ptr.vmem [resolvable:$true] %s879
          %882 = dma.hbm_to_vmem [thread:$0]  %s877, 16, %s880, %s870
        $region112: #{forward_pallas.1} parent=95 // pred_fallthru
          _
        // Predicated region
        $region113: #{forward_pallas.1} parent=95 // pred_check
          %p883 = pneg %p456
        $region114: #{forward_pallas.1} parent=95 // pred_check_branch
          %885 = sbr.rel (%p883) target = $region116
        $region115: #{forward_pallas.1} parent=95 // pred_region
          %s886 = sand.u32 %s38, 1
          %s887 = scalar_lea.sflag [#allocation6], %s886
          %s888 = sand.u32 %s446, 1
          %s889 = scalar_lea.vmem [#allocation24], %s888
          %s891 = ssub.s32 16, 16
          %892 = vsyncadd %s887, %s891
          %s893 = smul.addr %s38, 16
          %s894 = scalar_lea.hbm %s18, %s893
          %s896 = sshll.u32 %s889, 4
          %s897 = int_to_ptr.vmem [resolvable:$true] %s896
          %899 = dma.hbm_to_vmem [thread:$0]  %s894, 16, %s897, %s887
        $region116: #{forward_pallas.1} parent=95 // pred_fallthru
          _
        // Predicated region
        $region117: #{forward_pallas.1} parent=95 // pred_check
          %p900 = pneg %p482
        $region118: #{forward_pallas.1} parent=95 // pred_check_branch
          %902 = sbr.rel (%p900) target = $region120
        $region119: #{forward_pallas.1} parent=95 // pred_region
          %s903 = sand.u32 %s38, 1
          %s904 = scalar_lea.sflag [#allocation6], %s903
          %s905 = sand.u32 %s472, 1
          %s906 = scalar_lea.vmem [#allocation25], %s905
          %s908 = ssub.s32 16, 16
          %909 = vsyncadd %s904, %s908
          %s910 = smul.addr %s38, 16
          %s911 = scalar_lea.hbm %s19, %s910
          %s913 = sshll.u32 %s906, 4
          %s914 = int_to_ptr.vmem [resolvable:$true] %s913
          %916 = dma.hbm_to_vmem [thread:$0]  %s911, 16, %s914, %s904
        $region120: #{forward_pallas.1} parent=95 // pred_fallthru
          _
      $region96: #{forward_pallas.1} parent=5 // pred_fallthru
        _
      %p917 = scmp.le.s32.totalorder 1, %s38
      %p918 = scmp.lt.s32.totalorder %s38, 3
      %p919 = pnand %p917, %p918
      %p920 = pneg %p919
      // Predicated region
      $region121: #{forward_pallas.1} parent=5 // pred_check
        _
      $region122: #{forward_pallas.1} parent=5 // pred_check_branch
        %922 = sbr.rel (%p919) target = $region124
      $region123: #{forward_pallas.1} parent=5 // pred_region
        %s923 = ssub.s32 %s38, 1
        // Predicated region
        $region125: #{forward_pallas.1} parent=123 // pred_check
          %p924 = pneg %p143
        $region126: #{forward_pallas.1} parent=123 // pred_check_branch
          %926 = sbr.rel (%p924) target = $region128
        $region127: #{forward_pallas.1} parent=123 // pred_region
          %927 = dma.done [#allocation6], 512
        $region128: #{forward_pallas.1} parent=123 // pred_fallthru
          _
        // Predicated region
        $region129: #{forward_pallas.1} parent=123 // pred_check
          %p928 = pneg %p164
        $region130: #{forward_pallas.1} parent=123 // pred_check_branch
          %930 = sbr.rel (%p928) target = $region132
        $region131: #{forward_pallas.1} parent=123 // pred_region
          %931 = dma.done [#allocation8], 512
        $region132: #{forward_pallas.1} parent=123 // pred_fallthru
          _
        // Predicated region
        $region133: #{forward_pallas.1} parent=123 // pred_check
          %p932 = pneg %p185
        $region134: #{forward_pallas.1} parent=123 // pred_check_branch
          %934 = sbr.rel (%p932) target = $region136
        $region135: #{forward_pallas.1} parent=123 // pred_region
          %935 = dma.done [#allocation8], 32
        $region136: #{forward_pallas.1} parent=123 // pred_fallthru
          _
        // Predicated region
        $region137: #{forward_pallas.1} parent=123 // pred_check
          %p936 = pneg %p206
        $region138: #{forward_pallas.1} parent=123 // pred_check_branch
          %938 = sbr.rel (%p936) target = $region140
        $region139: #{forward_pallas.1} parent=123 // pred_region
          %939 = dma.done [#allocation11], 16
        $region140: #{forward_pallas.1} parent=123 // pred_fallthru
          _
        // Predicated region
        $region141: #{forward_pallas.1} parent=123 // pred_check
          %p940 = pneg %p227
        $region142: #{forward_pallas.1} parent=123 // pred_check_branch
          %942 = sbr.rel (%p940) target = $region144
        $region143: #{forward_pallas.1} parent=123 // pred_region
          %943 = dma.done [#allocation11], 256
        $region144: #{forward_pallas.1} parent=123 // pred_fallthru
          _
        // Predicated region
        $region145: #{forward_pallas.1} parent=123 // pred_check
          %p944 = pneg %p248
        $region146: #{forward_pallas.1} parent=123 // pred_check_branch
          %946 = sbr.rel (%p944) target = $region148
        $region147: #{forward_pallas.1} parent=123 // pred_region
          %947 = dma.done [#allocation14], 16
        $region148: #{forward_pallas.1} parent=123 // pred_fallthru
          _
        // Predicated region
        $region149: #{forward_pallas.1} parent=123 // pred_check
          %p948 = pneg %p269
        $region150: #{forward_pallas.1} parent=123 // pred_check_branch
          %950 = sbr.rel (%p948) target = $region152
        $region151: #{forward_pallas.1} parent=123 // pred_region
          %951 = dma.done [#allocation14], 32
        $region152: #{forward_pallas.1} parent=123 // pred_fallthru
          _
        // Predicated region
        $region153: #{forward_pallas.1} parent=123 // pred_check
          %p952 = pneg %p290
        $region154: #{forward_pallas.1} parent=123 // pred_check_branch
          %954 = sbr.rel (%p952) target = $region156
        $region155: #{forward_pallas.1} parent=123 // pred_region
          %955 = dma.done [#allocation17], 16
        $region156: #{forward_pallas.1} parent=123 // pred_fallthru
          _
        // Predicated region
        $region157: #{forward_pallas.1} parent=123 // pred_check
          %p956 = pneg %p311
        $region158: #{forward_pallas.1} parent=123 // pred_check_branch
          %958 = sbr.rel (%p956) target = $region160
        $region159: #{forward_pallas.1} parent=123 // pred_region
          %959 = dma.done [#allocation17], 256
        $region160: #{forward_pallas.1} parent=123 // pred_fallthru
          _
        // Predicated region
        $region161: #{forward_pallas.1} parent=123 // pred_check
          %p960 = pneg %p332
        $region162: #{forward_pallas.1} parent=123 // pred_check_branch
          %962 = sbr.rel (%p960) target = $region164
        $region163: #{forward_pallas.1} parent=123 // pred_region
          %963 = dma.done [#allocation20], 16
        $region164: #{forward_pallas.1} parent=123 // pred_fallthru
          _
        %s964 = sand.u32 %s43, 1
        %s965 = scalar_lea.sflag [#allocation6], %s964
        %s966 = sand.u32 %s345, 1
        %s967 = smul.addr %s966, 320
        %s968 = scalar_lea.vmem [#allocation21], %s967
        // Predicated region
        $region165: #{forward_pallas.1} parent=123 // pred_check
          %p969 = pneg %p358
        $region166: #{forward_pallas.1} parent=123 // pred_check_branch
          %971 = sbr.rel (%p969) target = $region168
        $region167: #{forward_pallas.1} parent=123 // pred_region
          %972 = dma.done %s965, 5120
        $region168: #{forward_pallas.1} parent=123 // pred_fallthru
          _
        %s973 = sand.u32 %s43, 1
        %s974 = scalar_lea.sflag [#allocation6], %s973
        %s975 = sand.u32 %s371, 1
        %s976 = smul.addr %s975, 5
        %s977 = scalar_lea.vmem [#allocation22], %s976
        // Predicated region
        $region169: #{forward_pallas.1} parent=123 // pred_check
          %p978 = pneg %p384
        $region170: #{forward_pallas.1} parent=123 // pred_check_branch
          %980 = sbr.rel (%p978) target = $region172
        $region171: #{forward_pallas.1} parent=123 // pred_region
          %981 = dma.done %s974, 80
        $region172: #{forward_pallas.1} parent=123 // pred_fallthru
          _
        %s982 = sand.u32 %s43, 1
        %s983 = scalar_lea.sflag [#allocation6], %s982
        %s984 = sand.u32 %s423, 1
        %s985 = scalar_lea.vmem [#allocation23], %s984
        // Predicated region
        $region173: #{forward_pallas.1} parent=123 // pred_check
          %p986 = pneg %p436
        $region174: #{forward_pallas.1} parent=123 // pred_check_branch
          %988 = sbr.rel (%p986) target = $region176
        $region175: #{forward_pallas.1} parent=123 // pred_region
          %989 = dma.done %s983, 16
        $region176: #{forward_pallas.1} parent=123 // pred_fallthru
          _
        %s990 = sand.u32 %s43, 1
        %s991 = scalar_lea.sflag [#allocation6], %s990
        %s992 = sand.u32 %s449, 1
        %s993 = scalar_lea.vmem [#allocation24], %s992
        // Predicated region
        $region177: #{forward_pallas.1} parent=123 // pred_check
          %p994 = pneg %p462
        $region178: #{forward_pallas.1} parent=123 // pred_check_branch
          %996 = sbr.rel (%p994) target = $region180
        $region179: #{forward_pallas.1} parent=123 // pred_region
          %997 = dma.done %s991, 16
        $region180: #{forward_pallas.1} parent=123 // pred_fallthru
          _
        %s998 = sand.u32 %s43, 1
        %s999 = scalar_lea.sflag [#allocation6], %s998
        %s1000 = sand.u32 %s475, 1
        %s1001 = scalar_lea.vmem [#allocation25], %s1000
        // Predicated region
        $region181: #{forward_pallas.1} parent=123 // pred_check
          %p1002 = pneg %p488
        $region182: #{forward_pallas.1} parent=123 // pred_check_branch
          %1004 = sbr.rel (%p1002) target = $region184
        $region183: #{forward_pallas.1} parent=123 // pred_region
          %1005 = dma.done %s999, 16
        $region184: #{forward_pallas.1} parent=123 // pred_fallthru
          _
        // Predicated region
        $region185: #{forward_pallas.1} parent=123 // pred_check
          %p1006 = pneg %p572
        $region186: #{forward_pallas.1} parent=123 // pred_check_branch
          %1008 = sbr.rel (%p1006) target = $region188
        $region187: #{forward_pallas.1} parent=123 // pred_region
          %1009 = dma.done [#allocation8], 16
        $region188: #{forward_pallas.1} parent=123 // pred_fallthru
          _
        // Predicated region
        $region189: #{forward_pallas.1} parent=123 // pred_check
          %p1010 = pneg %p614
        $region190: #{forward_pallas.1} parent=123 // pred_check_branch
          %1012 = sbr.rel (%p1010) target = $region192
        $region191: #{forward_pallas.1} parent=123 // pred_region
          %1013 = dma.done [#allocation11], 16
        $region192: #{forward_pallas.1} parent=123 // pred_fallthru
          _
        %p1014 = pneg %p59
        %p1015 = pneg %p56
        %p1016 = pneg %p80
        %p1017 = pneg %p77
        %p1018 = pneg %p101
        %p1019 = pneg %p98
        %p1020 = pneg %p122
        %p1021 = pneg %p119
        %p1022 = pneg %p143
        %p1023 = pneg %p140
        %p1024 = pneg %p164
        %p1025 = pneg %p161
        %p1026 = pneg %p185
        %p1027 = pneg %p182
        %p1028 = pneg %p206
        %p1029 = pneg %p203
        %p1030 = pneg %p227
        %p1031 = pneg %p224
        %p1032 = pneg %p248
        %p1033 = pneg %p245
        %p1034 = pneg %p269
        %p1035 = pneg %p266
        %p1036 = pneg %p290
        %p1037 = pneg %p287
        %p1038 = pneg %p311
        %p1039 = pneg %p308
        %p1040 = pneg %p332
        %p1041 = pneg %p329
        %s1042 = sand.u32 %s43, 1
        %s1043 = scalar_lea.sflag [#allocation6], %s1042
        %s1044 = sand.u32 %s345, 1
        %s1045 = smul.addr %s1044, 320
        %s1046 = scalar_lea.vmem [#allocation21], %s1045
        %p1047 = pneg %p358
        %p1048 = pneg %p355
        %s1049 = sand.u32 %s43, 1
        %s1050 = scalar_lea.sflag [#allocation6], %s1049
        %s1051 = sand.u32 %s371, 1
        %s1052 = smul.addr %s1051, 5
        %s1053 = scalar_lea.vmem [#allocation22], %s1052
        %p1054 = pneg %p384
        %p1055 = pneg %p381
        %p1056 = scmp.lt.s32.totalorder %s43, 1
        %s1057 = scalar_select %p1056, %s43, 1
        %s1058 = smul.addr %s1057, 16
        %s1059 = smul.addr %s1058, 4
        %s1060 = scalar_lea.vmem %s16, %s1059
        %p1061 = pneg %p410
        %p1062 = pneg %p407
        %s1063 = sand.u32 %s43, 1
        %s1064 = scalar_lea.sflag [#allocation6], %s1063
        %s1065 = sand.u32 %s423, 1
        %s1066 = scalar_lea.vmem [#allocation23], %s1065
        %p1067 = pneg %p436
        %p1068 = pneg %p433
        %s1069 = sand.u32 %s43, 1
        %s1070 = scalar_lea.sflag [#allocation6], %s1069
        %s1071 = sand.u32 %s449, 1
        %s1072 = scalar_lea.vmem [#allocation24], %s1071
        %p1073 = pneg %p462
        %p1074 = pneg %p459
        %s1075 = sand.u32 %s43, 1
        %s1076 = scalar_lea.sflag [#allocation6], %s1075
        %s1077 = sand.u32 %s475, 1
        %s1078 = scalar_lea.vmem [#allocation25], %s1077
        %p1079 = pneg %p488
        %p1080 = pneg %p485
        %p1081 = pneg %p509
        %p1082 = pneg %p506
        %p1083 = pneg %p530
        %p1084 = pneg %p527
        %p1085 = pneg %p551
        %p1086 = pneg %p548
        %p1087 = pneg %p572
        %p1088 = pneg %p569
        %p1089 = pneg %p593
        %p1090 = pneg %p590
        %p1091 = pneg %p614
        %p1092 = pneg %p611
        %p1093 = pneg %p635
        %p1094 = pneg %p632
        %p1095 = scmp.lt.s32.totalorder %s43, 1
        %s1096 = scalar_select %p1095, %s43, 1
        %s1097 = smul.addr %s1096, 16
        %s1098 = smul.addr %s1097, 4
        %s1099 = scalar_lea.vmem %s16, %s1098
        %p1101 = scmp.eq.s32.totalorder %s43, 0
        // Predicated region
        $region193: #{forward_pallas.1} parent=123 // pred_check
          %p1102 = pneg %p1101
        $region194: #{forward_pallas.1} parent=123 // pred_check_branch
          %1104 = sbr.rel (%p1102) target = $region196
        $region195: #{forward_pallas.1} parent=123 // pred_region
          %v1105 = vld [vmem:[%s0] sm:$0xff]
          %v1106 = vld [vmem:[%s0 + $0x8] sm:$0xff]
          %v1107 = vld [vmem:[%s0 + $0x10] sm:$0xff]
          %v1108 = vld [vmem:[%s0 + $0x18] sm:$0xff]
          %v1109 = vld [vmem:[%s0 + $0x20] sm:$0xff]
          %v1110 = vld [vmem:[%s0 + $0x28] sm:$0xff]
          %v1111 = vld [vmem:[%s0 + $0x30] sm:$0xff]
          %v1112 = vld [vmem:[%s0 + $0x38] sm:$0xff]
          %v1113 = vld [vmem:[#allocation9] sm:$0x3]
          %v1114 = vld [vmem:[#allocation10] sm:$0x1]
          %v1116 = vlaneseq
          %v1117 = vshrl.u32 %v1116, 7
          %v1118 = vsub.s32 0, %v1117
          %v1119 = vrot.slane %v1114, %v1118
          %vm1121 = vcmask 15360
          %v1123 = vsel %vm1121, %v1105, 0
          %v1126 = vsel %vm1121, %v1106, 0
          %v1129 = vsel %vm1121, %v1107, 0
          %v1132 = vsel %vm1121, %v1108, 0
          %v1135 = vsel %vm1121, %v1109, 0
          %v1138 = vsel %vm1121, %v1110, 0
          %v1141 = vsel %vm1121, %v1111, 0
          %v1144 = vsel %vm1121, %v1112, 0
          %vm1146 = vcmask 1041408
          %v1148 = vsel %vm1146, %v1113, 0
          %1150 = vmatprep.subr.mxu0 0.0
          %1151 = vmatpush1.msra.mxu0 %v1148
          %1152 = vmatprep.subr.mxu0 0.0
          %1153 = vmatpush1.msra.mxu0 0.0
          %1154 = vmatprep.subr.mxu0 0.0
          %1155 = vmatpush1.msra.mxu0 0.0
          %1156 = vmatprep.subr.mxu0 0.0
          %1157 = vmatpush1.msra.mxu0 0.0
          %1158 = vmatprep.subr.mxu0 0.0
          %1159 = vmatpush1.msra.mxu0 0.0
          %1160 = vmatprep.subr.mxu0 0.0
          %1161 = vmatpush1.msra.mxu0 0.0
          %1162 = vmatprep.subr.mxu0 0.0
          %1163 = vmatpush1.msra.mxu0 0.0
          %1164 = vmatprep.subr.mxu0 0.0
          %1165 = vmatpush1.msra.mxu0 0.0
          %1166 = vmatprep.subr.mxu0 0.0
          %1167 = vmatpush1.msra.mxu0 0.0
          %1168 = vmatprep.subr.mxu0 0.0
          %1169 = vmatpush1.msra.mxu0 0.0
          %1170 = vmatprep.subr.mxu0 0.0
          %1171 = vmatpush1.msra.mxu0 0.0
          %1172 = vmatprep.subr.mxu0 0.0
          %1173 = vmatpush1.msra.mxu0 0.0
          %1174 = vmatprep.subr.mxu0 0.0
          %1175 = vmatpush1.msra.mxu0 0.0
          %1176 = vmatprep.subr.mxu0 0.0
          %1177 = vmatpush1.msra.mxu0 0.0
          %1178 = vmatprep.subr.mxu0 0.0
          %1179 = vmatpush1.msra.mxu0 0.0
          %1180 = vmatprep.subr.mxu0 0.0
          %1181 = vmatpush1.msra.mxu0 0.0
          %1182 = vmatprep.subr.mxu0 0.0
          %1183 = vmatpush1.msra.mxu0 0.0
          %1184 = vmatprep.subr.mxu0 0.0
          %1185 = vmatpush1.msra.mxu0 0.0
          %1186 = vmatprep.subr.mxu0 0.0
          %1187 = vmatpush1.msra.mxu0 0.0
          %1188 = vmatprep.subr.mxu0 0.0
          %1189 = vmatpush1.msra.mxu0 0.0
          %1190 = vmatprep.subr.mxu0 0.0
          %1191 = vmatpush1.msra.mxu0 0.0
          %1192 = vmatprep.subr.mxu0 0.0
          %1193 = vmatpush1.msra.mxu0 0.0
          %1194 = vmatprep.subr.mxu0 0.0
          %1195 = vmatpush1.msra.mxu0 0.0
          %1196 = vmatprep.subr.mxu0 0.0
          %1197 = vmatpush1.msra.mxu0 0.0
          %1198 = vmatprep.subr.mxu0 0.0
          %1199 = vmatpush1.msra.mxu0 0.0
          %1200 = vmatprep.subr.mxu0 0.0
          %1201 = vmatpush1.msra.mxu0 0.0
          %1202 = vmatprep.subr.mxu0 0.0
          %1203 = vmatpush1.msra.mxu0 0.0
          %1204 = vmatprep.subr.mxu0 0.0
          %1205 = vmatpush1.msra.mxu0 0.0
          %1206 = vmatprep.subr.mxu0 0.0
          %1207 = vmatpush1.msra.mxu0 0.0
          %1208 = vmatprep.subr.mxu0 0.0
          %1209 = vmatpush1.msra.mxu0 0.0
          %1210 = vmatprep.subr.mxu0 0.0
          %1211 = vmatpush1.msra.mxu0 0.0
          %1212 = vmatprep.subr.mxu0 0.0
          %1213 = vmatpush1.msra.mxu0 0.0
          %1214 = vmatprep.mubr.f32.mxu0 0.0
          %1215 = vmatmul.mubr.f32.gmra.mrb[0].mxu0 %v1123
          %v1216 = vpop.f32.mrb[0].mxu0
          %v1217 = vadd.f32 %v1119, %v1216
          %v1218 = vpop.f32.mrb[0].mxu0
          %1219 = vmatprep.mubr.f32.mxu0 0.0
          %1220 = vmatmul.mubr.f32.gmra.mrb[0].mxu0 %v1126
          %v1221 = vpop.f32.mrb[0].mxu0
          %v1222 = vadd.f32 %v1119, %v1221
          %v1223 = vpop.f32.mrb[0].mxu0
          %1224 = vmatprep.mubr.f32.mxu0 0.0
          %1225 = vmatmul.mubr.f32.gmra.mrb[0].mxu0 %v1129
          %v1226 = vpop.f32.mrb[0].mxu0
          %v1227 = vadd.f32 %v1119, %v1226
          %v1228 = vpop.f32.mrb[0].mxu0
          %1229 = vmatprep.mubr.f32.mxu0 0.0
          %1230 = vmatmul.mubr.f32.gmra.mrb[0].mxu0 %v1132
          %v1231 = vpop.f32.mrb[0].mxu0
          %v1232 = vadd.f32 %v1119, %v1231
          %v1233 = vpop.f32.mrb[0].mxu0
          %1234 = vmatprep.mubr.f32.mxu0 0.0
          %1235 = vmatmul.mubr.f32.gmra.mrb[0].mxu0 %v1135
          %v1236 = vpop.f32.mrb[0].mxu0
          %v1237 = vadd.f32 %v1119, %v1236
          %v1238 = vpop.f32.mrb[0].mxu0
          %1239 = vmatprep.mubr.f32.mxu0 0.0
          %1240 = vmatmul.mubr.f32.gmra.mrb[0].mxu0 %v1138
          %v1241 = vpop.f32.mrb[0].mxu0
          %v1242 = vadd.f32 %v1119, %v1241
          %v1243 = vpop.f32.mrb[0].mxu0
          %1244 = vmatprep.mubr.f32.mxu0 0.0
          %1245 = vmatmul.mubr.f32.gmra.mrb[0].mxu0 %v1141
          %v1246 = vpop.f32.mrb[0].mxu0
          %v1247 = vadd.f32 %v1119, %v1246
          %v1248 = vpop.f32.mrb[0].mxu0
          %1249 = vmatprep.mubr.f32.mxu0 0.0
          %1250 = vmatmul.mubr.f32.gmra.mrb[0].mxu0 %v1144
          %v1251 = vpop.f32.mrb[0].mxu0
          %v1252 = vadd.f32 %v1119, %v1251
          %v1253 = vpop.f32.mrb[0].mxu0
          %1254 = vdwg.mxu0
          %v1255 = vmax.f32 %v1217, 0.0
          %v1256 = vmax.f32 %v1222, 0.0
          %v1257 = vmax.f32 %v1227, 0.0
          %v1258 = vmax.f32 %v1232, 0.0
          %v1259 = vmax.f32 %v1237, 0.0
          %v1260 = vmax.f32 %v1242, 0.0
          %v1261 = vmax.f32 %v1247, 0.0
          %v1262 = vmax.f32 %v1252, 0.0
          %v1263 = vld [vmem:[#allocation12] sm:$0xff]
          %v1264 = vld [vmem:[#allocation12 + $0x8] sm:$0xff]
          %v1265 = vld [vmem:[#allocation13] sm:$0x1]
          %v1267 = vlaneseq
          %v1268 = vshrl.u32 %v1267, 7
          %v1269 = vsub.s32 0, %v1268
          %v1270 = vrot.slane %v1265, %v1269
          %vm1272 = vcmask 130048
          %v1274 = vsel %vm1272, %v1255, 0
          %v1277 = vsel %vm1272, %v1256, 0
          %v1280 = vsel %vm1272, %v1257, 0
          %v1283 = vsel %vm1272, %v1258, 0
          %v1286 = vsel %vm1272, %v1259, 0
          %v1289 = vsel %vm1272, %v1260, 0
          %v1292 = vsel %vm1272, %v1261, 0
          %v1295 = vsel %vm1272, %v1262, 0
          %1297 = vmatprep.subr.mxu0 0.0
          %1298 = vmatpush1.msra.mxu0 %v1263
          %1299 = vmatprep.subr.mxu0 0.0
          %1300 = vmatpush1.msra.mxu0 %v1264
          %1301 = vmatprep.subr.mxu0 0.0
          %1302 = vmatpush1.msra.mxu0 0.0
          %1303 = vmatprep.subr.mxu0 0.0
          %1304 = vmatpush1.msra.mxu0 0.0
          %1305 = vmatprep.subr.mxu0 0.0
          %1306 = vmatpush1.msra.mxu0 0.0
          %1307 = vmatprep.subr.mxu0 0.0
          %1308 = vmatpush1.msra.mxu0 0.0
          %1309 = vmatprep.subr.mxu0 0.0
          %1310 = vmatpush1.msra.mxu0 0.0
          %1311 = vmatprep.subr.mxu0 0.0
          %1312 = vmatpush1.msra.mxu0 0.0
          %1313 = vmatprep.subr.mxu0 0.0
          %1314 = vmatpush1.msra.mxu0 0.0
          %1315 = vmatprep.subr.mxu0 0.0
          %1316 = vmatpush1.msra.mxu0 0.0
          %1317 = vmatprep.subr.mxu0 0.0
          %1318 = vmatpush1.msra.mxu0 0.0
          %1319 = vmatprep.subr.mxu0 0.0
          %1320 = vmatpush1.msra.mxu0 0.0
          %1321 = vmatprep.subr.mxu0 0.0
          %1322 = vmatpush1.msra.mxu0 0.0
          %1323 = vmatprep.subr.mxu0 0.0
          %1324 = vmatpush1.msra.mxu0 0.0
          %1325 = vmatprep.subr.mxu0 0.0
          %1326 = vmatpush1.msra.mxu0 0.0
          %1327 = vmatprep.subr.mxu0 0.0
          %1328 = vmatpush1.msra.mxu0 0.0
          %1329 = vmatprep.subr.mxu0 0.0
          %1330 = vmatpush1.msra.mxu0 0.0
          %1331 = vmatprep.subr.mxu0 0.0
          %1332 = vmatpush1.msra.mxu0 0.0
          %1333 = vmatprep.subr.mxu0 0.0
          %1334 = vmatpush1.msra.mxu0 0.0
          %1335 = vmatprep.subr.mxu0 0.0
          %1336 = vmatpush1.msra.mxu0 0.0
          %1337 = vmatprep.subr.mxu0 0.0
          %1338 = vmatpush1.msra.mxu0 0.0
          %1339 = vmatprep.subr.mxu0 0.0
          %1340 = vmatpush1.msra.mxu0 0.0
          %1341 = vmatprep.subr.mxu0 0.0
          %1342 = vmatpush1.msra.mxu0 0.0
          %1343 = vmatprep.subr.mxu0 0.0
          %1344 = vmatpush1.msra.mxu0 0.0
          %1345 = vmatprep.subr.mxu0 0.0
          %1346 = vmatpush1.msra.mxu0 0.0
          %1347 = vmatprep.subr.mxu0 0.0
          %1348 = vmatpush1.msra.mxu0 0.0
          %1349 = vmatprep.subr.mxu0 0.0
          %1350 = vmatpush1.msra.mxu0 0.0
          %1351 = vmatprep.subr.mxu0 0.0
          %1352 = vmatpush1.msra.mxu0 0.0
          %1353 = vmatprep.subr.mxu0 0.0
          %1354 = vmatpush1.msra.mxu0 0.0
          %1355 = vmatprep.subr.mxu0 0.0
          %1356 = vmatpush1.msra.mxu0 0.0
          %1357 = vmatprep.subr.mxu0 0.0
          %1358 = vmatpush1.msra.mxu0 0.0
          %1359 = vmatprep.subr.mxu0 0.0
          %1360 = vmatpush1.msra.mxu0 0.0
          %1361 = vmatprep.mubr.f32.mxu0 0.0
          %1362 = vmatmul.mubr.f32.gmra.mrb[0].mxu0 %v1274
          %v1363 = vpop.f32.mrb[0].mxu0
          %v1364 = vadd.f32 %v1270, %v1363
          %v1365 = vpop.f32.mrb[0].mxu0
          %1366 = vmatprep.mubr.f32.mxu0 0.0
          %1367 = vmatmul.mubr.f32.gmra.mrb[0].mxu0 %v1277
          %v1368 = vpop.f32.mrb[0].mxu0
          %v1369 = vadd.f32 %v1270, %v1368
          %v1370 = vpop.f32.mrb[0].mxu0
          %1371 = vmatprep.mubr.f32.mxu0 0.0
          %1372 = vmatmul.mubr.f32.gmra.mrb[0].mxu0 %v1280
          %v1373 = vpop.f32.mrb[0].mxu0
          %v1374 = vadd.f32 %v1270, %v1373
          %v1375 = vpop.f32.mrb[0].mxu0
          %1376 = vmatprep.mubr.f32.mxu0 0.0
          %1377 = vmatmul.mubr.f32.gmra.mrb[0].mxu0 %v1283
          %v1378 = vpop.f32.mrb[0].mxu0
          %v1379 = vadd.f32 %v1270, %v1378
          %v1380 = vpop.f32.mrb[0].mxu0
          %1381 = vmatprep.mubr.f32.mxu0 0.0
          %1382 = vmatmul.mubr.f32.gmra.mrb[0].mxu0 %v1286
          %v1383 = vpop.f32.mrb[0].mxu0
          %v1384 = vadd.f32 %v1270, %v1383
          %v1385 = vpop.f32.mrb[0].mxu0
          %1386 = vmatprep.mubr.f32.mxu0 0.0
          %1387 = vmatmul.mubr.f32.gmra.mrb[0].mxu0 %v1289
          %v1388 = vpop.f32.mrb[0].mxu0
          %v1389 = vadd.f32 %v1270, %v1388
          %v1390 = vpop.f32.mrb[0].mxu0
          %1391 = vmatprep.mubr.f32.mxu0 0.0
          %1392 = vmatmul.mubr.f32.gmra.mrb[0].mxu0 %v1292
          %v1393 = vpop.f32.mrb[0].mxu0
          %v1394 = vadd.f32 %v1270, %v1393
          %v1395 = vpop.f32.mrb[0].mxu0
          %1396 = vmatprep.mubr.f32.mxu0 0.0
          %1397 = vmatmul.mubr.f32.gmra.mrb[0].mxu0 %v1295
          %v1398 = vpop.f32.mrb[0].mxu0
          %v1399 = vadd.f32 %v1270, %v1398
          %v1400 = vpop.f32.mrb[0].mxu0
          %1401 = vdwg.mxu0
          %1402 = vst [vmem:[#allocation2] sm:$0xff] %v1364
          %1403 = vst [vmem:[#allocation2 + $0x8] sm:$0xff] %v1369
          %1404 = vst [vmem:[#allocation2 + $0x10] sm:$0xff] %v1374
          %1405 = vst [vmem:[#allocation2 + $0x18] sm:$0xff] %v1379
          %1406 = vst [vmem:[#allocation2 + $0x20] sm:$0xff] %v1384
          %1407 = vst [vmem:[#allocation2 + $0x28] sm:$0xff] %v1389
          %1408 = vst [vmem:[#allocation2 + $0x30] sm:$0xff] %v1394
          %1409 = vst [vmem:[#allocation2 + $0x38] sm:$0xff] %v1399
          %v1410 = vld [vmem:[%s1] sm:$0xff]
          %v1411 = vld [vmem:[%s1 + $0x8] sm:$0xff]
          %v1412 = vld [vmem:[%s1 + $0x10] sm:$0xff]
          %v1413 = vld [vmem:[%s1 + $0x18] sm:$0xff]
          %v1414 = vld [vmem:[%s1 + $0x20] sm:$0xff]
          %v1415 = vld [vmem:[%s1 + $0x28] sm:$0xff]
          %v1416 = vld [vmem:[%s1 + $0x30] sm:$0xff]
          %v1417 = vld [vmem:[%s1 + $0x38] sm:$0xff]
          %v1418 = vld [vmem:[%s1 + $0x40] sm:$0xff]
          %v1419 = vld [vmem:[%s1 + $0x48] sm:$0xff]
          %v1420 = vld [vmem:[%s1 + $0x50] sm:$0xff]
          %v1421 = vld [vmem:[%s1 + $0x58] sm:$0xff]
          %v1422 = vld [vmem:[%s1 + $0x60] sm:$0xff]
          %v1423 = vld [vmem:[%s1 + $0x68] sm:$0xff]
          %v1424 = vld [vmem:[%s1 + $0x70] sm:$0xff]
          %v1425 = vld [vmem:[%s1 + $0x78] sm:$0xff]
          %v1426 = vld [vmem:[#allocation15] sm:$0x3]
          %v1427 = vld [vmem:[#allocation16] sm:$0x1]
          %v1429 = vlaneseq
          %v1430 = vshrl.u32 %v1429, 7
          %v1431 = vsub.s32 0, %v1430
          %v1432 = vrot.slane %v1427, %v1431
          %v1435 = vsel %vm1121, %v1410, 0
          %v1438 = vsel %vm1121, %v1411, 0
          %v1441 = vsel %vm1121, %v1412, 0
          %v1444 = vsel %vm1121, %v1413, 0
          %v1447 = vsel %vm1121, %v1414, 0
          %v1450 = vsel %vm1121, %v1415, 0
          %v1453 = vsel %vm1121, %v1416, 0
          %v1456 = vsel %vm1121, %v1417, 0
          %v1459 = vsel %vm1121, %v1418, 0
          %v1462 = vsel %vm1121, %v1419, 0
          %v1465 = vsel %vm1121, %v1420, 0
          %v1468 = vsel %vm1121, %v1421, 0
          %v1471 = vsel %vm1121, %v1422, 0
          %v1474 = vsel %vm1121, %v1423, 0
          %v1477 = vsel %vm1121, %v1424, 0
          %v1480 = vsel %vm1121, %v1425, 0
          %v1483 = vsel %vm1146, %v1426, 0
          %1485 = vmatprep.subr.mxu0 0.0
          %1486 = vmatpush1.msra.mxu0 %v1483
          %1487 = vmatprep.subr.mxu0 0.0
          %1488 = vmatpush1.msra.mxu0 0.0
          %1489 = vmatprep.subr.mxu0 0.0
          %1490 = vmatpush1.msra.mxu0 0.0
          %1491 = vmatprep.subr.mxu0 0.0
          %1492 = vmatpush1.msra.mxu0 0.0
          %1493 = vmatprep.subr.mxu0 0.0
          %1494 = vmatpush1.msra.mxu0 0.0
          %1495 = vmatprep.subr.mxu0 0.0
          %1496 = vmatpush1.msra.mxu0 0.0
          %1497 = vmatprep.subr.mxu0 0.0
          %1498 = vmatpush1.msra.mxu0 0.0
          %1499 = vmatprep.subr.mxu0 0.0
          %1500 = vmatpush1.msra.mxu0 0.0
          %1501 = vmatprep.subr.mxu0 0.0
          %1502 = vmatpush1.msra.mxu0 0.0
          %1503 = vmatprep.subr.mxu0 0.0
          %1504 = vmatpush1.msra.mxu0 0.0
          %1505 = vmatprep.subr.mxu0 0.0
          %1506 = vmatpush1.msra.mxu0 0.0
          %1507 = vmatprep.subr.mxu0 0.0
          %1508 = vmatpush1.msra.mxu0 0.0
          %1509 = vmatprep.subr.mxu0 0.0
          %1510 = vmatpush1.msra.mxu0 0.0
          %1511 = vmatprep.subr.mxu0 0.0
          %1512 = vmatpush1.msra.mxu0 0.0
          %1513 = vmatprep.subr.mxu0 0.0
          %1514 = vmatpush1.msra.mxu0 0.0
          %1515 = vmatprep.subr.mxu0 0.0
          %1516 = vmatpush1.msra.mxu0 0.0
          %1517 = vmatprep.subr.mxu0 0.0
          %1518 = vmatpush1.msra.mxu0 0.0
          %1519 = vmatprep.subr.mxu0 0.0
          %1520 = vmatpush1.msra.mxu0 0.0
          %1521 = vmatprep.subr.mxu0 0.0
          %1522 = vmatpush1.msra.mxu0 0.0
          %1523 = vmatprep.subr.mxu0 0.0
          %1524 = vmatpush1.msra.mxu0 0.0
          %1525 = vmatprep.subr.mxu0 0.0
          %1526 = vmatpush1.msra.mxu0 0.0
          %1527 = vmatprep.subr.mxu0 0.0
          %1528 = vmatpush1.msra.mxu0 0.0
          %1529 = vmatprep.subr.mxu0 0.0
          %1530 = vmatpush1.msra.mxu0 0.0
          %1531 = vmatprep.subr.mxu0 0.0
          %1532 = vmatpush1.msra.mxu0 0.0
          %1533 = vmatprep.subr.mxu0 0.0
          %1534 = vmatpush1.msra.mxu0 0.0
          %1535 = vmatprep.subr.mxu0 0.0
          %1536 = vmatpush1.msra.mxu0 0.0
          %1537 = vmatprep.subr.mxu0 0.0
          %1538 = vmatpush1.msra.mxu0 0.0
          %1539 = vmatprep.subr.mxu0 0.0
          %1540 = vmatpush1.msra.mxu0 0.0
          %1541 = vmatprep.subr.mxu0 0.0
          %1542 = vmatpush1.msra.mxu0 0.0
          %1543 = vmatprep.subr.mxu0 0.0
          %1544 = vmatpush1.msra.mxu0 0.0
          %1545 = vmatprep.subr.mxu0 0.0
          %1546 = vmatpush1.msra.mxu0 0.0
          %1547 = vmatprep.subr.mxu0 0.0
          %1548 = vmatpush1.msra.mxu0 0.0
          %1549 = vmatprep.mubr.f32.mxu0 0.0
          %1550 = vmatmul.mubr.f32.gmra.mrb[0].mxu0 %v1435
          %v1551 = vpop.f32.mrb[0].mxu0
          %v1552 = vadd.f32 %v1432, %v1551
          %v1553 = vpop.f32.mrb[0].mxu0
          %1554 = vmatprep.mubr.f32.mxu0 0.0
          %1555 = vmatmul.mubr.f32.gmra.mrb[0].mxu0 %v1438
          %v1556 = vpop.f32.mrb[0].mxu0
          %v1557 = vadd.f32 %v1432, %v1556
          %v1558 = vpop.f32.mrb[0].mxu0
          %1559 = vmatprep.mubr.f32.mxu0 0.0
          %1560 = vmatmul.mubr.f32.gmra.mrb[0].mxu0 %v1441
          %v1561 = vpop.f32.mrb[0].mxu0
          %v1562 = vadd.f32 %v1432, %v1561
          %v1563 = vpop.f32.mrb[0].mxu0
          %1564 = vmatprep.mubr.f32.mxu0 0.0
          %1565 = vmatmul.mubr.f32.gmra.mrb[0].mxu0 %v1444
          %v1566 = vpop.f32.mrb[0].mxu0
          %v1567 = vadd.f32 %v1432, %v1566
          %v1568 = vpop.f32.mrb[0].mxu0
          %1569 = vmatprep.mubr.f32.mxu0 0.0
          %1570 = vmatmul.mubr.f32.gmra.mrb[0].mxu0 %v1447
          %v1571 = vpop.f32.mrb[0].mxu0
          %v1572 = vadd.f32 %v1432, %v1571
          %v1573 = vpop.f32.mrb[0].mxu0
          %1574 = vmatprep.mubr.f32.mxu0 0.0
          %1575 = vmatmul.mubr.f32.gmra.mrb[0].mxu0 %v1450
          %v1576 = vpop.f32.mrb[0].mxu0
          %v1577 = vadd.f32 %v1432, %v1576
          %v1578 = vpop.f32.mrb[0].mxu0
          %1579 = vmatprep.mubr.f32.mxu0 0.0
          %1580 = vmatmul.mubr.f32.gmra.mrb[0].mxu0 %v1453
          %v1581 = vpop.f32.mrb[0].mxu0
          %v1582 = vadd.f32 %v1432, %v1581
          %v1583 = vpop.f32.mrb[0].mxu0
          %1584 = vmatprep.mubr.f32.mxu0 0.0
          %1585 = vmatmul.mubr.f32.gmra.mrb[0].mxu0 %v1456
          %v1586 = vpop.f32.mrb[0].mxu0
          %v1587 = vadd.f32 %v1432, %v1586
          %v1588 = vpop.f32.mrb[0].mxu0
          %1589 = vmatprep.mubr.f32.mxu0 0.0
          %1590 = vmatmul.mubr.f32.gmra.mrb[0].mxu0 %v1459
          %v1591 = vpop.f32.mrb[0].mxu0
          %v1592 = vadd.f32 %v1432, %v1591
          %v1593 = vpop.f32.mrb[0].mxu0
          %1594 = vmatprep.mubr.f32.mxu0 0.0
          %1595 = vmatmul.mubr.f32.gmra.mrb[0].mxu0 %v1462
          %v1596 = vpop.f32.mrb[0].mxu0
          %v1597 = vadd.f32 %v1432, %v1596
          %v1598 = vpop.f32.mrb[0].mxu0
          %1599 = vmatprep.mubr.f32.mxu0 0.0
          %1600 = vmatmul.mubr.f32.gmra.mrb[0].mxu0 %v1465
          %v1601 = vpop.f32.mrb[0].mxu0
          %v1602 = vadd.f32 %v1432, %v1601
          %v1603 = vpop.f32.mrb[0].mxu0
          %1604 = vmatprep.mubr.f32.mxu0 0.0
          %1605 = vmatmul.mubr.f32.gmra.mrb[0].mxu0 %v1468
          %v1606 = vpop.f32.mrb[0].mxu0
          %v1607 = vadd.f32 %v1432, %v1606
          %v1608 = vpop.f32.mrb[0].mxu0
          %1609 = vmatprep.mubr.f32.mxu0 0.0
          %1610 = vmatmul.mubr.f32.gmra.mrb[0].mxu0 %v1471
          %v1611 = vpop.f32.mrb[0].mxu0
          %v1612 = vadd.f32 %v1432, %v1611
          %v1613 = vpop.f32.mrb[0].mxu0
          %1614 = vmatprep.mubr.f32.mxu0 0.0
          %1615 = vmatmul.mubr.f32.gmra.mrb[0].mxu0 %v1474
          %v1616 = vpop.f32.mrb[0].mxu0
          %v1617 = vadd.f32 %v1432, %v1616
          %v1618 = vpop.f32.mrb[0].mxu0
          %1619 = vmatprep.mubr.f32.mxu0 0.0
          %1620 = vmatmul.mubr.f32.gmra.mrb[0].mxu0 %v1477
          %v1621 = vpop.f32.mrb[0].mxu0
          %v1622 = vadd.f32 %v1432, %v1621
          %v1623 = vpop.f32.mrb[0].mxu0
          %1624 = vmatprep.mubr.f32.mxu0 0.0
          %1625 = vmatmul.mubr.f32.gmra.mrb[0].mxu0 %v1480
          %v1626 = vpop.f32.mrb[0].mxu0
          %v1627 = vadd.f32 %v1432, %v1626
          %v1628 = vpop.f32.mrb[0].mxu0
          %1629 = vdwg.mxu0
          %v1630 = vmax.f32 %v1552, 0.0
          %v1631 = vmax.f32 %v1557, 0.0
          %v1632 = vmax.f32 %v1562, 0.0
          %v1633 = vmax.f32 %v1567, 0.0
          %v1634 = vmax.f32 %v1572, 0.0
          %v1635 = vmax.f32 %v1577, 0.0
          %v1636 = vmax.f32 %v1582, 0.0
          %v1637 = vmax.f32 %v1587, 0.0
          %v1638 = vmax.f32 %v1592, 0.0
          %v1639 = vmax.f32 %v1597, 0.0
          %v1640 = vmax.f32 %v1602, 0.0
          %v1641 = vmax.f32 %v1607, 0.0
          %v1642 = vmax.f32 %v1612, 0.0
          %v1643 = vmax.f32 %v1617, 0.0
          %v1644 = vmax.f32 %v1622, 0.0
          %v1645 = vmax.f32 %v1627, 0.0
          %v1646 = vld [vmem:[#allocation18] sm:$0xff]
          %v1647 = vld [vmem:[#allocation18 + $0x8] sm:$0xff]
          %v1648 = vld [vmem:[#allocation19] sm:$0x1]
          %v1650 = vlaneseq
          %v1651 = vshrl.u32 %v1650, 7
          %v1652 = vsub.s32 0, %v1651
          %v1653 = vrot.slane %v1648, %v1652
          %v1656 = vsel %vm1272, %v1630, 0
          %v1659 = vsel %vm1272, %v1631, 0
          %v1662 = vsel %vm1272, %v1632, 0
          %v1665 = vsel %vm1272, %v1633, 0
          %v1668 = vsel %vm1272, %v1634, 0
          %v1671 = vsel %vm1272, %v1635, 0
          %v1674 = vsel %vm1272, %v1636, 0
          %v1677 = vsel %vm1272, %v1637, 0
          %v1680 = vsel %vm1272, %v1638, 0
          %v1683 = vsel %vm1272, %v1639, 0
          %v1686 = vsel %vm1272, %v1640, 0
          %v1689 = vsel %vm1272, %v1641, 0
          %v1692 = vsel %vm1272, %v1642, 0
          %v1695 = vsel %vm1272, %v1643, 0
          %v1698 = vsel %vm1272, %v1644, 0
          %v1701 = vsel %vm1272, %v1645, 0
          %1703 = vmatprep.subr.mxu0 0.0
          %1704 = vmatpush1.msra.mxu0 %v1646
          %1705 = vmatprep.subr.mxu0 0.0
          %1706 = vmatpush1.msra.mxu0 %v1647
          %1707 = vmatprep.subr.mxu0 0.0
          %1708 = vmatpush1.msra.mxu0 0.0
          %1709 = vmatprep.subr.mxu0 0.0
          %1710 = vmatpush1.msra.mxu0 0.0
          %1711 = vmatprep.subr.mxu0 0.0
          %1712 = vmatpush1.msra.mxu0 0.0
          %1713 = vmatprep.subr.mxu0 0.0
          %1714 = vmatpush1.msra.mxu0 0.0
          %1715 = vmatprep.subr.mxu0 0.0
          %1716 = vmatpush1.msra.mxu0 0.0
          %1717 = vmatprep.subr.mxu0 0.0
          %1718 = vmatpush1.msra.mxu0 0.0
          %1719 = vmatprep.subr.mxu0 0.0
          %1720 = vmatpush1.msra.mxu0 0.0
          %1721 = vmatprep.subr.mxu0 0.0
          %1722 = vmatpush1.msra.mxu0 0.0
          %1723 = vmatprep.subr.mxu0 0.0
          %1724 = vmatpush1.msra.mxu0 0.0
          %1725 = vmatprep.subr.mxu0 0.0
          %1726 = vmatpush1.msra.mxu0 0.0
          %1727 = vmatprep.subr.mxu0 0.0
          %1728 = vmatpush1.msra.mxu0 0.0
          %1729 = vmatprep.subr.mxu0 0.0
          %1730 = vmatpush1.msra.mxu0 0.0
          %1731 = vmatprep.subr.mxu0 0.0
          %1732 = vmatpush1.msra.mxu0 0.0
          %1733 = vmatprep.subr.mxu0 0.0
          %1734 = vmatpush1.msra.mxu0 0.0
          %1735 = vmatprep.subr.mxu0 0.0
          %1736 = vmatpush1.msra.mxu0 0.0
          %1737 = vmatprep.subr.mxu0 0.0
          %1738 = vmatpush1.msra.mxu0 0.0
          %1739 = vmatprep.subr.mxu0 0.0
          %1740 = vmatpush1.msra.mxu0 0.0
          %1741 = vmatprep.subr.mxu0 0.0
          %1742 = vmatpush1.msra.mxu0 0.0
          %1743 = vmatprep.subr.mxu0 0.0
          %1744 = vmatpush1.msra.mxu0 0.0
          %1745 = vmatprep.subr.mxu0 0.0
          %1746 = vmatpush1.msra.mxu0 0.0
          %1747 = vmatprep.subr.mxu0 0.0
          %1748 = vmatpush1.msra.mxu0 0.0
          %1749 = vmatprep.subr.mxu0 0.0
          %1750 = vmatpush1.msra.mxu0 0.0
          %1751 = vmatprep.subr.mxu0 0.0
          %1752 = vmatpush1.msra.mxu0 0.0
          %1753 = vmatprep.subr.mxu0 0.0
          %1754 = vmatpush1.msra.mxu0 0.0
          %1755 = vmatprep.subr.mxu0 0.0
          %1756 = vmatpush1.msra.mxu0 0.0
          %1757 = vmatprep.subr.mxu0 0.0
          %1758 = vmatpush1.msra.mxu0 0.0
          %1759 = vmatprep.subr.mxu0 0.0
          %1760 = vmatpush1.msra.mxu0 0.0
          %1761 = vmatprep.subr.mxu0 0.0
          %1762 = vmatpush1.msra.mxu0 0.0
          %1763 = vmatprep.subr.mxu0 0.0
          %1764 = vmatpush1.msra.mxu0 0.0
          %1765 = vmatprep.subr.mxu0 0.0
          %1766 = vmatpush1.msra.mxu0 0.0
          %1767 = vmatprep.mubr.f32.mxu0 0.0
          %1768 = vmatmul.mubr.f32.gmra.mrb[0].mxu0 %v1656
          %v1769 = vpop.f32.mrb[0].mxu0
          %v1770 = vadd.f32 %v1653, %v1769
          %v1771 = vpop.f32.mrb[0].mxu0
          %1772 = vmatprep.mubr.f32.mxu0 0.0
          %1773 = vmatmul.mubr.f32.gmra.mrb[0].mxu0 %v1659
          %v1774 = vpop.f32.mrb[0].mxu0
          %v1775 = vadd.f32 %v1653, %v1774
          %v1776 = vpop.f32.mrb[0].mxu0
          %1777 = vmatprep.mubr.f32.mxu0 0.0
          %1778 = vmatmul.mubr.f32.gmra.mrb[0].mxu0 %v1662
          %v1779 = vpop.f32.mrb[0].mxu0
          %v1780 = vadd.f32 %v1653, %v1779
          %v1781 = vpop.f32.mrb[0].mxu0
          %1782 = vmatprep.mubr.f32.mxu0 0.0
          %1783 = vmatmul.mubr.f32.gmra.mrb[0].mxu0 %v1665
          %v1784 = vpop.f32.mrb[0].mxu0
          %v1785 = vadd.f32 %v1653, %v1784
          %v1786 = vpop.f32.mrb[0].mxu0
          %1787 = vmatprep.mubr.f32.mxu0 0.0
          %1788 = vmatmul.mubr.f32.gmra.mrb[0].mxu0 %v1668
          %v1789 = vpop.f32.mrb[0].mxu0
          %v1790 = vadd.f32 %v1653, %v1789
          %v1791 = vpop.f32.mrb[0].mxu0
          %1792 = vmatprep.mubr.f32.mxu0 0.0
          %1793 = vmatmul.mubr.f32.gmra.mrb[0].mxu0 %v1671
          %v1794 = vpop.f32.mrb[0].mxu0
          %v1795 = vadd.f32 %v1653, %v1794
          %v1796 = vpop.f32.mrb[0].mxu0
          %1797 = vmatprep.mubr.f32.mxu0 0.0
          %1798 = vmatmul.mubr.f32.gmra.mrb[0].mxu0 %v1674
          %v1799 = vpop.f32.mrb[0].mxu0
          %v1800 = vadd.f32 %v1653, %v1799
          %v1801 = vpop.f32.mrb[0].mxu0
          %1802 = vmatprep.mubr.f32.mxu0 0.0
          %1803 = vmatmul.mubr.f32.gmra.mrb[0].mxu0 %v1677
          %v1804 = vpop.f32.mrb[0].mxu0
          %v1805 = vadd.f32 %v1653, %v1804
          %v1806 = vpop.f32.mrb[0].mxu0
          %1807 = vmatprep.mubr.f32.mxu0 0.0
          %1808 = vmatmul.mubr.f32.gmra.mrb[0].mxu0 %v1680
          %v1809 = vpop.f32.mrb[0].mxu0
          %v1810 = vadd.f32 %v1653, %v1809
          %v1811 = vpop.f32.mrb[0].mxu0
          %1812 = vmatprep.mubr.f32.mxu0 0.0
          %1813 = vmatmul.mubr.f32.gmra.mrb[0].mxu0 %v1683
          %v1814 = vpop.f32.mrb[0].mxu0
          %v1815 = vadd.f32 %v1653, %v1814
          %v1816 = vpop.f32.mrb[0].mxu0
          %1817 = vmatprep.mubr.f32.mxu0 0.0
          %1818 = vmatmul.mubr.f32.gmra.mrb[0].mxu0 %v1686
          %v1819 = vpop.f32.mrb[0].mxu0
          %v1820 = vadd.f32 %v1653, %v1819
          %v1821 = vpop.f32.mrb[0].mxu0
          %1822 = vmatprep.mubr.f32.mxu0 0.0
          %1823 = vmatmul.mubr.f32.gmra.mrb[0].mxu0 %v1689
          %v1824 = vpop.f32.mrb[0].mxu0
          %v1825 = vadd.f32 %v1653, %v1824
          %v1826 = vpop.f32.mrb[0].mxu0
          %1827 = vmatprep.mubr.f32.mxu0 0.0
          %1828 = vmatmul.mubr.f32.gmra.mrb[0].mxu0 %v1692
          %v1829 = vpop.f32.mrb[0].mxu0
          %v1830 = vadd.f32 %v1653, %v1829
          %v1831 = vpop.f32.mrb[0].mxu0
          %1832 = vmatprep.mubr.f32.mxu0 0.0
          %1833 = vmatmul.mubr.f32.gmra.mrb[0].mxu0 %v1695
          %v1834 = vpop.f32.mrb[0].mxu0
          %v1835 = vadd.f32 %v1653, %v1834
          %v1836 = vpop.f32.mrb[0].mxu0
          %1837 = vmatprep.mubr.f32.mxu0 0.0
          %1838 = vmatmul.mubr.f32.gmra.mrb[0].mxu0 %v1698
          %v1839 = vpop.f32.mrb[0].mxu0
          %v1840 = vadd.f32 %v1653, %v1839
          %v1841 = vpop.f32.mrb[0].mxu0
          %1842 = vmatprep.mubr.f32.mxu0 0.0
          %1843 = vmatmul.mubr.f32.gmra.mrb[0].mxu0 %v1701
          %v1844 = vpop.f32.mrb[0].mxu0
          %v1845 = vadd.f32 %v1653, %v1844
          %v1846 = vpop.f32.mrb[0].mxu0
          %1847 = vdwg.mxu0
          %1848 = vst [vmem:[#allocation3] sm:$0xff] %v1770
          %1849 = vst [vmem:[#allocation3 + $0x8] sm:$0xff] %v1775
          %1850 = vst [vmem:[#allocation3 + $0x10] sm:$0xff] %v1780
          %1851 = vst [vmem:[#allocation3 + $0x18] sm:$0xff] %v1785
          %1852 = vst [vmem:[#allocation3 + $0x20] sm:$0xff] %v1790
          %1853 = vst [vmem:[#allocation3 + $0x28] sm:$0xff] %v1795
          %1854 = vst [vmem:[#allocation3 + $0x30] sm:$0xff] %v1800
          %1855 = vst [vmem:[#allocation3 + $0x38] sm:$0xff] %v1805
          %1856 = vst [vmem:[#allocation3 + $0x40] sm:$0xff] %v1810
          %1857 = vst [vmem:[#allocation3 + $0x48] sm:$0xff] %v1815
          %1858 = vst [vmem:[#allocation3 + $0x50] sm:$0xff] %v1820
          %1859 = vst [vmem:[#allocation3 + $0x58] sm:$0xff] %v1825
          %1860 = vst [vmem:[#allocation3 + $0x60] sm:$0xff] %v1830
          %1861 = vst [vmem:[#allocation3 + $0x68] sm:$0xff] %v1835
          %1862 = vst [vmem:[#allocation3 + $0x70] sm:$0xff] %v1840
          %1863 = vst [vmem:[#allocation3 + $0x78] sm:$0xff] %v1845
        $region196: #{forward_pallas.1} parent=123 // pred_fallthru
          _
        %v1864 = vld [vmem:[%s2] sm:$0xf]
        %v1865 = vld [vmem:[%s2 + $0x4] sm:$0xf]
        %v1866 = vld [vmem:[%s2 + $0x8] sm:$0xf]
        %v1867 = vld [vmem:[%s2 + $0xc] sm:$0xf]
        %v1868 = vld [vmem:[%s2 + $0x10] sm:$0xf]
        %v1869 = vld [vmem:[%s2 + $0x14] sm:$0xf]
        %v1870 = vld [vmem:[%s2 + $0x18] sm:$0xf]
        %v1871 = vld [vmem:[%s2 + $0x1c] sm:$0xf]
        %v1872 = vld [vmem:[%s2 + $0x20] sm:$0xf]
        %v1873 = vld [vmem:[%s2 + $0x24] sm:$0xf]
        %v1874 = vld [vmem:[%s2 + $0x28] sm:$0xf]
        %v1875 = vld [vmem:[%s2 + $0x2c] sm:$0xf]
        %v1876 = vld [vmem:[%s2 + $0x30] sm:$0xf]
        %v1877 = vld [vmem:[%s2 + $0x34] sm:$0xf]
        %v1878 = vld [vmem:[%s2 + $0x38] sm:$0xf]
        %v1879 = vld [vmem:[%s2 + $0x3c] sm:$0xf]
        %v1880 = vld [vmem:[%s3] sm:$0xf]
        %v1881 = vld [vmem:[%s3 + $0x4] sm:$0xf]
        %v1882 = vld [vmem:[%s3 + $0x8] sm:$0xf]
        %v1883 = vld [vmem:[%s3 + $0xc] sm:$0xf]
        %v1884 = vld [vmem:[%s3 + $0x10] sm:$0xf]
        %v1885 = vld [vmem:[%s3 + $0x14] sm:$0xf]
        %v1886 = vld [vmem:[%s3 + $0x18] sm:$0xf]
        %v1887 = vld [vmem:[%s3 + $0x1c] sm:$0xf]
        %v1888 = vld [vmem:[%s3 + $0x20] sm:$0xf]
        %v1889 = vld [vmem:[%s3 + $0x24] sm:$0xf]
        %v1890 = vld [vmem:[%s3 + $0x28] sm:$0xf]
        %v1891 = vld [vmem:[%s3 + $0x2c] sm:$0xf]
        %v1892 = vld [vmem:[%s3 + $0x30] sm:$0xf]
        %v1893 = vld [vmem:[%s3 + $0x34] sm:$0xf]
        %v1894 = vld [vmem:[%s3 + $0x38] sm:$0xf]
        %v1895 = vld [vmem:[%s3 + $0x3c] sm:$0xf]
        %v1896 = vld [vmem:[#allocation5] sm:$0xf]
        %v1897 = vld [vmem:[#allocation5 + $0x4] sm:$0xf]
        %v1898 = vld [vmem:[#allocation5 + $0x8] sm:$0xf]
        %v1899 = vld [vmem:[#allocation5 + $0xc] sm:$0xf]
        %v1900 = vld [vmem:[#allocation5 + $0x10] sm:$0xf]
        %v1901 = vld [vmem:[#allocation5 + $0x14] sm:$0xf]
        %v1902 = vld [vmem:[#allocation5 + $0x18] sm:$0xf]
        %v1903 = vld [vmem:[#allocation5 + $0x1c] sm:$0xf]
        %v1904 = vld [vmem:[#allocation7] sm:$0xf]
        %v1905 = vld [vmem:[#allocation7 + $0x4] sm:$0xf]
        %v1906 = vld [vmem:[#allocation7 + $0x8] sm:$0xf]
        %v1907 = vld [vmem:[#allocation7 + $0xc] sm:$0xf]
        %v1908 = vld [vmem:[#allocation7 + $0x10] sm:$0xf]
        %v1909 = vld [vmem:[#allocation7 + $0x14] sm:$0xf]
        %v1910 = vld [vmem:[#allocation7 + $0x18] sm:$0xf]
        %v1911 = vld [vmem:[#allocation7 + $0x1c] sm:$0xf]
        %v1912 = vld [vmem:[#allocation2] sm:$0xff]
        %v1913 = vld [vmem:[#allocation2 + $0x8] sm:$0xff]
        %v1914 = vld [vmem:[#allocation2 + $0x10] sm:$0xff]
        %v1915 = vld [vmem:[#allocation2 + $0x18] sm:$0xff]
        %v1916 = vld [vmem:[#allocation2 + $0x20] sm:$0xff]
        %v1917 = vld [vmem:[#allocation2 + $0x28] sm:$0xff]
        %v1918 = vld [vmem:[#allocation2 + $0x30] sm:$0xff]
        %v1919 = vld [vmem:[#allocation2 + $0x38] sm:$0xff]
        %v1920 = vld [vmem:[#allocation3] sm:$0xff]
        %v1921 = vld [vmem:[#allocation3 + $0x8] sm:$0xff]
        %v1922 = vld [vmem:[#allocation3 + $0x10] sm:$0xff]
        %v1923 = vld [vmem:[#allocation3 + $0x18] sm:$0xff]
        %v1924 = vld [vmem:[#allocation3 + $0x20] sm:$0xff]
        %v1925 = vld [vmem:[#allocation3 + $0x28] sm:$0xff]
        %v1926 = vld [vmem:[#allocation3 + $0x30] sm:$0xff]
        %v1927 = vld [vmem:[#allocation3 + $0x38] sm:$0xff]
        %v1928 = vld [vmem:[#allocation3 + $0x40] sm:$0xff]
        %v1929 = vld [vmem:[#allocation3 + $0x48] sm:$0xff]
        %v1930 = vld [vmem:[#allocation3 + $0x50] sm:$0xff]
        %v1931 = vld [vmem:[#allocation3 + $0x58] sm:$0xff]
        %v1932 = vld [vmem:[#allocation3 + $0x60] sm:$0xff]
        %v1933 = vld [vmem:[#allocation3 + $0x68] sm:$0xff]
        %v1934 = vld [vmem:[#allocation3 + $0x70] sm:$0xff]
        %v1935 = vld [vmem:[#allocation3 + $0x78] sm:$0xff]
        %v1936 = vpack.c.bf16 %v1913, %v1912
        %v1937 = vpack.c.bf16 %v1915, %v1914
        %v1938 = vpack.c.bf16 %v1917, %v1916
        %v1939 = vpack.c.bf16 %v1919, %v1918
        %v1940 = vld [vmem:[%s968] sm:$0xff]
        %v1941 = vld [vmem:[%s968 + $0x8] sm:$0xff]
        %v1942 = vld [vmem:[%s968 + $0x10] sm:$0xf]
        %v1943 = vld [vmem:[%s968 + $0x14] sm:$0xff]
        %v1944 = vld [vmem:[%s968 + $0x1c] sm:$0xff]
        %v1945 = vld [vmem:[%s968 + $0x24] sm:$0xf]
        %v1946 = vld [vmem:[%s968 + $0x28] sm:$0xff]
        %v1947 = vld [vmem:[%s968 + $0x30] sm:$0xff]
        %v1948 = vld [vmem:[%s968 + $0x38] sm:$0xf]
        %v1949 = vld [vmem:[%s968 + $0x3c] sm:$0xff]
        %v1950 = vld [vmem:[%s968 + $0x44] sm:$0xff]
        %v1951 = vld [vmem:[%s968 + $0x4c] sm:$0xf]
        %v1952 = vld [vmem:[%s968 + $0x50] sm:$0xff]
        %v1953 = vld [vmem:[%s968 + $0x58] sm:$0xff]
        %v1954 = vld [vmem:[%s968 + $0x60] sm:$0xf]
        %v1955 = vld [vmem:[%s968 + $0x64] sm:$0xff]
        %v1956 = vld [vmem:[%s968 + $0x6c] sm:$0xff]
        %v1957 = vld [vmem:[%s968 + $0x74] sm:$0xf]
        %v1958 = vld [vmem:[%s968 + $0x78] sm:$0xff]
        %v1959 = vld [vmem:[%s968 + $0x80] sm:$0xff]
        %v1960 = vld [vmem:[%s968 + $0x88] sm:$0xf]
        %v1961 = vld [vmem:[%s968 + $0x8c] sm:$0xff]
        %v1962 = vld [vmem:[%s968 + $0x94] sm:$0xff]
        %v1963 = vld [vmem:[%s968 + $0x9c] sm:$0xf]
        %v1964 = vld [vmem:[%s968 + $0xa0] sm:$0xff]
        %v1965 = vld [vmem:[%s968 + $0xa8] sm:$0xff]
        %v1966 = vld [vmem:[%s968 + $0xb0] sm:$0xf]
        %v1967 = vld [vmem:[%s968 + $0xb4] sm:$0xff]
        %v1968 = vld [vmem:[%s968 + $0xbc] sm:$0xff]
        %v1969 = vld [vmem:[%s968 + $0xc4] sm:$0xf]
        %v1970 = vld [vmem:[%s968 + $0xc8] sm:$0xff]
        %v1971 = vld [vmem:[%s968 + $0xd0] sm:$0xff]
        %v1972 = vld [vmem:[%s968 + $0xd8] sm:$0xf]
        %v1973 = vld [vmem:[%s968 + $0xdc] sm:$0xff]
        %v1974 = vld [vmem:[%s968 + $0xe4] sm:$0xff]
        %v1975 = vld [vmem:[%s968 + $0xec] sm:$0xf]
        %v1976 = vld [vmem:[%s968 + $0xf0] sm:$0xff]
        %v1977 = vld [vmem:[%s968 + $0xf8] sm:$0xff]
        %v1978 = vld [vmem:[%s968 + $0x100] sm:$0xf]
        %v1979 = vld [vmem:[%s968 + $0x104] sm:$0xff]
        %v1980 = vld [vmem:[%s968 + $0x10c] sm:$0xff]
        %v1981 = vld [vmem:[%s968 + $0x114] sm:$0xf]
        %v1982 = vld [vmem:[%s968 + $0x118] sm:$0xff]
        %v1983 = vld [vmem:[%s968 + $0x120] sm:$0xff]
        %v1984 = vld [vmem:[%s968 + $0x128] sm:$0xf]
        %v1985 = vld [vmem:[%s968 + $0x12c] sm:$0xff]
        %v1986 = vld [vmem:[%s968 + $0x134] sm:$0xff]
        %v1987 = vld [vmem:[%s968 + $0x13c] sm:$0xf]
        %v1988 = vld [vmem:[%s977] sm:$0x1f]
        %v1990 = vlaneseq
        %v1991 = vshrl.u32 %v1990, 7
        %v1992 = vsub.s32 0, %v1991
        %v1993 = vrot.slane %v1988, %v1992
        %v1994 = vlaneseq
        %v1995 = vshrl.u32 %v1994, 7
        %v1996 = vsub.s32 1, %v1995
        %v1997 = vrot.slane %v1988, %v1996
        %v1998 = vlaneseq
        %v1999 = vshrl.u32 %v1998, 7
        %v2000 = vsub.s32 2, %v1999
        %v2001 = vrot.slane %v1988, %v2000
        %v2002 = vlaneseq
        %v2003 = vshrl.u32 %v2002, 7
        %v2004 = vsub.s32 3, %v2003
        %v2005 = vrot.slane %v1988, %v2004
        %v2006 = vlaneseq
        %v2007 = vshrl.u32 %v2006, 7
        %v2008 = vsub.s32 4, %v2007
        %v2009 = vrot.slane %v1988, %v2008
        %v2063 = vunpack.c.l.b16 %v1940
        %v2064 = vunpack.c.h.b16 %v1940
        %v2065 = vunpack.c.l.b16 %v1941
        %v2066 = vunpack.c.h.b16 %v1941
        %v2067 = vunpack.c.l.b16 %v1942
        %v2068 = vunpack.c.l.b16 %v1943
        %v2069 = vunpack.c.h.b16 %v1943
        %v2070 = vunpack.c.l.b16 %v1944
        %v2071 = vunpack.c.h.b16 %v1944
        %v2072 = vunpack.c.l.b16 %v1945
        %v2073 = vunpack.c.l.b16 %v1946
        %v2074 = vunpack.c.h.b16 %v1946
        %v2075 = vunpack.c.l.b16 %v1947
        %v2076 = vunpack.c.h.b16 %v1947
        %v2077 = vunpack.c.l.b16 %v1948
        %v2078 = vunpack.c.l.b16 %v1949
        %v2079 = vunpack.c.h.b16 %v1949
        %v2080 = vunpack.c.l.b16 %v1950
        %v2081 = vunpack.c.h.b16 %v1950
        %v2082 = vunpack.c.l.b16 %v1951
        %v2083 = vunpack.c.l.b16 %v1952
        %v2084 = vunpack.c.h.b16 %v1952
        %v2085 = vunpack.c.l.b16 %v1953
        %v2086 = vunpack.c.h.b16 %v1953
        %v2087 = vunpack.c.l.b16 %v1954
        %v2088 = vunpack.c.l.b16 %v1955
        %v2089 = vunpack.c.h.b16 %v1955
        %v2090 = vunpack.c.l.b16 %v1956
        %v2091 = vunpack.c.h.b16 %v1956
        %v2092 = vunpack.c.l.b16 %v1957
        %v2093 = vunpack.c.l.b16 %v1958
        %v2094 = vunpack.c.h.b16 %v1958
        %v2095 = vunpack.c.l.b16 %v1959
        %v2096 = vunpack.c.h.b16 %v1959
        %v2097 = vunpack.c.l.b16 %v1960
        %v2098 = vunpack.c.l.b16 %v1961
        %v2099 = vunpack.c.h.b16 %v1961
        %v2100 = vunpack.c.l.b16 %v1962
        %v2101 = vunpack.c.h.b16 %v1962
        %v2102 = vunpack.c.l.b16 %v1963
        %v2103 = vunpack.c.l.b16 %v1964
        %v2104 = vunpack.c.h.b16 %v1964
        %v2105 = vunpack.c.l.b16 %v1965
        %v2106 = vunpack.c.h.b16 %v1965
        %v2107 = vunpack.c.l.b16 %v1966
        %v2108 = vunpack.c.l.b16 %v1967
        %v2109 = vunpack.c.h.b16 %v1967
        %v2110 = vunpack.c.l.b16 %v1968
        %v2111 = vunpack.c.h.b16 %v1968
        %v2112 = vunpack.c.l.b16 %v1969
        %v2113 = vunpack.c.l.b16 %v1970
        %v2114 = vunpack.c.h.b16 %v1970
        %v2115 = vunpack.c.l.b16 %v1971
        %v2116 = vunpack.c.h.b16 %v1971
        %v2117 = vunpack.c.l.b16 %v1972
        %v2118 = vunpack.c.l.b16 %v1973
        %v2119 = vunpack.c.h.b16 %v1973
        %v2120 = vunpack.c.l.b16 %v1974
        %v2121 = vunpack.c.h.b16 %v1974
        %v2122 = vunpack.c.l.b16 %v1975
        %v2123 = vunpack.c.l.b16 %v1976
        %v2124 = vunpack.c.h.b16 %v1976
        %v2125 = vunpack.c.l.b16 %v1977
        %v2126 = vunpack.c.h.b16 %v1977
        %v2127 = vunpack.c.l.b16 %v1978
        %v2128 = vunpack.c.l.b16 %v1979
        %v2129 = vunpack.c.h.b16 %v1979
        %v2130 = vunpack.c.l.b16 %v1980
        %v2131 = vunpack.c.h.b16 %v1980
        %v2132 = vunpack.c.l.b16 %v1981
        %v2133 = vunpack.c.l.b16 %v1982
        %v2134 = vunpack.c.h.b16 %v1982
        %v2135 = vunpack.c.l.b16 %v1983
        %v2136 = vunpack.c.h.b16 %v1983
        %v2137 = vunpack.c.l.b16 %v1984
        %v2138 = vunpack.c.l.b16 %v1985
        %v2139 = vunpack.c.h.b16 %v1985
        %v2140 = vunpack.c.l.b16 %v1986
        %v2141 = vunpack.c.h.b16 %v1986
        %v2142 = vunpack.c.l.b16 %v1987
        %v2143 = vpack.c.b16 %v2068, %v2063
        %v2144 = vpack.c.b16 %v2069, %v2064
        %v2145 = vpack.c.b16 %v2070, %v2065
        %v2146 = vpack.c.b16 %v2071, %v2066
        %v2147 = vpack.c.b16 %v2072, %v2067
        %v2148 = vpack.c.b16 %v2078, %v2073
        %v2149 = vpack.c.b16 %v2079, %v2074
        %v2150 = vpack.c.b16 %v2080, %v2075
        %v2151 = vpack.c.b16 %v2081, %v2076
        %v2152 = vpack.c.b16 %v2082, %v2077
        %v2153 = vpack.c.b16 %v2088, %v2083
        %v2154 = vpack.c.b16 %v2089, %v2084
        %v2155 = vpack.c.b16 %v2090, %v2085
        %v2156 = vpack.c.b16 %v2091, %v2086
        %v2157 = vpack.c.b16 %v2092, %v2087
        %v2158 = vpack.c.b16 %v2098, %v2093
        %v2159 = vpack.c.b16 %v2099, %v2094
        %v2160 = vpack.c.b16 %v2100, %v2095
        %v2161 = vpack.c.b16 %v2101, %v2096
        %v2162 = vpack.c.b16 %v2102, %v2097
        %v2163 = vpack.c.b16 %v2108, %v2103
        %v2164 = vpack.c.b16 %v2109, %v2104
        %v2165 = vpack.c.b16 %v2110, %v2105
        %v2166 = vpack.c.b16 %v2111, %v2106
        %v2167 = vpack.c.b16 %v2112, %v2107
        %v2168 = vpack.c.b16 %v2118, %v2113
        %v2169 = vpack.c.b16 %v2119, %v2114
        %v2170 = vpack.c.b16 %v2120, %v2115
        %v2171 = vpack.c.b16 %v2121, %v2116
        %v2172 = vpack.c.b16 %v2122, %v2117
        %v2173 = vpack.c.b16 %v2128, %v2123
        %v2174 = vpack.c.b16 %v2129, %v2124
        %v2175 = vpack.c.b16 %v2130, %v2125
        %v2176 = vpack.c.b16 %v2131, %v2126
        %v2177 = vpack.c.b16 %v2132, %v2127
        %v2178 = vpack.c.b16 %v2138, %v2133
        %v2179 = vpack.c.b16 %v2139, %v2134
        %v2180 = vpack.c.b16 %v2140, %v2135
        %v2181 = vpack.c.b16 %v2141, %v2136
        %v2182 = vpack.c.b16 %v2142, %v2137
        %2223 = vmatprep.subr.bf16.mxu0 %v2144
        %2224 = vmatpush1.bf16.msra.mxu0 %v2143
        %2225 = vmatprep.subr.bf16.mxu0 %v2149
        %2226 = vmatpush1.bf16.msra.mxu0 %v2148
        %2227 = vmatprep.subr.bf16.mxu0 %v2154
        %2228 = vmatpush1.bf16.msra.mxu0 %v2153
        %2229 = vmatprep.subr.bf16.mxu0 %v2159
        %2230 = vmatpush1.bf16.msra.mxu0 %v2158
        %2231 = vmatprep.subr.bf16.mxu0 %v2164
        %2232 = vmatpush1.bf16.msra.mxu0 %v2163
        %2233 = vmatprep.subr.bf16.mxu0 %v2169
        %2234 = vmatpush1.bf16.msra.mxu0 %v2168
        %2235 = vmatprep.subr.bf16.mxu0 %v2174
        %2236 = vmatpush1.bf16.msra.mxu0 %v2173
        %2237 = vmatprep.subr.bf16.mxu0 %v2179
        %2238 = vmatpush1.bf16.msra.mxu0 %v2178
        %2239 = vmatprep.subr.bf16.mxu0 0
        %2240 = vmatpush1.bf16.msra.mxu0 0
        %2241 = vmatprep.subr.bf16.mxu0 0
        %2242 = vmatpush1.bf16.msra.mxu0 0
        %2243 = vmatprep.subr.bf16.mxu0 0
        %2244 = vmatpush1.bf16.msra.mxu0 0
        %2245 = vmatprep.subr.bf16.mxu0 0
        %2246 = vmatpush1.bf16.msra.mxu0 0
        %2247 = vmatprep.subr.bf16.mxu0 0
        %2248 = vmatpush1.bf16.msra.mxu0 0
        %2249 = vmatprep.subr.bf16.mxu0 0
        %2250 = vmatpush1.bf16.msra.mxu0 0
        %2251 = vmatprep.subr.bf16.mxu0 0
        %2252 = vmatpush1.bf16.msra.mxu0 0
        %2253 = vmatprep.subr.bf16.mxu0 0
        %2254 = vmatpush1.bf16.msra.mxu0 0
        %2255 = vmatprep.mubr.bf16.mxu0 0
        %2256 = vmatmul.mubr.bf16.gmra.mrb[0].mxu0 %v1936
        %v2257 = vpop.f32.mrb[0].mxu0
        %v2258 = vadd.f32 %v1993, %v2257
        %v2259 = vpop.f32.mrb[0].mxu0
        %v2260 = vadd.f32 %v1997, %v2259
        %v2261 = vpop.f32.mrb[0].mxu0
        %v2262 = vadd.f32 %v1993, %v2261
        %v2263 = vpop.f32.mrb[0].mxu0
        %v2264 = vadd.f32 %v1997, %v2263
        %2265 = vmatprep.mubr.bf16.mxu0 0
        %2266 = vmatmul.mubr.bf16.gmra.mrb[0].mxu0 %v1937
        %v2267 = vpop.f32.mrb[0].mxu0
        %v2268 = vadd.f32 %v1993, %v2267
        %v2269 = vpop.f32.mrb[0].mxu0
        %v2270 = vadd.f32 %v1997, %v2269
        %v2271 = vpop.f32.mrb[0].mxu0
        %v2272 = vadd.f32 %v1993, %v2271
        %v2273 = vpop.f32.mrb[0].mxu0
        %v2274 = vadd.f32 %v1997, %v2273
        %2275 = vmatprep.mubr.bf16.mxu0 0
        %2276 = vmatmul.mubr.bf16.gmra.mrb[0].mxu0 %v1938
        %v2277 = vpop.f32.mrb[0].mxu0
        %v2278 = vadd.f32 %v1993, %v2277
        %v2279 = vpop.f32.mrb[0].mxu0
        %v2280 = vadd.f32 %v1997, %v2279
        %v2281 = vpop.f32.mrb[0].mxu0
        %v2282 = vadd.f32 %v1993, %v2281
        %v2283 = vpop.f32.mrb[0].mxu0
        %v2284 = vadd.f32 %v1997, %v2283
        %2285 = vmatprep.mubr.bf16.mxu0 0
        %2286 = vmatmul.mubr.bf16.gmra.mrb[0].mxu0 %v1939
        %v2287 = vpop.f32.mrb[0].mxu0
        %v2288 = vadd.f32 %v1993, %v2287
        %v2289 = vpop.f32.mrb[0].mxu0
        %v2290 = vadd.f32 %v1997, %v2289
        %v2291 = vpop.f32.mrb[0].mxu0
        %v2292 = vadd.f32 %v1993, %v2291
        %v2293 = vpop.f32.mrb[0].mxu0
        %v2294 = vadd.f32 %v1997, %v2293
        %2295 = vdwg.mxu0
        %2296 = vmatprep.subr.bf16.mxu0 %v2146
        %2297 = vmatpush1.bf16.msra.mxu0 %v2145
        %2298 = vmatprep.subr.bf16.mxu0 %v2151
        %2299 = vmatpush1.bf16.msra.mxu0 %v2150
        %2300 = vmatprep.subr.bf16.mxu0 %v2156
        %2301 = vmatpush1.bf16.msra.mxu0 %v2155
        %2302 = vmatprep.subr.bf16.mxu0 %v2161
        %2303 = vmatpush1.bf16.msra.mxu0 %v2160
        %2304 = vmatprep.subr.bf16.mxu0 %v2166
        %2305 = vmatpush1.bf16.msra.mxu0 %v2165
        %2306 = vmatprep.subr.bf16.mxu0 %v2171
        %2307 = vmatpush1.bf16.msra.mxu0 %v2170
        %2308 = vmatprep.subr.bf16.mxu0 %v2176
        %2309 = vmatpush1.bf16.msra.mxu0 %v2175
        %2310 = vmatprep.subr.bf16.mxu0 %v2181
        %2311 = vmatpush1.bf16.msra.mxu0 %v2180
        %2312 = vmatprep.subr.bf16.mxu0 0
        %2313 = vmatpush1.bf16.msra.mxu0 0
        %2314 = vmatprep.subr.bf16.mxu0 0
        %2315 = vmatpush1.bf16.msra.mxu0 0
        %2316 = vmatprep.subr.bf16.mxu0 0
        %2317 = vmatpush1.bf16.msra.mxu0 0
        %2318 = vmatprep.subr.bf16.mxu0 0
        %2319 = vmatpush1.bf16.msra.mxu0 0
        %2320 = vmatprep.subr.bf16.mxu0 0
        %2321 = vmatpush1.bf16.msra.mxu0 0
        %2322 = vmatprep.subr.bf16.mxu0 0
        %2323 = vmatpush1.bf16.msra.mxu0 0
        %2324 = vmatprep.subr.bf16.mxu0 0
        %2325 = vmatpush1.bf16.msra.mxu0 0
        %2326 = vmatprep.subr.bf16.mxu0 0
        %2327 = vmatpush1.bf16.msra.mxu0 0
        %2328 = vmatprep.mubr.bf16.mxu0 0
        %2329 = vmatmul.mubr.bf16.gmra.mrb[0].mxu0 %v1936
        %v2330 = vpop.f32.mrb[0].mxu0
        %v2331 = vadd.f32 %v2001, %v2330
        %v2332 = vpop.f32.mrb[0].mxu0
        %v2333 = vadd.f32 %v2005, %v2332
        %v2334 = vpop.f32.mrb[0].mxu0
        %v2335 = vadd.f32 %v2001, %v2334
        %v2336 = vpop.f32.mrb[0].mxu0
        %v2337 = vadd.f32 %v2005, %v2336
        %2338 = vmatprep.mubr.bf16.mxu0 0
        %2339 = vmatmul.mubr.bf16.gmra.mrb[0].mxu0 %v1937
        %v2340 = vpop.f32.mrb[0].mxu0
        %v2341 = vadd.f32 %v2001, %v2340
        %v2342 = vpop.f32.mrb[0].mxu0
        %v2343 = vadd.f32 %v2005, %v2342
        %v2344 = vpop.f32.mrb[0].mxu0
        %v2345 = vadd.f32 %v2001, %v2344
        %v2346 = vpop.f32.mrb[0].mxu0
        %v2347 = vadd.f32 %v2005, %v2346
        %2348 = vmatprep.mubr.bf16.mxu0 0
        %2349 = vmatmul.mubr.bf16.gmra.mrb[0].mxu0 %v1938
        %v2350 = vpop.f32.mrb[0].mxu0
        %v2351 = vadd.f32 %v2001, %v2350
        %v2352 = vpop.f32.mrb[0].mxu0
        %v2353 = vadd.f32 %v2005, %v2352
        %v2354 = vpop.f32.mrb[0].mxu0
        %v2355 = vadd.f32 %v2001, %v2354
        %v2356 = vpop.f32.mrb[0].mxu0
        %v2357 = vadd.f32 %v2005, %v2356
        %2358 = vmatprep.mubr.bf16.mxu0 0
        %2359 = vmatmul.mubr.bf16.gmra.mrb[0].mxu0 %v1939
        %v2360 = vpop.f32.mrb[0].mxu0
        %v2361 = vadd.f32 %v2001, %v2360
        %v2362 = vpop.f32.mrb[0].mxu0
        %v2363 = vadd.f32 %v2005, %v2362
        %v2364 = vpop.f32.mrb[0].mxu0
        %v2365 = vadd.f32 %v2001, %v2364
        %v2366 = vpop.f32.mrb[0].mxu0
        %v2367 = vadd.f32 %v2005, %v2366
        %2368 = vdwg.mxu0
        %2369 = vmatprep.subr.bf16.mxu0 0
        %2370 = vmatpush1.bf16.msra.mxu0 %v2147
        %2371 = vmatprep.subr.bf16.mxu0 0
        %2372 = vmatpush1.bf16.msra.mxu0 %v2152
        %2373 = vmatprep.subr.bf16.mxu0 0
        %2374 = vmatpush1.bf16.msra.mxu0 %v2157
        %2375 = vmatprep.subr.bf16.mxu0 0
        %2376 = vmatpush1.bf16.msra.mxu0 %v2162
        %2377 = vmatprep.subr.bf16.mxu0 0
        %2378 = vmatpush1.bf16.msra.mxu0 %v2167
        %2379 = vmatprep.subr.bf16.mxu0 0
        %2380 = vmatpush1.bf16.msra.mxu0 %v2172
        %2381 = vmatprep.subr.bf16.mxu0 0
        %2382 = vmatpush1.bf16.msra.mxu0 %v2177
        %2383 = vmatprep.subr.bf16.mxu0 0
        %2384 = vmatpush1.bf16.msra.mxu0 %v2182
        %2385 = vmatprep.subr.bf16.mxu0 0
        %2386 = vmatpush1.bf16.msra.mxu0 0
        %2387 = vmatprep.subr.bf16.mxu0 0
        %2388 = vmatpush1.bf16.msra.mxu0 0
        %2389 = vmatprep.subr.bf16.mxu0 0
        %2390 = vmatpush1.bf16.msra.mxu0 0
        %2391 = vmatprep.subr.bf16.mxu0 0
        %2392 = vmatpush1.bf16.msra.mxu0 0
        %2393 = vmatprep.subr.bf16.mxu0 0
        %2394 = vmatpush1.bf16.msra.mxu0 0
        %2395 = vmatprep.subr.bf16.mxu0 0
        %2396 = vmatpush1.bf16.msra.mxu0 0
        %2397 = vmatprep.subr.bf16.mxu0 0
        %2398 = vmatpush1.bf16.msra.mxu0 0
        %2399 = vmatprep.subr.bf16.mxu0 0
        %2400 = vmatpush1.bf16.msra.mxu0 0
        %2401 = vmatprep.mubr.bf16.mxu0 0
        %2402 = vmatmul.mubr.bf16.gmra.mrb[0].mxu0 %v1936
        %v2403 = vpop.f32.mrb[0].mxu0
        %v2404 = vadd.f32 %v2009, %v2403
        %v2405 = vpop.f32.mrb[0].mxu0
        %v2406 = vpop.f32.mrb[0].mxu0
        %v2407 = vadd.f32 %v2009, %v2406
        %v2408 = vpop.f32.mrb[0].mxu0
        %2409 = vmatprep.mubr.bf16.mxu0 0
        %2410 = vmatmul.mubr.bf16.gmra.mrb[0].mxu0 %v1937
        %v2411 = vpop.f32.mrb[0].mxu0
        %v2412 = vadd.f32 %v2009, %v2411
        %v2413 = vpop.f32.mrb[0].mxu0
        %v2414 = vpop.f32.mrb[0].mxu0
        %v2415 = vadd.f32 %v2009, %v2414
        %v2416 = vpop.f32.mrb[0].mxu0
        %2417 = vmatprep.mubr.bf16.mxu0 0
        %2418 = vmatmul.mubr.bf16.gmra.mrb[0].mxu0 %v1938
        %v2419 = vpop.f32.mrb[0].mxu0
        %v2420 = vadd.f32 %v2009, %v2419
        %v2421 = vpop.f32.mrb[0].mxu0
        %v2422 = vpop.f32.mrb[0].mxu0
        %v2423 = vadd.f32 %v2009, %v2422
        %v2424 = vpop.f32.mrb[0].mxu0
        %2425 = vmatprep.mubr.bf16.mxu0 0
        %2426 = vmatmul.mubr.bf16.gmra.mrb[0].mxu0 %v1939
        %v2427 = vpop.f32.mrb[0].mxu0
        %v2428 = vadd.f32 %v2009, %v2427
        %v2429 = vpop.f32.mrb[0].mxu0
        %v2430 = vpop.f32.mrb[0].mxu0
        %v2431 = vadd.f32 %v2009, %v2430
        %v2432 = vpop.f32.mrb[0].mxu0
        %2433 = vdwg.mxu0
        %v2434 = vpack.c.bf16 %v2264, %v2260
        %v2435 = vpack.c.bf16 %v2335, %v2331
        %v2436 = vpack.c.bf16 %v2274, %v2270
        %v2437 = vpack.c.bf16 %v2345, %v2341
        %v2438 = vpack.c.bf16 %v2284, %v2280
        %v2439 = vpack.c.bf16 %v2355, %v2351
        %v2440 = vpack.c.bf16 %v2294, %v2290
        %v2441 = vpack.c.bf16 %v2365, %v2361
        %v2442 = vpack.c.bf16 %v2337, %v2333
        %v2443 = vpack.c.bf16 %v2407, %v2404
        %v2444 = vpack.c.bf16 %v2347, %v2343
        %v2445 = vpack.c.bf16 %v2415, %v2412
        %v2446 = vpack.c.bf16 %v2357, %v2353
        %v2447 = vpack.c.bf16 %v2423, %v2420
        %v2448 = vpack.c.bf16 %v2367, %v2363
        %v2449 = vpack.c.bf16 %v2431, %v2428
        %v2466 = vunpack.c.l.b16 %v1864
        %v2467 = vunpack.c.l.b16 %v1865
        %v2468 = vunpack.c.l.b16 %v1866
        %v2469 = vunpack.c.l.b16 %v1867
        %v2470 = vunpack.c.l.b16 %v1868
        %v2471 = vunpack.c.l.b16 %v1869
        %v2472 = vunpack.c.l.b16 %v1870
        %v2473 = vunpack.c.l.b16 %v1871
        %v2474 = vunpack.c.l.b16 %v1872
        %v2475 = vunpack.c.l.b16 %v1873
        %v2476 = vunpack.c.l.b16 %v1874
        %v2477 = vunpack.c.l.b16 %v1875
        %v2478 = vunpack.c.l.b16 %v1876
        %v2479 = vunpack.c.l.b16 %v1877
        %v2480 = vunpack.c.l.b16 %v1878
        %v2481 = vunpack.c.l.b16 %v1879
        %v2482 = vpack.c.b16 %v2467, %v2466
        %v2483 = vpack.c.b16 %v2469, %v2468
        %v2484 = vpack.c.b16 %v2471, %v2470
        %v2485 = vpack.c.b16 %v2473, %v2472
        %v2486 = vpack.c.b16 %v2475, %v2474
        %v2487 = vpack.c.b16 %v2477, %v2476
        %v2488 = vpack.c.b16 %v2479, %v2478
        %v2489 = vpack.c.b16 %v2481, %v2480
        %vm2490 = vcmask 523264
        %v2492 = vsel %vm2490, %v2482, 0
        %v2495 = vsel %vm2490, %v2483, 0
        %v2498 = vsel %vm2490, %v2484, 0
        %v2501 = vsel %vm2490, %v2485, 0
        %v2504 = vsel %vm2490, %v2486, 0
        %v2507 = vsel %vm2490, %v2487, 0
        %v2510 = vsel %vm2490, %v2488, 0
        %v2513 = vsel %vm2490, %v2489, 0
        %2515 = vmatprep.subr.bf16.mxu0 %v2435
        %2516 = vmatpush1.bf16.msra.mxu0 %v2434
        %2517 = vmatprep.subr.bf16.mxu0 %v2437
        %2518 = vmatpush1.bf16.msra.mxu0 %v2436
        %2519 = vmatprep.subr.bf16.mxu0 %v2439
        %2520 = vmatpush1.bf16.msra.mxu0 %v2438
        %2521 = vmatprep.subr.bf16.mxu0 %v2441
        %2522 = vmatpush1.bf16.msra.mxu0 %v2440
        %2523 = vmatprep.subr.bf16.mxu0 0
        %2524 = vmatpush1.bf16.msra.mxu0 0
        %2525 = vmatprep.subr.bf16.mxu0 0
        %2526 = vmatpush1.bf16.msra.mxu0 0
        %2527 = vmatprep.subr.bf16.mxu0 0
        %2528 = vmatpush1.bf16.msra.mxu0 0
        %2529 = vmatprep.subr.bf16.mxu0 0
        %2530 = vmatpush1.bf16.msra.mxu0 0
        %2531 = vmatprep.subr.bf16.mxu0 0
        %2532 = vmatpush1.bf16.msra.mxu0 0
        %2533 = vmatprep.subr.bf16.mxu0 0
        %2534 = vmatpush1.bf16.msra.mxu0 0
        %2535 = vmatprep.subr.bf16.mxu0 0
        %2536 = vmatpush1.bf16.msra.mxu0 0
        %2537 = vmatprep.subr.bf16.mxu0 0
        %2538 = vmatpush1.bf16.msra.mxu0 0
        %2539 = vmatprep.subr.bf16.mxu0 0
        %2540 = vmatpush1.bf16.msra.mxu0 0
        %2541 = vmatprep.subr.bf16.mxu0 0
        %2542 = vmatpush1.bf16.msra.mxu0 0
        %2543 = vmatprep.subr.bf16.mxu0 0
        %2544 = vmatpush1.bf16.msra.mxu0 0
        %2545 = vmatprep.subr.bf16.mxu0 0
        %2546 = vmatpush1.bf16.msra.mxu0 0
        %2547 = vmatprep.mubr.bf16.mxu0 0
        %2548 = vmatmul.mubr.bf16.gmra.mrb[0].mxu0 %v2492
        %v2549 = vpop.f32.mrb[0].mxu0
        %v2550 = vadd.f32 0.0, %v2549
        %v2551 = vpop.f32.mrb[0].mxu0
        %v2552 = vadd.f32 0.0, %v2551
        %v2553 = vpop.f32.mrb[0].mxu0
        %v2554 = vadd.f32 0.0, %v2553
        %v2555 = vpop.f32.mrb[0].mxu0
        %v2556 = vadd.f32 0.0, %v2555
        %2557 = vmatprep.mubr.bf16.mxu0 0
        %2558 = vmatmul.mubr.bf16.gmra.mrb[0].mxu0 %v2495
        %v2559 = vpop.f32.mrb[0].mxu0
        %v2560 = vadd.f32 0.0, %v2559
        %v2561 = vpop.f32.mrb[0].mxu0
        %v2562 = vadd.f32 0.0, %v2561
        %v2563 = vpop.f32.mrb[0].mxu0
        %v2564 = vadd.f32 0.0, %v2563
        %v2565 = vpop.f32.mrb[0].mxu0
        %v2566 = vadd.f32 0.0, %v2565
        %2567 = vmatprep.mubr.bf16.mxu0 0
        %2568 = vmatmul.mubr.bf16.gmra.mrb[0].mxu0 %v2498
        %v2569 = vpop.f32.mrb[0].mxu0
        %v2570 = vadd.f32 0.0, %v2569
        %v2571 = vpop.f32.mrb[0].mxu0
        %v2572 = vadd.f32 0.0, %v2571
        %v2573 = vpop.f32.mrb[0].mxu0
        %v2574 = vadd.f32 0.0, %v2573
        %v2575 = vpop.f32.mrb[0].mxu0
        %v2576 = vadd.f32 0.0, %v2575
        %2577 = vmatprep.mubr.bf16.mxu0 0
        %2578 = vmatmul.mubr.bf16.gmra.mrb[0].mxu0 %v2501
        %v2579 = vpop.f32.mrb[0].mxu0
        %v2580 = vadd.f32 0.0, %v2579
        %v2581 = vpop.f32.mrb[0].mxu0
        %v2582 = vadd.f32 0.0, %v2581
        %v2583 = vpop.f32.mrb[0].mxu0
        %v2584 = vadd.f32 0.0, %v2583
        %v2585 = vpop.f32.mrb[0].mxu0
        %v2586 = vadd.f32 0.0, %v2585
        %2587 = vmatprep.mubr.bf16.mxu0 0
        %2588 = vmatmul.mubr.bf16.gmra.mrb[0].mxu0 %v2504
        %v2589 = vpop.f32.mrb[0].mxu0
        %v2590 = vadd.f32 0.0, %v2589
        %v2591 = vpop.f32.mrb[0].mxu0
        %v2592 = vadd.f32 0.0, %v2591
        %v2593 = vpop.f32.mrb[0].mxu0
        %v2594 = vadd.f32 0.0, %v2593
        %v2595 = vpop.f32.mrb[0].mxu0
        %v2596 = vadd.f32 0.0, %v2595
        %2597 = vmatprep.mubr.bf16.mxu0 0
        %2598 = vmatmul.mubr.bf16.gmra.mrb[0].mxu0 %v2507
        %v2599 = vpop.f32.mrb[0].mxu0
        %v2600 = vadd.f32 0.0, %v2599
        %v2601 = vpop.f32.mrb[0].mxu0
        %v2602 = vadd.f32 0.0, %v2601
        %v2603 = vpop.f32.mrb[0].mxu0
        %v2604 = vadd.f32 0.0, %v2603
        %v2605 = vpop.f32.mrb[0].mxu0
        %v2606 = vadd.f32 0.0, %v2605
        %2607 = vmatprep.mubr.bf16.mxu0 0
        %2608 = vmatmul.mubr.bf16.gmra.mrb[0].mxu0 %v2510
        %v2609 = vpop.f32.mrb[0].mxu0
        %v2610 = vadd.f32 0.0, %v2609
        %v2611 = vpop.f32.mrb[0].mxu0
        %v2612 = vadd.f32 0.0, %v2611
        %v2613 = vpop.f32.mrb[0].mxu0
        %v2614 = vadd.f32 0.0, %v2613
        %v2615 = vpop.f32.mrb[0].mxu0
        %v2616 = vadd.f32 0.0, %v2615
        %2617 = vmatprep.mubr.bf16.mxu0 0
        %2618 = vmatmul.mubr.bf16.gmra.mrb[0].mxu0 %v2513
        %v2619 = vpop.f32.mrb[0].mxu0
        %v2620 = vadd.f32 0.0, %v2619
        %v2621 = vpop.f32.mrb[0].mxu0
        %v2622 = vadd.f32 0.0, %v2621
        %v2623 = vpop.f32.mrb[0].mxu0
        %v2624 = vadd.f32 0.0, %v2623
        %v2625 = vpop.f32.mrb[0].mxu0
        %v2626 = vadd.f32 0.0, %v2625
        %2627 = vdwg.mxu0
        %v2644 = vunpack.c.l.b16 %v1880
        %v2645 = vunpack.c.l.b16 %v1881
        %v2646 = vunpack.c.l.b16 %v1882
        %v2647 = vunpack.c.l.b16 %v1883
        %v2648 = vunpack.c.l.b16 %v1884
        %v2649 = vunpack.c.l.b16 %v1885
        %v2650 = vunpack.c.l.b16 %v1886
        %v2651 = vunpack.c.l.b16 %v1887
        %v2652 = vunpack.c.l.b16 %v1888
        %v2653 = vunpack.c.l.b16 %v1889
        %v2654 = vunpack.c.l.b16 %v1890
        %v2655 = vunpack.c.l.b16 %v1891
        %v2656 = vunpack.c.l.b16 %v1892
        %v2657 = vunpack.c.l.b16 %v1893
        %v2658 = vunpack.c.l.b16 %v1894
        %v2659 = vunpack.c.l.b16 %v1895
        %v2660 = vpack.c.b16 %v2645, %v2644
        %v2661 = vpack.c.b16 %v2647, %v2646
        %v2662 = vpack.c.b16 %v2649, %v2648
        %v2663 = vpack.c.b16 %v2651, %v2650
        %v2664 = vpack.c.b16 %v2653, %v2652
        %v2665 = vpack.c.b16 %v2655, %v2654
        %v2666 = vpack.c.b16 %v2657, %v2656
        %v2667 = vpack.c.b16 %v2659, %v2658
        %v2669 = vsel %vm2490, %v2660, 0
        %v2672 = vsel %vm2490, %v2661, 0
        %v2675 = vsel %vm2490, %v2662, 0
        %v2678 = vsel %vm2490, %v2663, 0
        %v2681 = vsel %vm2490, %v2664, 0
        %v2684 = vsel %vm2490, %v2665, 0
        %v2687 = vsel %vm2490, %v2666, 0
        %v2690 = vsel %vm2490, %v2667, 0
        %2692 = vmatprep.subr.bf16.mxu0 %v2443
        %2693 = vmatpush1.bf16.msra.mxu0 %v2442
        %2694 = vmatprep.subr.bf16.mxu0 %v2445
        %2695 = vmatpush1.bf16.msra.mxu0 %v2444
        %2696 = vmatprep.subr.bf16.mxu0 %v2447
        %2697 = vmatpush1.bf16.msra.mxu0 %v2446
        %2698 = vmatprep.subr.bf16.mxu0 %v2449
        %2699 = vmatpush1.bf16.msra.mxu0 %v2448
        %2700 = vmatprep.subr.bf16.mxu0 0
        %2701 = vmatpush1.bf16.msra.mxu0 0
        %2702 = vmatprep.subr.bf16.mxu0 0
        %2703 = vmatpush1.bf16.msra.mxu0 0
        %2704 = vmatprep.subr.bf16.mxu0 0
        %2705 = vmatpush1.bf16.msra.mxu0 0
        %2706 = vmatprep.subr.bf16.mxu0 0
        %2707 = vmatpush1.bf16.msra.mxu0 0
        %2708 = vmatprep.subr.bf16.mxu0 0
        %2709 = vmatpush1.bf16.msra.mxu0 0
        %2710 = vmatprep.subr.bf16.mxu0 0
        %2711 = vmatpush1.bf16.msra.mxu0 0
        %2712 = vmatprep.subr.bf16.mxu0 0
        %2713 = vmatpush1.bf16.msra.mxu0 0
        %2714 = vmatprep.subr.bf16.mxu0 0
        %2715 = vmatpush1.bf16.msra.mxu0 0
        %2716 = vmatprep.subr.bf16.mxu0 0
        %2717 = vmatpush1.bf16.msra.mxu0 0
        %2718 = vmatprep.subr.bf16.mxu0 0
        %2719 = vmatpush1.bf16.msra.mxu0 0
        %2720 = vmatprep.subr.bf16.mxu0 0
        %2721 = vmatpush1.bf16.msra.mxu0 0
        %2722 = vmatprep.subr.bf16.mxu0 0
        %2723 = vmatpush1.bf16.msra.mxu0 0
        %2724 = vmatprep.mubr.bf16.mxu0 0
        %2725 = vmatmul.mubr.bf16.gmra.mrb[0].mxu0 %v2669
        %v2726 = vpop.f32.mrb[0].mxu0
        %v2727 = vadd.f32 0.0, %v2726
        %v2728 = vpop.f32.mrb[0].mxu0
        %v2729 = vadd.f32 0.0, %v2728
        %v2730 = vpop.f32.mrb[0].mxu0
        %v2731 = vadd.f32 0.0, %v2730
        %v2732 = vpop.f32.mrb[0].mxu0
        %v2733 = vadd.f32 0.0, %v2732
        %2734 = vmatprep.mubr.bf16.mxu0 0
        %2735 = vmatmul.mubr.bf16.gmra.mrb[0].mxu0 %v2672
        %v2736 = vpop.f32.mrb[0].mxu0
        %v2737 = vadd.f32 0.0, %v2736
        %v2738 = vpop.f32.mrb[0].mxu0
        %v2739 = vadd.f32 0.0, %v2738
        %v2740 = vpop.f32.mrb[0].mxu0
        %v2741 = vadd.f32 0.0, %v2740
        %v2742 = vpop.f32.mrb[0].mxu0
        %v2743 = vadd.f32 0.0, %v2742
        %2744 = vmatprep.mubr.bf16.mxu0 0
        %2745 = vmatmul.mubr.bf16.gmra.mrb[0].mxu0 %v2675
        %v2746 = vpop.f32.mrb[0].mxu0
        %v2747 = vadd.f32 0.0, %v2746
        %v2748 = vpop.f32.mrb[0].mxu0
        %v2749 = vadd.f32 0.0, %v2748
        %v2750 = vpop.f32.mrb[0].mxu0
        %v2751 = vadd.f32 0.0, %v2750
        %v2752 = vpop.f32.mrb[0].mxu0
        %v2753 = vadd.f32 0.0, %v2752
        %2754 = vmatprep.mubr.bf16.mxu0 0
        %2755 = vmatmul.mubr.bf16.gmra.mrb[0].mxu0 %v2678
        %v2756 = vpop.f32.mrb[0].mxu0
        %v2757 = vadd.f32 0.0, %v2756
        %v2758 = vpop.f32.mrb[0].mxu0
        %v2759 = vadd.f32 0.0, %v2758
        %v2760 = vpop.f32.mrb[0].mxu0
        %v2761 = vadd.f32 0.0, %v2760
        %v2762 = vpop.f32.mrb[0].mxu0
        %v2763 = vadd.f32 0.0, %v2762
        %2764 = vmatprep.mubr.bf16.mxu0 0
        %2765 = vmatmul.mubr.bf16.gmra.mrb[0].mxu0 %v2681
        %v2766 = vpop.f32.mrb[0].mxu0
        %v2767 = vadd.f32 0.0, %v2766
        %v2768 = vpop.f32.mrb[0].mxu0
        %v2769 = vadd.f32 0.0, %v2768
        %v2770 = vpop.f32.mrb[0].mxu0
        %v2771 = vadd.f32 0.0, %v2770
        %v2772 = vpop.f32.mrb[0].mxu0
        %v2773 = vadd.f32 0.0, %v2772
        %2774 = vmatprep.mubr.bf16.mxu0 0
        %2775 = vmatmul.mubr.bf16.gmra.mrb[0].mxu0 %v2684
        %v2776 = vpop.f32.mrb[0].mxu0
        %v2777 = vadd.f32 0.0, %v2776
        %v2778 = vpop.f32.mrb[0].mxu0
        %v2779 = vadd.f32 0.0, %v2778
        %v2780 = vpop.f32.mrb[0].mxu0
        %v2781 = vadd.f32 0.0, %v2780
        %v2782 = vpop.f32.mrb[0].mxu0
        %v2783 = vadd.f32 0.0, %v2782
        %2784 = vmatprep.mubr.bf16.mxu0 0
        %2785 = vmatmul.mubr.bf16.gmra.mrb[0].mxu0 %v2687
        %v2786 = vpop.f32.mrb[0].mxu0
        %v2787 = vadd.f32 0.0, %v2786
        %v2788 = vpop.f32.mrb[0].mxu0
        %v2789 = vadd.f32 0.0, %v2788
        %v2790 = vpop.f32.mrb[0].mxu0
        %v2791 = vadd.f32 0.0, %v2790
        %v2792 = vpop.f32.mrb[0].mxu0
        %v2793 = vadd.f32 0.0, %v2792
        %2794 = vmatprep.mubr.bf16.mxu0 0
        %2795 = vmatmul.mubr.bf16.gmra.mrb[0].mxu0 %v2690
        %v2796 = vpop.f32.mrb[0].mxu0
        %v2797 = vadd.f32 0.0, %v2796
        %v2798 = vpop.f32.mrb[0].mxu0
        %v2799 = vadd.f32 0.0, %v2798
        %v2800 = vpop.f32.mrb[0].mxu0
        %v2801 = vadd.f32 0.0, %v2800
        %v2802 = vpop.f32.mrb[0].mxu0
        %v2803 = vadd.f32 0.0, %v2802
        %2804 = vdwg.mxu0
        %v2805 = vpack.c.bf16 %v1921, %v1920
        %v2806 = vpack.c.bf16 %v1923, %v1922
        %v2807 = vpack.c.bf16 %v1925, %v1924
        %v2808 = vpack.c.bf16 %v1927, %v1926
        %v2809 = vpack.c.bf16 %v1929, %v1928
        %v2810 = vpack.c.bf16 %v1931, %v1930
        %v2811 = vpack.c.bf16 %v1933, %v1932
        %v2812 = vpack.c.bf16 %v1935, %v1934
        %v2813 = vld [vmem:[%s1099] sm:$0xf]
        %v2814 = vld [vmem:[%s1099 + $0x4] sm:$0xf]
        %v2815 = vld [vmem:[%s1099 + $0x8] sm:$0xf]
        %v2816 = vld [vmem:[%s1099 + $0xc] sm:$0xf]
        %v2817 = vld [vmem:[%s1099 + $0x10] sm:$0xf]
        %v2818 = vld [vmem:[%s1099 + $0x14] sm:$0xf]
        %v2819 = vld [vmem:[%s1099 + $0x18] sm:$0xf]
        %v2820 = vld [vmem:[%s1099 + $0x1c] sm:$0xf]
        %v2821 = vld [vmem:[%s1099 + $0x20] sm:$0xf]
        %v2822 = vld [vmem:[%s1099 + $0x24] sm:$0xf]
        %v2823 = vld [vmem:[%s1099 + $0x28] sm:$0xf]
        %v2824 = vld [vmem:[%s1099 + $0x2c] sm:$0xf]
        %v2825 = vld [vmem:[%s1099 + $0x30] sm:$0xf]
        %v2826 = vld [vmem:[%s1099 + $0x34] sm:$0xf]
        %v2827 = vld [vmem:[%s1099 + $0x38] sm:$0xf]
        %v2828 = vld [vmem:[%s1099 + $0x3c] sm:$0xf]
        %v2829 = vld [vmem:[%s985] sm:$0x1]
        %v2831 = vlaneseq
        %v2832 = vshrl.u32 %v2831, 7
        %v2833 = vsub.s32 0, %v2832
        %v2834 = vrot.slane %v2829, %v2833
        %v2852 = vunpack.c.l.b16 %v2813
        %v2853 = vunpack.c.l.b16 %v2814
        %v2854 = vunpack.c.l.b16 %v2815
        %v2855 = vunpack.c.l.b16 %v2816
        %v2856 = vunpack.c.l.b16 %v2817
        %v2857 = vunpack.c.l.b16 %v2818
        %v2858 = vunpack.c.l.b16 %v2819
        %v2859 = vunpack.c.l.b16 %v2820
        %v2860 = vunpack.c.l.b16 %v2821
        %v2861 = vunpack.c.l.b16 %v2822
        %v2862 = vunpack.c.l.b16 %v2823
        %v2863 = vunpack.c.l.b16 %v2824
        %v2864 = vunpack.c.l.b16 %v2825
        %v2865 = vunpack.c.l.b16 %v2826
        %v2866 = vunpack.c.l.b16 %v2827
        %v2867 = vunpack.c.l.b16 %v2828
        %v2868 = vpack.c.b16 %v2853, %v2852
        %v2869 = vpack.c.b16 %v2855, %v2854
        %v2870 = vpack.c.b16 %v2857, %v2856
        %v2871 = vpack.c.b16 %v2859, %v2858
        %v2872 = vpack.c.b16 %v2861, %v2860
        %v2873 = vpack.c.b16 %v2863, %v2862
        %v2874 = vpack.c.b16 %v2865, %v2864
        %v2875 = vpack.c.b16 %v2867, %v2866
        %2884 = vmatprep.subr.bf16.mxu0 0
        %2885 = vmatpush1.bf16.msra.mxu0 %v2868
        %2886 = vmatprep.subr.bf16.mxu0 0
        %2887 = vmatpush1.bf16.msra.mxu0 %v2869
        %2888 = vmatprep.subr.bf16.mxu0 0
        %2889 = vmatpush1.bf16.msra.mxu0 %v2870
        %2890 = vmatprep.subr.bf16.mxu0 0
        %2891 = vmatpush1.bf16.msra.mxu0 %v2871
        %2892 = vmatprep.subr.bf16.mxu0 0
        %2893 = vmatpush1.bf16.msra.mxu0 %v2872
        %2894 = vmatprep.subr.bf16.mxu0 0
        %2895 = vmatpush1.bf16.msra.mxu0 %v2873
        %2896 = vmatprep.subr.bf16.mxu0 0
        %2897 = vmatpush1.bf16.msra.mxu0 %v2874
        %2898 = vmatprep.subr.bf16.mxu0 0
        %2899 = vmatpush1.bf16.msra.mxu0 %v2875
        %2900 = vmatprep.subr.bf16.mxu0 0
        %2901 = vmatpush1.bf16.msra.mxu0 0
        %2902 = vmatprep.subr.bf16.mxu0 0
        %2903 = vmatpush1.bf16.msra.mxu0 0
        %2904 = vmatprep.subr.bf16.mxu0 0
        %2905 = vmatpush1.bf16.msra.mxu0 0
        %2906 = vmatprep.subr.bf16.mxu0 0
        %2907 = vmatpush1.bf16.msra.mxu0 0
        %2908 = vmatprep.subr.bf16.mxu0 0
        %2909 = vmatpush1.bf16.msra.mxu0 0
        %2910 = vmatprep.subr.bf16.mxu0 0
        %2911 = vmatpush1.bf16.msra.mxu0 0
        %2912 = vmatprep.subr.bf16.mxu0 0
        %2913 = vmatpush1.bf16.msra.mxu0 0
        %2914 = vmatprep.subr.bf16.mxu0 0
        %2915 = vmatpush1.bf16.msra.mxu0 0
        %2916 = vmatprep.mubr.bf16.mxu0 0
        %2917 = vmatmul.mubr.bf16.gmra.mrb[0].mxu0 %v2805
        %v2918 = vpop.f32.mrb[0].mxu0
        %v2919 = vadd.f32 %v2834, %v2918
        %v2920 = vpop.f32.mrb[0].mxu0
        %v2921 = vpop.f32.mrb[0].mxu0
        %v2922 = vadd.f32 %v2834, %v2921
        %v2923 = vpop.f32.mrb[0].mxu0
        %2924 = vmatprep.mubr.bf16.mxu0 0
        %2925 = vmatmul.mubr.bf16.gmra.mrb[0].mxu0 %v2806
        %v2926 = vpop.f32.mrb[0].mxu0
        %v2927 = vadd.f32 %v2834, %v2926
        %v2928 = vpop.f32.mrb[0].mxu0
        %v2929 = vpop.f32.mrb[0].mxu0
        %v2930 = vadd.f32 %v2834, %v2929
        %v2931 = vpop.f32.mrb[0].mxu0
        %2932 = vmatprep.mubr.bf16.mxu0 0
        %2933 = vmatmul.mubr.bf16.gmra.mrb[0].mxu0 %v2807
        %v2934 = vpop.f32.mrb[0].mxu0
        %v2935 = vadd.f32 %v2834, %v2934
        %v2936 = vpop.f32.mrb[0].mxu0
        %v2937 = vpop.f32.mrb[0].mxu0
        %v2938 = vadd.f32 %v2834, %v2937
        %v2939 = vpop.f32.mrb[0].mxu0
        %2940 = vmatprep.mubr.bf16.mxu0 0
        %2941 = vmatmul.mubr.bf16.gmra.mrb[0].mxu0 %v2808
        %v2942 = vpop.f32.mrb[0].mxu0
        %v2943 = vadd.f32 %v2834, %v2942
        %v2944 = vpop.f32.mrb[0].mxu0
        %v2945 = vpop.f32.mrb[0].mxu0
        %v2946 = vadd.f32 %v2834, %v2945
        %v2947 = vpop.f32.mrb[0].mxu0
        %2948 = vmatprep.mubr.bf16.mxu0 0
        %2949 = vmatmul.mubr.bf16.gmra.mrb[0].mxu0 %v2809
        %v2950 = vpop.f32.mrb[0].mxu0
        %v2951 = vadd.f32 %v2834, %v2950
        %v2952 = vpop.f32.mrb[0].mxu0
        %v2953 = vpop.f32.mrb[0].mxu0
        %v2954 = vadd.f32 %v2834, %v2953
        %v2955 = vpop.f32.mrb[0].mxu0
        %2956 = vmatprep.mubr.bf16.mxu0 0
        %2957 = vmatmul.mubr.bf16.gmra.mrb[0].mxu0 %v2810
        %v2958 = vpop.f32.mrb[0].mxu0
        %v2959 = vadd.f32 %v2834, %v2958
        %v2960 = vpop.f32.mrb[0].mxu0
        %v2961 = vpop.f32.mrb[0].mxu0
        %v2962 = vadd.f32 %v2834, %v2961
        %v2963 = vpop.f32.mrb[0].mxu0
        %2964 = vmatprep.mubr.bf16.mxu0 0
        %2965 = vmatmul.mubr.bf16.gmra.mrb[0].mxu0 %v2811
        %v2966 = vpop.f32.mrb[0].mxu0
        %v2967 = vadd.f32 %v2834, %v2966
        %v2968 = vpop.f32.mrb[0].mxu0
        %v2969 = vpop.f32.mrb[0].mxu0
        %v2970 = vadd.f32 %v2834, %v2969
        %v2971 = vpop.f32.mrb[0].mxu0
        %2972 = vmatprep.mubr.bf16.mxu0 0
        %2973 = vmatmul.mubr.bf16.gmra.mrb[0].mxu0 %v2812
        %v2974 = vpop.f32.mrb[0].mxu0
        %v2975 = vadd.f32 %v2834, %v2974
        %v2976 = vpop.f32.mrb[0].mxu0
        %v2977 = vpop.f32.mrb[0].mxu0
        %v2978 = vadd.f32 %v2834, %v2977
        %v2979 = vpop.f32.mrb[0].mxu0
        %2980 = vdwg.mxu0
        %v2981 = vadd.f32 %v2729, %v2552
        %v2982 = vadd.f32 %v2733, %v2556
        %v2983 = vadd.f32 %v2739, %v2562
        %v2984 = vadd.f32 %v2743, %v2566
        %v2985 = vadd.f32 %v2749, %v2572
        %v2986 = vadd.f32 %v2753, %v2576
        %v2987 = vadd.f32 %v2759, %v2582
        %v2988 = vadd.f32 %v2763, %v2586
        %v2989 = vadd.f32 %v2769, %v2592
        %v2990 = vadd.f32 %v2773, %v2596
        %v2991 = vadd.f32 %v2779, %v2602
        %v2992 = vadd.f32 %v2783, %v2606
        %v2993 = vadd.f32 %v2789, %v2612
        %v2994 = vadd.f32 %v2793, %v2616
        %v2995 = vadd.f32 %v2799, %v2622
        %v2996 = vadd.f32 %v2803, %v2626
        %v2997 = vadd.f32 %v2981, %v2919
        %v2998 = vadd.f32 %v2982, %v2922
        %v2999 = vadd.f32 %v2983, %v2927
        %v3000 = vadd.f32 %v2984, %v2930
        %v3001 = vadd.f32 %v2985, %v2935
        %v3002 = vadd.f32 %v2986, %v2938
        %v3003 = vadd.f32 %v2987, %v2943
        %v3004 = vadd.f32 %v2988, %v2946
        %v3005 = vadd.f32 %v2989, %v2951
        %v3006 = vadd.f32 %v2990, %v2954
        %v3007 = vadd.f32 %v2991, %v2959
        %v3008 = vadd.f32 %v2992, %v2962
        %v3009 = vadd.f32 %v2993, %v2967
        %v3010 = vadd.f32 %v2994, %v2970
        %v3011 = vadd.f32 %v2995, %v2975
        %v3012 = vadd.f32 %v2996, %v2978
        %v3013 = vld [vmem:[%s1001] sm:$0x1]
        %v3015 = vlaneseq
        %v3016 = vshrl.u32 %v3015, 7
        %v3017 = vsub.s32 0, %v3016
        %v3018 = vrot.slane %v3013, %v3017
        %v3020 = vadd.f32 %v2997, %v3018
        %v3021 = vadd.f32 %v2998, %v3018
        %v3022 = vadd.f32 %v2999, %v3018
        %v3023 = vadd.f32 %v3000, %v3018
        %v3024 = vadd.f32 %v3001, %v3018
        %v3025 = vadd.f32 %v3002, %v3018
        %v3026 = vadd.f32 %v3003, %v3018
        %v3027 = vadd.f32 %v3004, %v3018
        %v3028 = vadd.f32 %v3005, %v3018
        %v3029 = vadd.f32 %v3006, %v3018
        %v3030 = vadd.f32 %v3007, %v3018
        %v3031 = vadd.f32 %v3008, %v3018
        %v3032 = vadd.f32 %v3009, %v3018
        %v3033 = vadd.f32 %v3010, %v3018
        %v3034 = vadd.f32 %v3011, %v3018
        %v3035 = vadd.f32 %v3012, %v3018
        %v3036 = vmax.f32 %v3020, 0.0
        %v3037 = vmax.f32 %v3021, 0.0
        %v3038 = vmax.f32 %v3022, 0.0
        %v3039 = vmax.f32 %v3023, 0.0
        %v3040 = vmax.f32 %v3024, 0.0
        %v3041 = vmax.f32 %v3025, 0.0
        %v3042 = vmax.f32 %v3026, 0.0
        %v3043 = vmax.f32 %v3027, 0.0
        %v3044 = vmax.f32 %v3028, 0.0
        %v3045 = vmax.f32 %v3029, 0.0
        %v3046 = vmax.f32 %v3030, 0.0
        %v3047 = vmax.f32 %v3031, 0.0
        %v3048 = vmax.f32 %v3032, 0.0
        %v3049 = vmax.f32 %v3033, 0.0
        %v3050 = vmax.f32 %v3034, 0.0
        %v3051 = vmax.f32 %v3035, 0.0
        %v3052 = vadd.f32 %v1920, %v3036
        %v3053 = vadd.f32 %v1921, %v3037
        %v3054 = vadd.f32 %v1922, %v3038
        %v3055 = vadd.f32 %v1923, %v3039
        %v3056 = vadd.f32 %v1924, %v3040
        %v3057 = vadd.f32 %v1925, %v3041
        %v3058 = vadd.f32 %v1926, %v3042
        %v3059 = vadd.f32 %v1927, %v3043
        %v3060 = vadd.f32 %v1928, %v3044
        %v3061 = vadd.f32 %v1929, %v3045
        %v3062 = vadd.f32 %v1930, %v3046
        %v3063 = vadd.f32 %v1931, %v3047
        %v3064 = vadd.f32 %v1932, %v3048
        %v3065 = vadd.f32 %v1933, %v3049
        %v3066 = vadd.f32 %v1934, %v3050
        %v3067 = vadd.f32 %v1935, %v3051
        %v3068 = vxor.u32 %v3052, 2147483648
        %v3069 = vxor.u32 %v3053, 2147483648
        %v3070 = vxor.u32 %v3054, 2147483648
        %v3071 = vxor.u32 %v3055, 2147483648
        %v3072 = vxor.u32 %v3056, 2147483648
        %v3073 = vxor.u32 %v3057, 2147483648
        %v3074 = vxor.u32 %v3058, 2147483648
        %v3075 = vxor.u32 %v3059, 2147483648
        %v3076 = vxor.u32 %v3060, 2147483648
        %v3077 = vxor.u32 %v3061, 2147483648
        %v3078 = vxor.u32 %v3062, 2147483648
        %v3079 = vxor.u32 %v3063, 2147483648
        %v3080 = vxor.u32 %v3064, 2147483648
        %v3081 = vxor.u32 %v3065, 2147483648
        %v3082 = vxor.u32 %v3066, 2147483648
        %v3083 = vxor.u32 %v3067, 2147483648
        %v3084 = vmul.f32 %v3068, 1.442695
        %v3085 = vpow.pop %v3084
        %v3086 = vmul.f32 %v3069, 1.442695
        %v3087 = vpow.pop %v3086
        %v3088 = vmul.f32 %v3070, 1.442695
        %v3089 = vpow.pop %v3088
        %v3090 = vmul.f32 %v3071, 1.442695
        %v3091 = vpow.pop %v3090
        %v3092 = vmul.f32 %v3072, 1.442695
        %v3093 = vpow.pop %v3092
        %v3094 = vmul.f32 %v3073, 1.442695
        %v3095 = vpow.pop %v3094
        %v3096 = vmul.f32 %v3074, 1.442695
        %v3097 = vpow.pop %v3096
        %v3098 = vmul.f32 %v3075, 1.442695
        %v3099 = vpow.pop %v3098
        %v3100 = vmul.f32 %v3076, 1.442695
        %v3101 = vpow.pop %v3100
        %v3102 = vmul.f32 %v3077, 1.442695
        %v3103 = vpow.pop %v3102
        %v3104 = vmul.f32 %v3078, 1.442695
        %v3105 = vpow.pop %v3104
        %v3106 = vmul.f32 %v3079, 1.442695
        %v3107 = vpow.pop %v3106
        %v3108 = vmul.f32 %v3080, 1.442695
        %v3109 = vpow.pop %v3108
        %v3110 = vmul.f32 %v3081, 1.442695
        %v3111 = vpow.pop %v3110
        %v3112 = vmul.f32 %v3082, 1.442695
        %v3113 = vpow.pop %v3112
        %v3114 = vmul.f32 %v3083, 1.442695
        %v3115 = vpow.pop %v3114
        %v3116 = vadd.f32 %v3085, 1.0
        %v3117 = vadd.f32 %v3087, 1.0
        %v3118 = vadd.f32 %v3089, 1.0
        %v3119 = vadd.f32 %v3091, 1.0
        %v3120 = vadd.f32 %v3093, 1.0
        %v3121 = vadd.f32 %v3095, 1.0
        %v3122 = vadd.f32 %v3097, 1.0
        %v3123 = vadd.f32 %v3099, 1.0
        %v3124 = vadd.f32 %v3101, 1.0
        %v3125 = vadd.f32 %v3103, 1.0
        %v3126 = vadd.f32 %v3105, 1.0
        %v3127 = vadd.f32 %v3107, 1.0
        %v3128 = vadd.f32 %v3109, 1.0
        %v3129 = vadd.f32 %v3111, 1.0
        %v3130 = vadd.f32 %v3113, 1.0
        %v3131 = vadd.f32 %v3115, 1.0
        %v3132 = vrcp.pop %v3116
        %v3133 = vmul.f32 1.0, %v3132
        %v3134 = vrcp.pop %v3117
        %v3135 = vmul.f32 1.0, %v3134
        %v3136 = vrcp.pop %v3118
        %v3137 = vmul.f32 1.0, %v3136
        %v3138 = vrcp.pop %v3119
        %v3139 = vmul.f32 1.0, %v3138
        %v3140 = vrcp.pop %v3120
        %v3141 = vmul.f32 1.0, %v3140
        %v3142 = vrcp.pop %v3121
        %v3143 = vmul.f32 1.0, %v3142
        %v3144 = vrcp.pop %v3122
        %v3145 = vmul.f32 1.0, %v3144
        %v3146 = vrcp.pop %v3123
        %v3147 = vmul.f32 1.0, %v3146
        %v3148 = vrcp.pop %v3124
        %v3149 = vmul.f32 1.0, %v3148
        %v3150 = vrcp.pop %v3125
        %v3151 = vmul.f32 1.0, %v3150
        %v3152 = vrcp.pop %v3126
        %v3153 = vmul.f32 1.0, %v3152
        %v3154 = vrcp.pop %v3127
        %v3155 = vmul.f32 1.0, %v3154
        %v3156 = vrcp.pop %v3128
        %v3157 = vmul.f32 1.0, %v3156
        %v3158 = vrcp.pop %v3129
        %v3159 = vmul.f32 1.0, %v3158
        %v3160 = vrcp.pop %v3130
        %v3161 = vmul.f32 1.0, %v3160
        %v3162 = vrcp.pop %v3131
        %v3163 = vmul.f32 1.0, %v3162
        %v3164 = vpack.c.bf16 %v3135, %v3133
        %v3165 = vpack.c.bf16 %v3139, %v3137
        %v3166 = vpack.c.bf16 %v3143, %v3141
        %v3167 = vpack.c.bf16 %v3147, %v3145
        %v3168 = vpack.c.bf16 %v3151, %v3149
        %v3169 = vpack.c.bf16 %v3155, %v3153
        %v3170 = vpack.c.bf16 %v3159, %v3157
        %v3171 = vpack.c.bf16 %v3163, %v3161
        %3172 = vst [vmem:[#allocation4 + $0x8] sm:$0xff] %v3164
        %3173 = vst [vmem:[#allocation4 + $0x18] sm:$0xff] %v3165
        %3174 = vst [vmem:[#allocation4 + $0x28] sm:$0xff] %v3166
        %3175 = vst [vmem:[#allocation4 + $0x38] sm:$0xff] %v3167
        %3176 = vst [vmem:[#allocation4 + $0x48] sm:$0xff] %v3168
        %3177 = vst [vmem:[#allocation4 + $0x58] sm:$0xff] %v3169
        %3178 = vst [vmem:[#allocation4 + $0x68] sm:$0xff] %v3170
        %3179 = vst [vmem:[#allocation4 + $0x78] sm:$0xff] %v3171
        %v3180 = vmul.f32 %v2550, %v3133
        %v3181 = vmul.f32 %v2554, %v3135
        %v3182 = vmul.f32 %v2560, %v3137
        %v3183 = vmul.f32 %v2564, %v3139
        %v3184 = vmul.f32 %v2570, %v3141
        %v3185 = vmul.f32 %v2574, %v3143
        %v3186 = vmul.f32 %v2580, %v3145
        %v3187 = vmul.f32 %v2584, %v3147
        %v3188 = vmul.f32 %v2590, %v3149
        %v3189 = vmul.f32 %v2594, %v3151
        %v3190 = vmul.f32 %v2600, %v3153
        %v3191 = vmul.f32 %v2604, %v3155
        %v3192 = vmul.f32 %v2610, %v3157
        %v3193 = vmul.f32 %v2614, %v3159
        %v3194 = vmul.f32 %v2620, %v3161
        %v3195 = vmul.f32 %v2624, %v3163
        %v3196 = vpack.c.bf16 %v3181, %v3180
        %v3197 = vpack.c.bf16 %v3183, %v3182
        %v3198 = vpack.c.bf16 %v3185, %v3184
        %v3199 = vpack.c.bf16 %v3187, %v3186
        %v3200 = vpack.c.bf16 %v3189, %v3188
        %v3201 = vpack.c.bf16 %v3191, %v3190
        %v3202 = vpack.c.bf16 %v3193, %v3192
        %v3203 = vpack.c.bf16 %v3195, %v3194
        %3204 = vst [vmem:[#allocation4] sm:$0xff] %v3196
        %3205 = vst [vmem:[#allocation4 + $0x10] sm:$0xff] %v3197
        %3206 = vst [vmem:[#allocation4 + $0x20] sm:$0xff] %v3198
        %3207 = vst [vmem:[#allocation4 + $0x30] sm:$0xff] %v3199
        %3208 = vst [vmem:[#allocation4 + $0x40] sm:$0xff] %v3200
        %3209 = vst [vmem:[#allocation4 + $0x50] sm:$0xff] %v3201
        %3210 = vst [vmem:[#allocation4 + $0x60] sm:$0xff] %v3202
        %3211 = vst [vmem:[#allocation4 + $0x70] sm:$0xff] %v3203
        %v3212 = vld [vmem:[#allocation4] sm:$0xff]
        %v3213 = vld [vmem:[#allocation4 + $0x8] sm:$0xff]
        %v3214 = vld [vmem:[#allocation4 + $0x10] sm:$0xff]
        %v3215 = vld [vmem:[#allocation4 + $0x18] sm:$0xff]
        %v3216 = vld [vmem:[#allocation4 + $0x20] sm:$0xff]
        %v3217 = vld [vmem:[#allocation4 + $0x28] sm:$0xff]
        %v3218 = vld [vmem:[#allocation4 + $0x30] sm:$0xff]
        %v3219 = vld [vmem:[#allocation4 + $0x38] sm:$0xff]
        %v3220 = vld [vmem:[#allocation4 + $0x40] sm:$0xff]
        %v3221 = vld [vmem:[#allocation4 + $0x48] sm:$0xff]
        %v3222 = vld [vmem:[#allocation4 + $0x50] sm:$0xff]
        %v3223 = vld [vmem:[#allocation4 + $0x58] sm:$0xff]
        %v3224 = vld [vmem:[#allocation4 + $0x60] sm:$0xff]
        %v3225 = vld [vmem:[#allocation4 + $0x68] sm:$0xff]
        %v3226 = vld [vmem:[#allocation4 + $0x70] sm:$0xff]
        %v3227 = vld [vmem:[#allocation4 + $0x78] sm:$0xff]
        %v3236 = vunpack.c.l.b16 %v1904
        %v3237 = vunpack.c.l.b16 %v1905
        %v3238 = vunpack.c.l.b16 %v1906
        %v3239 = vunpack.c.l.b16 %v1907
        %v3240 = vunpack.c.l.b16 %v1908
        %v3241 = vunpack.c.l.b16 %v1909
        %v3242 = vunpack.c.l.b16 %v1910
        %v3243 = vunpack.c.l.b16 %v1911
        %v3244 = vpack.c.b16 %v3237, %v3236
        %v3245 = vpack.c.b16 %v3239, %v3238
        %v3246 = vpack.c.b16 %v3241, %v3240
        %v3247 = vpack.c.b16 %v3243, %v3242
        %3252 = vmatprep.subr.bf16.mxu0 %v3213
        %3253 = vmatpush1.bf16.msra.mxu0 %v3212
        %3254 = vmatprep.subr.bf16.mxu0 %v3215
        %3255 = vmatpush1.bf16.msra.mxu0 %v3214
        %3256 = vmatprep.subr.bf16.mxu0 %v3217
        %3257 = vmatpush1.bf16.msra.mxu0 %v3216
        %3258 = vmatprep.subr.bf16.mxu0 %v3219
        %3259 = vmatpush1.bf16.msra.mxu0 %v3218
        %3260 = vmatprep.subr.bf16.mxu0 %v3221
        %3261 = vmatpush1.bf16.msra.mxu0 %v3220
        %3262 = vmatprep.subr.bf16.mxu0 %v3223
        %3263 = vmatpush1.bf16.msra.mxu0 %v3222
        %3264 = vmatprep.subr.bf16.mxu0 %v3225
        %3265 = vmatpush1.bf16.msra.mxu0 %v3224
        %3266 = vmatprep.subr.bf16.mxu0 %v3227
        %3267 = vmatpush1.bf16.msra.mxu0 %v3226
        %3268 = vmatprep.subr.bf16.mxu0 0
        %3269 = vmatpush1.bf16.msra.mxu0 0
        %3270 = vmatprep.subr.bf16.mxu0 0
        %3271 = vmatpush1.bf16.msra.mxu0 0
        %3272 = vmatprep.subr.bf16.mxu0 0
        %3273 = vmatpush1.bf16.msra.mxu0 0
        %3274 = vmatprep.subr.bf16.mxu0 0
        %3275 = vmatpush1.bf16.msra.mxu0 0
        %3276 = vmatprep.subr.bf16.mxu0 0
        %3277 = vmatpush1.bf16.msra.mxu0 0
        %3278 = vmatprep.subr.bf16.mxu0 0
        %3279 = vmatpush1.bf16.msra.mxu0 0
        %3280 = vmatprep.subr.bf16.mxu0 0
        %3281 = vmatpush1.bf16.msra.mxu0 0
        %3282 = vmatprep.subr.bf16.mxu0 0
        %3283 = vmatpush1.bf16.msra.mxu0 0
        %3284 = vmatprep.mubr.bf16.mxu0 0
        %3285 = vmatmul.mubr.bf16.gmra.mrb[0].mxu0 %v3244
        %v3286 = vpop.f32.mrb[0].mxu0
        %v3287 = vadd.f32 0.0, %v3286
        %v3288 = vpop.f32.mrb[0].mxu0
        %v3289 = vadd.f32 0.0, %v3288
        %v3290 = vpop.f32.mrb[0].mxu0
        %v3291 = vadd.f32 0.0, %v3290
        %v3292 = vpop.f32.mrb[0].mxu0
        %v3293 = vadd.f32 0.0, %v3292
        %3294 = vmatprep.mubr.bf16.mxu0 0
        %3295 = vmatmul.mubr.bf16.gmra.mrb[0].mxu0 %v3245
        %v3296 = vpop.f32.mrb[0].mxu0
        %v3297 = vadd.f32 0.0, %v3296
        %v3298 = vpop.f32.mrb[0].mxu0
        %v3299 = vadd.f32 0.0, %v3298
        %v3300 = vpop.f32.mrb[0].mxu0
        %v3301 = vadd.f32 0.0, %v3300
        %v3302 = vpop.f32.mrb[0].mxu0
        %v3303 = vadd.f32 0.0, %v3302
        %3304 = vmatprep.mubr.bf16.mxu0 0
        %3305 = vmatmul.mubr.bf16.gmra.mrb[0].mxu0 %v3246
        %v3306 = vpop.f32.mrb[0].mxu0
        %v3307 = vadd.f32 0.0, %v3306
        %v3308 = vpop.f32.mrb[0].mxu0
        %v3309 = vadd.f32 0.0, %v3308
        %v3310 = vpop.f32.mrb[0].mxu0
        %v3311 = vadd.f32 0.0, %v3310
        %v3312 = vpop.f32.mrb[0].mxu0
        %v3313 = vadd.f32 0.0, %v3312
        %3314 = vmatprep.mubr.bf16.mxu0 0
        %3315 = vmatmul.mubr.bf16.gmra.mrb[0].mxu0 %v3247
        %v3316 = vpop.f32.mrb[0].mxu0
        %v3317 = vadd.f32 0.0, %v3316
        %v3318 = vpop.f32.mrb[0].mxu0
        %v3319 = vadd.f32 0.0, %v3318
        %v3320 = vpop.f32.mrb[0].mxu0
        %v3321 = vadd.f32 0.0, %v3320
        %v3322 = vpop.f32.mrb[0].mxu0
        %v3323 = vadd.f32 0.0, %v3322
        %3324 = vdwg.mxu0
        %v3325 = vmul.f32 %v2727, %v3133
        %v3326 = vmul.f32 %v2731, %v3135
        %v3327 = vmul.f32 %v2737, %v3137
        %v3328 = vmul.f32 %v2741, %v3139
        %v3329 = vmul.f32 %v2747, %v3141
        %v3330 = vmul.f32 %v2751, %v3143
        %v3331 = vmul.f32 %v2757, %v3145
        %v3332 = vmul.f32 %v2761, %v3147
        %v3333 = vmul.f32 %v2767, %v3149
        %v3334 = vmul.f32 %v2771, %v3151
        %v3335 = vmul.f32 %v2777, %v3153
        %v3336 = vmul.f32 %v2781, %v3155
        %v3337 = vmul.f32 %v2787, %v3157
        %v3338 = vmul.f32 %v2791, %v3159
        %v3339 = vmul.f32 %v2797, %v3161
        %v3340 = vmul.f32 %v2801, %v3163
        %v3341 = vpack.c.bf16 %v3326, %v3325
        %v3342 = vpack.c.bf16 %v3328, %v3327
        %v3343 = vpack.c.bf16 %v3330, %v3329
        %v3344 = vpack.c.bf16 %v3332, %v3331
        %v3345 = vpack.c.bf16 %v3334, %v3333
        %v3346 = vpack.c.bf16 %v3336, %v3335
        %v3347 = vpack.c.bf16 %v3338, %v3337
        %v3348 = vpack.c.bf16 %v3340, %v3339
        %3349 = vst [vmem:[#allocation4] sm:$0xff] %v3341
        %3350 = vst [vmem:[#allocation4 + $0x10] sm:$0xff] %v3342
        %3351 = vst [vmem:[#allocation4 + $0x20] sm:$0xff] %v3343
        %3352 = vst [vmem:[#allocation4 + $0x30] sm:$0xff] %v3344
        %3353 = vst [vmem:[#allocation4 + $0x40] sm:$0xff] %v3345
        %3354 = vst [vmem:[#allocation4 + $0x50] sm:$0xff] %v3346
        %3355 = vst [vmem:[#allocation4 + $0x60] sm:$0xff] %v3347
        %3356 = vst [vmem:[#allocation4 + $0x70] sm:$0xff] %v3348
        %v3357 = vld [vmem:[#allocation4] sm:$0xff]
        %v3358 = vld [vmem:[#allocation4 + $0x8] sm:$0xff]
        %v3359 = vld [vmem:[#allocation4 + $0x10] sm:$0xff]
        %v3360 = vld [vmem:[#allocation4 + $0x18] sm:$0xff]
        %v3361 = vld [vmem:[#allocation4 + $0x20] sm:$0xff]
        %v3362 = vld [vmem:[#allocation4 + $0x28] sm:$0xff]
        %v3363 = vld [vmem:[#allocation4 + $0x30] sm:$0xff]
        %v3364 = vld [vmem:[#allocation4 + $0x38] sm:$0xff]
        %v3365 = vld [vmem:[#allocation4 + $0x40] sm:$0xff]
        %v3366 = vld [vmem:[#allocation4 + $0x48] sm:$0xff]
        %v3367 = vld [vmem:[#allocation4 + $0x50] sm:$0xff]
        %v3368 = vld [vmem:[#allocation4 + $0x58] sm:$0xff]
        %v3369 = vld [vmem:[#allocation4 + $0x60] sm:$0xff]
        %v3370 = vld [vmem:[#allocation4 + $0x68] sm:$0xff]
        %v3371 = vld [vmem:[#allocation4 + $0x70] sm:$0xff]
        %v3372 = vld [vmem:[#allocation4 + $0x78] sm:$0xff]
        %v3381 = vunpack.c.l.b16 %v1896
        %v3382 = vunpack.c.l.b16 %v1897
        %v3383 = vunpack.c.l.b16 %v1898
        %v3384 = vunpack.c.l.b16 %v1899
        %v3385 = vunpack.c.l.b16 %v1900
        %v3386 = vunpack.c.l.b16 %v1901
        %v3387 = vunpack.c.l.b16 %v1902
        %v3388 = vunpack.c.l.b16 %v1903
        %v3389 = vpack.c.b16 %v3382, %v3381
        %v3390 = vpack.c.b16 %v3384, %v3383
        %v3391 = vpack.c.b16 %v3386, %v3385
        %v3392 = vpack.c.b16 %v3388, %v3387
        %3397 = vmatprep.subr.bf16.mxu0 %v3358
        %3398 = vmatpush1.bf16.msra.mxu0 %v3357
        %3399 = vmatprep.subr.bf16.mxu0 %v3360
        %3400 = vmatpush1.bf16.msra.mxu0 %v3359
        %3401 = vmatprep.subr.bf16.mxu0 %v3362
        %3402 = vmatpush1.bf16.msra.mxu0 %v3361
        %3403 = vmatprep.subr.bf16.mxu0 %v3364
        %3404 = vmatpush1.bf16.msra.mxu0 %v3363
        %3405 = vmatprep.subr.bf16.mxu0 %v3366
        %3406 = vmatpush1.bf16.msra.mxu0 %v3365
        %3407 = vmatprep.subr.bf16.mxu0 %v3368
        %3408 = vmatpush1.bf16.msra.mxu0 %v3367
        %3409 = vmatprep.subr.bf16.mxu0 %v3370
        %3410 = vmatpush1.bf16.msra.mxu0 %v3369
        %3411 = vmatprep.subr.bf16.mxu0 %v3372
        %3412 = vmatpush1.bf16.msra.mxu0 %v3371
        %3413 = vmatprep.subr.bf16.mxu0 0
        %3414 = vmatpush1.bf16.msra.mxu0 0
        %3415 = vmatprep.subr.bf16.mxu0 0
        %3416 = vmatpush1.bf16.msra.mxu0 0
        %3417 = vmatprep.subr.bf16.mxu0 0
        %3418 = vmatpush1.bf16.msra.mxu0 0
        %3419 = vmatprep.subr.bf16.mxu0 0
        %3420 = vmatpush1.bf16.msra.mxu0 0
        %3421 = vmatprep.subr.bf16.mxu0 0
        %3422 = vmatpush1.bf16.msra.mxu0 0
        %3423 = vmatprep.subr.bf16.mxu0 0
        %3424 = vmatpush1.bf16.msra.mxu0 0
        %3425 = vmatprep.subr.bf16.mxu0 0
        %3426 = vmatpush1.bf16.msra.mxu0 0
        %3427 = vmatprep.subr.bf16.mxu0 0
        %3428 = vmatpush1.bf16.msra.mxu0 0
        %3429 = vmatprep.mubr.bf16.mxu0 0
        %3430 = vmatmul.mubr.bf16.gmra.mrb[0].mxu0 %v3389
        %v3431 = vpop.f32.mrb[0].mxu0
        %v3432 = vadd.f32 0.0, %v3431
        %v3433 = vpop.f32.mrb[0].mxu0
        %v3434 = vadd.f32 0.0, %v3433
        %v3435 = vpop.f32.mrb[0].mxu0
        %v3436 = vadd.f32 0.0, %v3435
        %v3437 = vpop.f32.mrb[0].mxu0
        %v3438 = vadd.f32 0.0, %v3437
        %3439 = vmatprep.mubr.bf16.mxu0 0
        %3440 = vmatmul.mubr.bf16.gmra.mrb[0].mxu0 %v3390
        %v3441 = vpop.f32.mrb[0].mxu0
        %v3442 = vadd.f32 0.0, %v3441
        %v3443 = vpop.f32.mrb[0].mxu0
        %v3444 = vadd.f32 0.0, %v3443
        %v3445 = vpop.f32.mrb[0].mxu0
        %v3446 = vadd.f32 0.0, %v3445
        %v3447 = vpop.f32.mrb[0].mxu0
        %v3448 = vadd.f32 0.0, %v3447
        %3449 = vmatprep.mubr.bf16.mxu0 0
        %3450 = vmatmul.mubr.bf16.gmra.mrb[0].mxu0 %v3391
        %v3451 = vpop.f32.mrb[0].mxu0
        %v3452 = vadd.f32 0.0, %v3451
        %v3453 = vpop.f32.mrb[0].mxu0
        %v3454 = vadd.f32 0.0, %v3453
        %v3455 = vpop.f32.mrb[0].mxu0
        %v3456 = vadd.f32 0.0, %v3455
        %v3457 = vpop.f32.mrb[0].mxu0
        %v3458 = vadd.f32 0.0, %v3457
        %3459 = vmatprep.mubr.bf16.mxu0 0
        %3460 = vmatmul.mubr.bf16.gmra.mrb[0].mxu0 %v3392
        %v3461 = vpop.f32.mrb[0].mxu0
        %v3462 = vadd.f32 0.0, %v3461
        %v3463 = vpop.f32.mrb[0].mxu0
        %v3464 = vadd.f32 0.0, %v3463
        %v3465 = vpop.f32.mrb[0].mxu0
        %v3466 = vadd.f32 0.0, %v3465
        %v3467 = vpop.f32.mrb[0].mxu0
        %v3468 = vadd.f32 0.0, %v3467
        %3469 = vdwg.mxu0
        %v3470 = vadd.f32 %v3289, 1e-06
        %v3471 = vadd.f32 %v3293, 1e-06
        %v3472 = vadd.f32 %v3299, 1e-06
        %v3473 = vadd.f32 %v3303, 1e-06
        %v3474 = vadd.f32 %v3309, 1e-06
        %v3475 = vadd.f32 %v3313, 1e-06
        %v3476 = vadd.f32 %v3319, 1e-06
        %v3477 = vadd.f32 %v3323, 1e-06
        %v3478 = vrcp.pop %v3470
        %v3479 = vrcp.pop %v3471
        %v3480 = vrcp.pop %v3472
        %v3481 = vrcp.pop %v3473
        %v3482 = vrcp.pop %v3474
        %v3483 = vrcp.pop %v3475
        %v3484 = vrcp.pop %v3476
        %v3485 = vrcp.pop %v3477
        %v3486 = vmul.f32 %v3287, %v3478
        %v3487 = vmul.f32 %v3291, %v3479
        %v3488 = vmul.f32 %v3297, %v3480
        %v3489 = vmul.f32 %v3301, %v3481
        %v3490 = vmul.f32 %v3307, %v3482
        %v3491 = vmul.f32 %v3311, %v3483
        %v3492 = vmul.f32 %v3317, %v3484
        %v3493 = vmul.f32 %v3321, %v3485
        %v3494 = vadd.f32 %v3434, 1e-06
        %v3495 = vadd.f32 %v3438, 1e-06
        %v3496 = vadd.f32 %v3444, 1e-06
        %v3497 = vadd.f32 %v3448, 1e-06
        %v3498 = vadd.f32 %v3454, 1e-06
        %v3499 = vadd.f32 %v3458, 1e-06
        %v3500 = vadd.f32 %v3464, 1e-06
        %v3501 = vadd.f32 %v3468, 1e-06
        %v3502 = vrcp.pop %v3494
        %v3503 = vrcp.pop %v3495
        %v3504 = vrcp.pop %v3496
        %v3505 = vrcp.pop %v3497
        %v3506 = vrcp.pop %v3498
        %v3507 = vrcp.pop %v3499
        %v3508 = vrcp.pop %v3500
        %v3509 = vrcp.pop %v3501
        %v3510 = vmul.f32 %v3432, %v3502
        %v3511 = vmul.f32 %v3436, %v3503
        %v3512 = vmul.f32 %v3442, %v3504
        %v3513 = vmul.f32 %v3446, %v3505
        %v3514 = vmul.f32 %v3452, %v3506
        %v3515 = vmul.f32 %v3456, %v3507
        %v3516 = vmul.f32 %v3462, %v3508
        %v3517 = vmul.f32 %v3466, %v3509
        %v3518 = vadd.f32 %v2258, %v3486
        %v3519 = vadd.f32 %v2262, %v3487
        %v3520 = vadd.f32 %v2268, %v3488
        %v3521 = vadd.f32 %v2272, %v3489
        %v3522 = vadd.f32 %v2278, %v3490
        %v3523 = vadd.f32 %v2282, %v3491
        %v3524 = vadd.f32 %v2288, %v3492
        %v3525 = vadd.f32 %v2292, %v3493
        %v3526 = vadd.f32 %v3518, %v3510
        %v3527 = vadd.f32 %v3519, %v3511
        %v3528 = vadd.f32 %v3520, %v3512
        %v3529 = vadd.f32 %v3521, %v3513
        %v3530 = vadd.f32 %v3522, %v3514
        %v3531 = vadd.f32 %v3523, %v3515
        %v3532 = vadd.f32 %v3524, %v3516
        %v3533 = vadd.f32 %v3525, %v3517
        %v3534 = vld [vmem:[%s993] sm:$0x1]
        %v3536 = vlaneseq
        %v3537 = vshrl.u32 %v3536, 7
        %v3538 = vsub.s32 0, %v3537
        %v3539 = vrot.slane %v3534, %v3538
        %v3541 = vadd.f32 %v3526, %v3539
        %v3542 = vadd.f32 %v3527, %v3539
        %v3543 = vadd.f32 %v3528, %v3539
        %v3544 = vadd.f32 %v3529, %v3539
        %v3545 = vadd.f32 %v3530, %v3539
        %v3546 = vadd.f32 %v3531, %v3539
        %v3547 = vadd.f32 %v3532, %v3539
        %v3548 = vadd.f32 %v3533, %v3539
        %v3549 = vmax.f32 %v3541, 0.0
        %v3550 = vmax.f32 %v3542, 0.0
        %v3551 = vmax.f32 %v3543, 0.0
        %v3552 = vmax.f32 %v3544, 0.0
        %v3553 = vmax.f32 %v3545, 0.0
        %v3554 = vmax.f32 %v3546, 0.0
        %v3555 = vmax.f32 %v3547, 0.0
        %v3556 = vmax.f32 %v3548, 0.0
        %v3557 = vadd.f32 %v1912, %v3549
        %v3558 = vadd.f32 %v1913, %v3550
        %v3559 = vadd.f32 %v1914, %v3551
        %v3560 = vadd.f32 %v1915, %v3552
        %v3561 = vadd.f32 %v1916, %v3553
        %v3562 = vadd.f32 %v1917, %v3554
        %v3563 = vadd.f32 %v1918, %v3555
        %v3564 = vadd.f32 %v1919, %v3556
        %3565 = vst [vmem:[#allocation2] sm:$0xff] %v3557
        %3566 = vst [vmem:[#allocation2 + $0x8] sm:$0xff] %v3558
        %3567 = vst [vmem:[#allocation2 + $0x10] sm:$0xff] %v3559
        %3568 = vst [vmem:[#allocation2 + $0x18] sm:$0xff] %v3560
        %3569 = vst [vmem:[#allocation2 + $0x20] sm:$0xff] %v3561
        %3570 = vst [vmem:[#allocation2 + $0x28] sm:$0xff] %v3562
        %3571 = vst [vmem:[#allocation2 + $0x30] sm:$0xff] %v3563
        %3572 = vst [vmem:[#allocation2 + $0x38] sm:$0xff] %v3564
        %3573 = vst [vmem:[#allocation3] sm:$0xff] %v3052
        %3574 = vst [vmem:[#allocation3 + $0x8] sm:$0xff] %v3053
        %3575 = vst [vmem:[#allocation3 + $0x10] sm:$0xff] %v3054
        %3576 = vst [vmem:[#allocation3 + $0x18] sm:$0xff] %v3055
        %3577 = vst [vmem:[#allocation3 + $0x20] sm:$0xff] %v3056
        %3578 = vst [vmem:[#allocation3 + $0x28] sm:$0xff] %v3057
        %3579 = vst [vmem:[#allocation3 + $0x30] sm:$0xff] %v3058
        %3580 = vst [vmem:[#allocation3 + $0x38] sm:$0xff] %v3059
        %3581 = vst [vmem:[#allocation3 + $0x40] sm:$0xff] %v3060
        %3582 = vst [vmem:[#allocation3 + $0x48] sm:$0xff] %v3061
        %3583 = vst [vmem:[#allocation3 + $0x50] sm:$0xff] %v3062
        %3584 = vst [vmem:[#allocation3 + $0x58] sm:$0xff] %v3063
        %3585 = vst [vmem:[#allocation3 + $0x60] sm:$0xff] %v3064
        %3586 = vst [vmem:[#allocation3 + $0x68] sm:$0xff] %v3065
        %3587 = vst [vmem:[#allocation3 + $0x70] sm:$0xff] %v3066
        %3588 = vst [vmem:[#allocation3 + $0x78] sm:$0xff] %v3067
        %p3589 = scmp.eq.s32.totalorder %s43, 1
        // Predicated region
        $region197: #{forward_pallas.1} parent=123 // pred_check
          %p3590 = pneg %p3589
        $region198: #{forward_pallas.1} parent=123 // pred_check_branch
          %3592 = sbr.rel (%p3590) target = $region200
        $region199: #{forward_pallas.1} parent=123 // pred_region
          %v3593 = vpack.c.bf16 %v3558, %v3557
          %v3594 = vpack.c.bf16 %v3560, %v3559
          %v3595 = vpack.c.bf16 %v3562, %v3561
          %v3596 = vpack.c.bf16 %v3564, %v3563
          %3597 = vmatprep.subr.bf16.mxu0 0
          %3598 = vmatpush1.bf16.msra.mxu0 %v3593
          %3599 = vmatprep.subr.bf16.mxu0 0
          %3600 = vmatpush1.bf16.msra.mxu0 %v3594
          %3601 = vmatprep.subr.bf16.mxu0 0
          %3602 = vmatpush1.bf16.msra.mxu0 %v3595
          %3603 = vmatprep.subr.bf16.mxu0 0
          %3604 = vmatpush1.bf16.msra.mxu0 %v3596
          %3605 = vmatprep.subr.bf16.mxu0 0
          %3606 = vmatpush1.bf16.msra.mxu0 0
          %3607 = vmatprep.subr.bf16.mxu0 0
          %3608 = vmatpush1.bf16.msra.mxu0 0
          %3609 = vmatprep.subr.bf16.mxu0 0
          %3610 = vmatpush1.bf16.msra.mxu0 0
          %3611 = vmatprep.subr.bf16.mxu0 0
          %3612 = vmatpush1.bf16.msra.mxu0 0
          %3613 = vmatprep.subr.bf16.mxu0 0
          %3614 = vmatpush1.bf16.msra.mxu0 0
          %3615 = vmatprep.subr.bf16.mxu0 0
          %3616 = vmatpush1.bf16.msra.mxu0 0
          %3617 = vmatprep.subr.bf16.mxu0 0
          %3618 = vmatpush1.bf16.msra.mxu0 0
          %3619 = vmatprep.subr.bf16.mxu0 0
          %3620 = vmatpush1.bf16.msra.mxu0 0
          %3621 = vmatprep.subr.bf16.mxu0 0
          %3622 = vmatpush1.bf16.msra.mxu0 0
          %3623 = vmatprep.subr.bf16.mxu0 0
          %3624 = vmatpush1.bf16.msra.mxu0 0
          %3625 = vmatprep.subr.bf16.mxu0 0
          %3626 = vmatpush1.bf16.msra.mxu0 0
          %3627 = vmatprep.subr.bf16.mxu0 0
          %3628 = vmatpush1.bf16.msra.mxu0 0
          %3629 = vmatprep.mubr.bf16.mxu0 0
          %3630 = vmatmul.mubr.bf16.gmra.mrb[0].mxu0 %v2492
          %v3631 = vpop.f32.mrb[0].mxu0
          %v3632 = vadd.f32 0.0, %v3631
          %v3633 = vpop.f32.mrb[0].mxu0
          %v3634 = vpop.f32.mrb[0].mxu0
          %v3635 = vadd.f32 0.0, %v3634
          %v3636 = vpop.f32.mrb[0].mxu0
          %3637 = vmatprep.mubr.bf16.mxu0 0
          %3638 = vmatmul.mubr.bf16.gmra.mrb[0].mxu0 %v2495
          %v3639 = vpop.f32.mrb[0].mxu0
          %v3640 = vadd.f32 0.0, %v3639
          %v3641 = vpop.f32.mrb[0].mxu0
          %v3642 = vpop.f32.mrb[0].mxu0
          %v3643 = vadd.f32 0.0, %v3642
          %v3644 = vpop.f32.mrb[0].mxu0
          %3645 = vmatprep.mubr.bf16.mxu0 0
          %3646 = vmatmul.mubr.bf16.gmra.mrb[0].mxu0 %v2498
          %v3647 = vpop.f32.mrb[0].mxu0
          %v3648 = vadd.f32 0.0, %v3647
          %v3649 = vpop.f32.mrb[0].mxu0
          %v3650 = vpop.f32.mrb[0].mxu0
          %v3651 = vadd.f32 0.0, %v3650
          %v3652 = vpop.f32.mrb[0].mxu0
          %3653 = vmatprep.mubr.bf16.mxu0 0
          %3654 = vmatmul.mubr.bf16.gmra.mrb[0].mxu0 %v2501
          %v3655 = vpop.f32.mrb[0].mxu0
          %v3656 = vadd.f32 0.0, %v3655
          %v3657 = vpop.f32.mrb[0].mxu0
          %v3658 = vpop.f32.mrb[0].mxu0
          %v3659 = vadd.f32 0.0, %v3658
          %v3660 = vpop.f32.mrb[0].mxu0
          %3661 = vmatprep.mubr.bf16.mxu0 0
          %3662 = vmatmul.mubr.bf16.gmra.mrb[0].mxu0 %v2504
          %v3663 = vpop.f32.mrb[0].mxu0
          %v3664 = vadd.f32 0.0, %v3663
          %v3665 = vpop.f32.mrb[0].mxu0
          %v3666 = vpop.f32.mrb[0].mxu0
          %v3667 = vadd.f32 0.0, %v3666
          %v3668 = vpop.f32.mrb[0].mxu0
          %3669 = vmatprep.mubr.bf16.mxu0 0
          %3670 = vmatmul.mubr.bf16.gmra.mrb[0].mxu0 %v2507
          %v3671 = vpop.f32.mrb[0].mxu0
          %v3672 = vadd.f32 0.0, %v3671
          %v3673 = vpop.f32.mrb[0].mxu0
          %v3674 = vpop.f32.mrb[0].mxu0
          %v3675 = vadd.f32 0.0, %v3674
          %v3676 = vpop.f32.mrb[0].mxu0
          %3677 = vmatprep.mubr.bf16.mxu0 0
          %3678 = vmatmul.mubr.bf16.gmra.mrb[0].mxu0 %v2510
          %v3679 = vpop.f32.mrb[0].mxu0
          %v3680 = vadd.f32 0.0, %v3679
          %v3681 = vpop.f32.mrb[0].mxu0
          %v3682 = vpop.f32.mrb[0].mxu0
          %v3683 = vadd.f32 0.0, %v3682
          %v3684 = vpop.f32.mrb[0].mxu0
          %3685 = vmatprep.mubr.bf16.mxu0 0
          %3686 = vmatmul.mubr.bf16.gmra.mrb[0].mxu0 %v2513
          %v3687 = vpop.f32.mrb[0].mxu0
          %v3688 = vadd.f32 0.0, %v3687
          %v3689 = vpop.f32.mrb[0].mxu0
          %v3690 = vpop.f32.mrb[0].mxu0
          %v3691 = vadd.f32 0.0, %v3690
          %v3692 = vpop.f32.mrb[0].mxu0
          %3693 = vdwg.mxu0
          %3694 = vmatprep.subr.bf16.mxu0 0
          %3695 = vmatpush1.bf16.msra.mxu0 %v3593
          %3696 = vmatprep.subr.bf16.mxu0 0
          %3697 = vmatpush1.bf16.msra.mxu0 %v3594
          %3698 = vmatprep.subr.bf16.mxu0 0
          %3699 = vmatpush1.bf16.msra.mxu0 %v3595
          %3700 = vmatprep.subr.bf16.mxu0 0
          %3701 = vmatpush1.bf16.msra.mxu0 %v3596
          %3702 = vmatprep.subr.bf16.mxu0 0
          %3703 = vmatpush1.bf16.msra.mxu0 0
          %3704 = vmatprep.subr.bf16.mxu0 0
          %3705 = vmatpush1.bf16.msra.mxu0 0
          %3706 = vmatprep.subr.bf16.mxu0 0
          %3707 = vmatpush1.bf16.msra.mxu0 0
          %3708 = vmatprep.subr.bf16.mxu0 0
          %3709 = vmatpush1.bf16.msra.mxu0 0
          %3710 = vmatprep.subr.bf16.mxu0 0
          %3711 = vmatpush1.bf16.msra.mxu0 0
          %3712 = vmatprep.subr.bf16.mxu0 0
          %3713 = vmatpush1.bf16.msra.mxu0 0
          %3714 = vmatprep.subr.bf16.mxu0 0
          %3715 = vmatpush1.bf16.msra.mxu0 0
          %3716 = vmatprep.subr.bf16.mxu0 0
          %3717 = vmatpush1.bf16.msra.mxu0 0
          %3718 = vmatprep.subr.bf16.mxu0 0
          %3719 = vmatpush1.bf16.msra.mxu0 0
          %3720 = vmatprep.subr.bf16.mxu0 0
          %3721 = vmatpush1.bf16.msra.mxu0 0
          %3722 = vmatprep.subr.bf16.mxu0 0
          %3723 = vmatpush1.bf16.msra.mxu0 0
          %3724 = vmatprep.subr.bf16.mxu0 0
          %3725 = vmatpush1.bf16.msra.mxu0 0
          %3726 = vmatprep.mubr.bf16.mxu0 0
          %3727 = vmatmul.mubr.bf16.gmra.mrb[0].mxu0 %v2669
          %v3728 = vpop.f32.mrb[0].mxu0
          %v3729 = vadd.f32 0.0, %v3728
          %v3730 = vpop.f32.mrb[0].mxu0
          %v3731 = vpop.f32.mrb[0].mxu0
          %v3732 = vadd.f32 0.0, %v3731
          %v3733 = vpop.f32.mrb[0].mxu0
          %3734 = vmatprep.mubr.bf16.mxu0 0
          %3735 = vmatmul.mubr.bf16.gmra.mrb[0].mxu0 %v2672
          %v3736 = vpop.f32.mrb[0].mxu0
          %v3737 = vadd.f32 0.0, %v3736
          %v3738 = vpop.f32.mrb[0].mxu0
          %v3739 = vpop.f32.mrb[0].mxu0
          %v3740 = vadd.f32 0.0, %v3739
          %v3741 = vpop.f32.mrb[0].mxu0
          %3742 = vmatprep.mubr.bf16.mxu0 0
          %3743 = vmatmul.mubr.bf16.gmra.mrb[0].mxu0 %v2675
          %v3744 = vpop.f32.mrb[0].mxu0
          %v3745 = vadd.f32 0.0, %v3744
          %v3746 = vpop.f32.mrb[0].mxu0
          %v3747 = vpop.f32.mrb[0].mxu0
          %v3748 = vadd.f32 0.0, %v3747
          %v3749 = vpop.f32.mrb[0].mxu0
          %3750 = vmatprep.mubr.bf16.mxu0 0
          %3751 = vmatmul.mubr.bf16.gmra.mrb[0].mxu0 %v2678
          %v3752 = vpop.f32.mrb[0].mxu0
          %v3753 = vadd.f32 0.0, %v3752
          %v3754 = vpop.f32.mrb[0].mxu0
          %v3755 = vpop.f32.mrb[0].mxu0
          %v3756 = vadd.f32 0.0, %v3755
          %v3757 = vpop.f32.mrb[0].mxu0
          %3758 = vmatprep.mubr.bf16.mxu0 0
          %3759 = vmatmul.mubr.bf16.gmra.mrb[0].mxu0 %v2681
          %v3760 = vpop.f32.mrb[0].mxu0
          %v3761 = vadd.f32 0.0, %v3760
          %v3762 = vpop.f32.mrb[0].mxu0
          %v3763 = vpop.f32.mrb[0].mxu0
          %v3764 = vadd.f32 0.0, %v3763
          %v3765 = vpop.f32.mrb[0].mxu0
          %3766 = vmatprep.mubr.bf16.mxu0 0
          %3767 = vmatmul.mubr.bf16.gmra.mrb[0].mxu0 %v2684
          %v3768 = vpop.f32.mrb[0].mxu0
          %v3769 = vadd.f32 0.0, %v3768
          %v3770 = vpop.f32.mrb[0].mxu0
          %v3771 = vpop.f32.mrb[0].mxu0
          %v3772 = vadd.f32 0.0, %v3771
          %v3773 = vpop.f32.mrb[0].mxu0
          %3774 = vmatprep.mubr.bf16.mxu0 0
          %3775 = vmatmul.mubr.bf16.gmra.mrb[0].mxu0 %v2687
          %v3776 = vpop.f32.mrb[0].mxu0
          %v3777 = vadd.f32 0.0, %v3776
          %v3778 = vpop.f32.mrb[0].mxu0
          %v3779 = vpop.f32.mrb[0].mxu0
          %v3780 = vadd.f32 0.0, %v3779
          %v3781 = vpop.f32.mrb[0].mxu0
          %3782 = vmatprep.mubr.bf16.mxu0 0
          %3783 = vmatmul.mubr.bf16.gmra.mrb[0].mxu0 %v2690
          %v3784 = vpop.f32.mrb[0].mxu0
          %v3785 = vadd.f32 0.0, %v3784
          %v3786 = vpop.f32.mrb[0].mxu0
          %v3787 = vpop.f32.mrb[0].mxu0
          %v3788 = vadd.f32 0.0, %v3787
          %v3789 = vpop.f32.mrb[0].mxu0
          %3790 = vdwg.mxu0
          %v3791 = vpack.c.bf16 %v3635, %v3632
          %v3792 = vpack.c.bf16 %v3643, %v3640
          %v3793 = vpack.c.bf16 %v3651, %v3648
          %v3794 = vpack.c.bf16 %v3659, %v3656
          %v3795 = vpack.c.bf16 %v3667, %v3664
          %v3796 = vpack.c.bf16 %v3675, %v3672
          %v3797 = vpack.c.bf16 %v3683, %v3680
          %v3798 = vpack.c.bf16 %v3691, %v3688
          %v3799 = vld [vmem:[%s20] sm:$0xf]
          %v3800 = vld [vmem:[%s20 + $0x4] sm:$0xf]
          %v3801 = vld [vmem:[%s20 + $0x8] sm:$0xf]
          %v3802 = vld [vmem:[%s20 + $0xc] sm:$0xf]
          %v3803 = vld [vmem:[%s20 + $0x10] sm:$0xf]
          %v3804 = vld [vmem:[%s20 + $0x14] sm:$0xf]
          %v3805 = vld [vmem:[%s20 + $0x18] sm:$0xf]
          %v3806 = vld [vmem:[%s20 + $0x1c] sm:$0xf]
          %v3807 = vld [vmem:[%s20 + $0x20] sm:$0xf]
          %v3808 = vld [vmem:[%s20 + $0x24] sm:$0xf]
          %v3809 = vld [vmem:[%s20 + $0x28] sm:$0xf]
          %v3810 = vld [vmem:[%s20 + $0x2c] sm:$0xf]
          %v3811 = vld [vmem:[%s20 + $0x30] sm:$0xf]
          %v3812 = vld [vmem:[%s20 + $0x34] sm:$0xf]
          %v3813 = vld [vmem:[%s20 + $0x38] sm:$0xf]
          %v3814 = vld [vmem:[%s20 + $0x3c] sm:$0xf]
          %v3815 = vpack.c.bf16 %v3732, %v3729
          %v3816 = vpack.c.bf16 %v3740, %v3737
          %v3817 = vpack.c.bf16 %v3748, %v3745
          %v3818 = vpack.c.bf16 %v3756, %v3753
          %v3819 = vpack.c.bf16 %v3764, %v3761
          %v3820 = vpack.c.bf16 %v3772, %v3769
          %v3821 = vpack.c.bf16 %v3780, %v3777
          %v3822 = vpack.c.bf16 %v3788, %v3785
          %v3823 = vld [vmem:[%s21] sm:$0xf]
          %v3824 = vld [vmem:[%s21 + $0x4] sm:$0xf]
          %v3825 = vld [vmem:[%s21 + $0x8] sm:$0xf]
          %v3826 = vld [vmem:[%s21 + $0xc] sm:$0xf]
          %v3827 = vld [vmem:[%s21 + $0x10] sm:$0xf]
          %v3828 = vld [vmem:[%s21 + $0x14] sm:$0xf]
          %v3829 = vld [vmem:[%s21 + $0x18] sm:$0xf]
          %v3830 = vld [vmem:[%s21 + $0x1c] sm:$0xf]
          %v3831 = vld [vmem:[%s21 + $0x20] sm:$0xf]
          %v3832 = vld [vmem:[%s21 + $0x24] sm:$0xf]
          %v3833 = vld [vmem:[%s21 + $0x28] sm:$0xf]
          %v3834 = vld [vmem:[%s21 + $0x2c] sm:$0xf]
          %v3835 = vld [vmem:[%s21 + $0x30] sm:$0xf]
          %v3836 = vld [vmem:[%s21 + $0x34] sm:$0xf]
          %v3837 = vld [vmem:[%s21 + $0x38] sm:$0xf]
          %v3838 = vld [vmem:[%s21 + $0x3c] sm:$0xf]
          %v3855 = vunpack.c.l.b16 %v3823
          %v3856 = vunpack.c.l.b16 %v3824
          %v3857 = vunpack.c.l.b16 %v3825
          %v3858 = vunpack.c.l.b16 %v3826
          %v3859 = vunpack.c.l.b16 %v3827
          %v3860 = vunpack.c.l.b16 %v3828
          %v3861 = vunpack.c.l.b16 %v3829
          %v3862 = vunpack.c.l.b16 %v3830
          %v3863 = vunpack.c.l.b16 %v3831
          %v3864 = vunpack.c.l.b16 %v3832
          %v3865 = vunpack.c.l.b16 %v3833
          %v3866 = vunpack.c.l.b16 %v3834
          %v3867 = vunpack.c.l.b16 %v3835
          %v3868 = vunpack.c.l.b16 %v3836
          %v3869 = vunpack.c.l.b16 %v3837
          %v3870 = vunpack.c.l.b16 %v3838
          %v3871 = vpack.c.b16 %v3856, %v3855
          %v3872 = vpack.c.b16 %v3858, %v3857
          %v3873 = vpack.c.b16 %v3860, %v3859
          %v3874 = vpack.c.b16 %v3862, %v3861
          %v3875 = vpack.c.b16 %v3864, %v3863
          %v3876 = vpack.c.b16 %v3866, %v3865
          %v3877 = vpack.c.b16 %v3868, %v3867
          %v3878 = vpack.c.b16 %v3870, %v3869
          %3887 = vmatprep.subr.bf16.mxu0 0
          %3888 = vmatpush1.bf16.msra.mxu0 %v3871
          %3889 = vmatprep.subr.bf16.mxu0 0
          %3890 = vmatpush1.bf16.msra.mxu0 %v3872
          %3891 = vmatprep.subr.bf16.mxu0 0
          %3892 = vmatpush1.bf16.msra.mxu0 %v3873
          %3893 = vmatprep.subr.bf16.mxu0 0
          %3894 = vmatpush1.bf16.msra.mxu0 %v3874
          %3895 = vmatprep.subr.bf16.mxu0 0
          %3896 = vmatpush1.bf16.msra.mxu0 %v3875
          %3897 = vmatprep.subr.bf16.mxu0 0
          %3898 = vmatpush1.bf16.msra.mxu0 %v3876
          %3899 = vmatprep.subr.bf16.mxu0 0
          %3900 = vmatpush1.bf16.msra.mxu0 %v3877
          %3901 = vmatprep.subr.bf16.mxu0 0
          %3902 = vmatpush1.bf16.msra.mxu0 %v3878
          %3903 = vmatprep.subr.bf16.mxu0 0
          %3904 = vmatpush1.bf16.msra.mxu0 0
          %3905 = vmatprep.subr.bf16.mxu0 0
          %3906 = vmatpush1.bf16.msra.mxu0 0
          %3907 = vmatprep.subr.bf16.mxu0 0
          %3908 = vmatpush1.bf16.msra.mxu0 0
          %3909 = vmatprep.subr.bf16.mxu0 0
          %3910 = vmatpush1.bf16.msra.mxu0 0
          %3911 = vmatprep.subr.bf16.mxu0 0
          %3912 = vmatpush1.bf16.msra.mxu0 0
          %3913 = vmatprep.subr.bf16.mxu0 0
          %3914 = vmatpush1.bf16.msra.mxu0 0
          %3915 = vmatprep.subr.bf16.mxu0 0
          %3916 = vmatpush1.bf16.msra.mxu0 0
          %3917 = vmatprep.subr.bf16.mxu0 0
          %3918 = vmatpush1.bf16.msra.mxu0 0
          %3919 = vmatprep.mubr.bf16.mxu0 0
          %3920 = vmatmul.mubr.bf16.gmra.mrb[0].mxu0 %v3815
          %v3921 = vpop.f32.mrb[0].mxu0
          %v3922 = vadd.f32 0.0, %v3921
          %v3923 = vpop.f32.mrb[0].mxu0
          %v3924 = vpop.f32.mrb[0].mxu0
          %v3925 = vadd.f32 0.0, %v3924
          %v3926 = vpop.f32.mrb[0].mxu0
          %3927 = vmatprep.mubr.bf16.mxu0 0
          %3928 = vmatmul.mubr.bf16.gmra.mrb[0].mxu0 %v3816
          %v3929 = vpop.f32.mrb[0].mxu0
          %v3930 = vadd.f32 0.0, %v3929
          %v3931 = vpop.f32.mrb[0].mxu0
          %v3932 = vpop.f32.mrb[0].mxu0
          %v3933 = vadd.f32 0.0, %v3932
          %v3934 = vpop.f32.mrb[0].mxu0
          %3935 = vmatprep.mubr.bf16.mxu0 0
          %3936 = vmatmul.mubr.bf16.gmra.mrb[0].mxu0 %v3817
          %v3937 = vpop.f32.mrb[0].mxu0
          %v3938 = vadd.f32 0.0, %v3937
          %v3939 = vpop.f32.mrb[0].mxu0
          %v3940 = vpop.f32.mrb[0].mxu0
          %v3941 = vadd.f32 0.0, %v3940
          %v3942 = vpop.f32.mrb[0].mxu0
          %3943 = vmatprep.mubr.bf16.mxu0 0
          %3944 = vmatmul.mubr.bf16.gmra.mrb[0].mxu0 %v3818
          %v3945 = vpop.f32.mrb[0].mxu0
          %v3946 = vadd.f32 0.0, %v3945
          %v3947 = vpop.f32.mrb[0].mxu0
          %v3948 = vpop.f32.mrb[0].mxu0
          %v3949 = vadd.f32 0.0, %v3948
          %v3950 = vpop.f32.mrb[0].mxu0
          %3951 = vmatprep.mubr.bf16.mxu0 0
          %3952 = vmatmul.mubr.bf16.gmra.mrb[0].mxu0 %v3819
          %v3953 = vpop.f32.mrb[0].mxu0
          %v3954 = vadd.f32 0.0, %v3953
          %v3955 = vpop.f32.mrb[0].mxu0
          %v3956 = vpop.f32.mrb[0].mxu0
          %v3957 = vadd.f32 0.0, %v3956
          %v3958 = vpop.f32.mrb[0].mxu0
          %3959 = vmatprep.mubr.bf16.mxu0 0
          %3960 = vmatmul.mubr.bf16.gmra.mrb[0].mxu0 %v3820
          %v3961 = vpop.f32.mrb[0].mxu0
          %v3962 = vadd.f32 0.0, %v3961
          %v3963 = vpop.f32.mrb[0].mxu0
          %v3964 = vpop.f32.mrb[0].mxu0
          %v3965 = vadd.f32 0.0, %v3964
          %v3966 = vpop.f32.mrb[0].mxu0
          %3967 = vmatprep.mubr.bf16.mxu0 0
          %3968 = vmatmul.mubr.bf16.gmra.mrb[0].mxu0 %v3821
          %v3969 = vpop.f32.mrb[0].mxu0
          %v3970 = vadd.f32 0.0, %v3969
          %v3971 = vpop.f32.mrb[0].mxu0
          %v3972 = vpop.f32.mrb[0].mxu0
          %v3973 = vadd.f32 0.0, %v3972
          %v3974 = vpop.f32.mrb[0].mxu0
          %3975 = vmatprep.mubr.bf16.mxu0 0
          %3976 = vmatmul.mubr.bf16.gmra.mrb[0].mxu0 %v3822
          %v3977 = vpop.f32.mrb[0].mxu0
          %v3978 = vadd.f32 0.0, %v3977
          %v3979 = vpop.f32.mrb[0].mxu0
          %v3980 = vpop.f32.mrb[0].mxu0
          %v3981 = vadd.f32 0.0, %v3980
          %v3982 = vpop.f32.mrb[0].mxu0
          %3983 = vdwg.mxu0
          %v4000 = vunpack.c.l.b16 %v3799
          %v4001 = vunpack.c.l.b16 %v3800
          %v4002 = vunpack.c.l.b16 %v3801
          %v4003 = vunpack.c.l.b16 %v3802
          %v4004 = vunpack.c.l.b16 %v3803
          %v4005 = vunpack.c.l.b16 %v3804
          %v4006 = vunpack.c.l.b16 %v3805
          %v4007 = vunpack.c.l.b16 %v3806
          %v4008 = vunpack.c.l.b16 %v3807
          %v4009 = vunpack.c.l.b16 %v3808
          %v4010 = vunpack.c.l.b16 %v3809
          %v4011 = vunpack.c.l.b16 %v3810
          %v4012 = vunpack.c.l.b16 %v3811
          %v4013 = vunpack.c.l.b16 %v3812
          %v4014 = vunpack.c.l.b16 %v3813
          %v4015 = vunpack.c.l.b16 %v3814
          %v4016 = vpack.c.b16 %v4001, %v4000
          %v4017 = vpack.c.b16 %v4003, %v4002
          %v4018 = vpack.c.b16 %v4005, %v4004
          %v4019 = vpack.c.b16 %v4007, %v4006
          %v4020 = vpack.c.b16 %v4009, %v4008
          %v4021 = vpack.c.b16 %v4011, %v4010
          %v4022 = vpack.c.b16 %v4013, %v4012
          %v4023 = vpack.c.b16 %v4015, %v4014
          %4032 = vmatprep.subr.bf16.mxu0 0
          %4033 = vmatpush1.bf16.msra.mxu0 %v4016
          %4034 = vmatprep.subr.bf16.mxu0 0
          %4035 = vmatpush1.bf16.msra.mxu0 %v4017
          %4036 = vmatprep.subr.bf16.mxu0 0
          %4037 = vmatpush1.bf16.msra.mxu0 %v4018
          %4038 = vmatprep.subr.bf16.mxu0 0
          %4039 = vmatpush1.bf16.msra.mxu0 %v4019
          %4040 = vmatprep.subr.bf16.mxu0 0
          %4041 = vmatpush1.bf16.msra.mxu0 %v4020
          %4042 = vmatprep.subr.bf16.mxu0 0
          %4043 = vmatpush1.bf16.msra.mxu0 %v4021
          %4044 = vmatprep.subr.bf16.mxu0 0
          %4045 = vmatpush1.bf16.msra.mxu0 %v4022
          %4046 = vmatprep.subr.bf16.mxu0 0
          %4047 = vmatpush1.bf16.msra.mxu0 %v4023
          %4048 = vmatprep.subr.bf16.mxu0 0
          %4049 = vmatpush1.bf16.msra.mxu0 0
          %4050 = vmatprep.subr.bf16.mxu0 0
          %4051 = vmatpush1.bf16.msra.mxu0 0
          %4052 = vmatprep.subr.bf16.mxu0 0
          %4053 = vmatpush1.bf16.msra.mxu0 0
          %4054 = vmatprep.subr.bf16.mxu0 0
          %4055 = vmatpush1.bf16.msra.mxu0 0
          %4056 = vmatprep.subr.bf16.mxu0 0
          %4057 = vmatpush1.bf16.msra.mxu0 0
          %4058 = vmatprep.subr.bf16.mxu0 0
          %4059 = vmatpush1.bf16.msra.mxu0 0
          %4060 = vmatprep.subr.bf16.mxu0 0
          %4061 = vmatpush1.bf16.msra.mxu0 0
          %4062 = vmatprep.subr.bf16.mxu0 0
          %4063 = vmatpush1.bf16.msra.mxu0 0
          %4064 = vmatprep.mubr.bf16.mxu0 0
          %4065 = vmatmul.mubr.bf16.gmra.mrb[0].mxu0 %v3791
          %v4066 = vpop.f32.mrb[0].mxu0
          %v4067 = vadd.f32 %v3922, %v4066
          %v4068 = vpop.f32.mrb[0].mxu0
          %v4069 = vpop.f32.mrb[0].mxu0
          %v4070 = vadd.f32 %v3925, %v4069
          %v4071 = vpop.f32.mrb[0].mxu0
          %4072 = vmatprep.mubr.bf16.mxu0 0
          %4073 = vmatmul.mubr.bf16.gmra.mrb[0].mxu0 %v3792
          %v4074 = vpop.f32.mrb[0].mxu0
          %v4075 = vadd.f32 %v3930, %v4074
          %v4076 = vpop.f32.mrb[0].mxu0
          %v4077 = vpop.f32.mrb[0].mxu0
          %v4078 = vadd.f32 %v3933, %v4077
          %v4079 = vpop.f32.mrb[0].mxu0
          %4080 = vmatprep.mubr.bf16.mxu0 0
          %4081 = vmatmul.mubr.bf16.gmra.mrb[0].mxu0 %v3793
          %v4082 = vpop.f32.mrb[0].mxu0
          %v4083 = vadd.f32 %v3938, %v4082
          %v4084 = vpop.f32.mrb[0].mxu0
          %v4085 = vpop.f32.mrb[0].mxu0
          %v4086 = vadd.f32 %v3941, %v4085
          %v4087 = vpop.f32.mrb[0].mxu0
          %4088 = vmatprep.mubr.bf16.mxu0 0
          %4089 = vmatmul.mubr.bf16.gmra.mrb[0].mxu0 %v3794
          %v4090 = vpop.f32.mrb[0].mxu0
          %v4091 = vadd.f32 %v3946, %v4090
          %v4092 = vpop.f32.mrb[0].mxu0
          %v4093 = vpop.f32.mrb[0].mxu0
          %v4094 = vadd.f32 %v3949, %v4093
          %v4095 = vpop.f32.mrb[0].mxu0
          %4096 = vmatprep.mubr.bf16.mxu0 0
          %4097 = vmatmul.mubr.bf16.gmra.mrb[0].mxu0 %v3795
          %v4098 = vpop.f32.mrb[0].mxu0
          %v4099 = vadd.f32 %v3954, %v4098
          %v4100 = vpop.f32.mrb[0].mxu0
          %v4101 = vpop.f32.mrb[0].mxu0
          %v4102 = vadd.f32 %v3957, %v4101
          %v4103 = vpop.f32.mrb[0].mxu0
          %4104 = vmatprep.mubr.bf16.mxu0 0
          %4105 = vmatmul.mubr.bf16.gmra.mrb[0].mxu0 %v3796
          %v4106 = vpop.f32.mrb[0].mxu0
          %v4107 = vadd.f32 %v3962, %v4106
          %v4108 = vpop.f32.mrb[0].mxu0
          %v4109 = vpop.f32.mrb[0].mxu0
          %v4110 = vadd.f32 %v3965, %v4109
          %v4111 = vpop.f32.mrb[0].mxu0
          %4112 = vmatprep.mubr.bf16.mxu0 0
          %4113 = vmatmul.mubr.bf16.gmra.mrb[0].mxu0 %v3797
          %v4114 = vpop.f32.mrb[0].mxu0
          %v4115 = vadd.f32 %v3970, %v4114
          %v4116 = vpop.f32.mrb[0].mxu0
          %v4117 = vpop.f32.mrb[0].mxu0
          %v4118 = vadd.f32 %v3973, %v4117
          %v4119 = vpop.f32.mrb[0].mxu0
          %4120 = vmatprep.mubr.bf16.mxu0 0
          %4121 = vmatmul.mubr.bf16.gmra.mrb[0].mxu0 %v3798
          %v4122 = vpop.f32.mrb[0].mxu0
          %v4123 = vadd.f32 %v3978, %v4122
          %v4124 = vpop.f32.mrb[0].mxu0
          %v4125 = vpop.f32.mrb[0].mxu0
          %v4126 = vadd.f32 %v3981, %v4125
          %v4127 = vpop.f32.mrb[0].mxu0
          %4128 = vdwg.mxu0
          %v4129 = vpack.c.bf16 %v3053, %v3052
          %v4130 = vpack.c.bf16 %v3055, %v3054
          %v4131 = vpack.c.bf16 %v3057, %v3056
          %v4132 = vpack.c.bf16 %v3059, %v3058
          %v4133 = vpack.c.bf16 %v3061, %v3060
          %v4134 = vpack.c.bf16 %v3063, %v3062
          %v4135 = vpack.c.bf16 %v3065, %v3064
          %v4136 = vpack.c.bf16 %v3067, %v3066
          %v4137 = vld [vmem:[%s22] sm:$0xf]
          %v4138 = vld [vmem:[%s22 + $0x4] sm:$0xf]
          %v4139 = vld [vmem:[%s22 + $0x8] sm:$0xf]
          %v4140 = vld [vmem:[%s22 + $0xc] sm:$0xf]
          %v4141 = vld [vmem:[%s22 + $0x10] sm:$0xf]
          %v4142 = vld [vmem:[%s22 + $0x14] sm:$0xf]
          %v4143 = vld [vmem:[%s22 + $0x18] sm:$0xf]
          %v4144 = vld [vmem:[%s22 + $0x1c] sm:$0xf]
          %v4145 = vld [vmem:[%s22 + $0x20] sm:$0xf]
          %v4146 = vld [vmem:[%s22 + $0x24] sm:$0xf]
          %v4147 = vld [vmem:[%s22 + $0x28] sm:$0xf]
          %v4148 = vld [vmem:[%s22 + $0x2c] sm:$0xf]
          %v4149 = vld [vmem:[%s22 + $0x30] sm:$0xf]
          %v4150 = vld [vmem:[%s22 + $0x34] sm:$0xf]
          %v4151 = vld [vmem:[%s22 + $0x38] sm:$0xf]
          %v4152 = vld [vmem:[%s22 + $0x3c] sm:$0xf]
          %v4169 = vunpack.c.l.b16 %v4137
          %v4170 = vunpack.c.l.b16 %v4138
          %v4171 = vunpack.c.l.b16 %v4139
          %v4172 = vunpack.c.l.b16 %v4140
          %v4173 = vunpack.c.l.b16 %v4141
          %v4174 = vunpack.c.l.b16 %v4142
          %v4175 = vunpack.c.l.b16 %v4143
          %v4176 = vunpack.c.l.b16 %v4144
          %v4177 = vunpack.c.l.b16 %v4145
          %v4178 = vunpack.c.l.b16 %v4146
          %v4179 = vunpack.c.l.b16 %v4147
          %v4180 = vunpack.c.l.b16 %v4148
          %v4181 = vunpack.c.l.b16 %v4149
          %v4182 = vunpack.c.l.b16 %v4150
          %v4183 = vunpack.c.l.b16 %v4151
          %v4184 = vunpack.c.l.b16 %v4152
          %v4185 = vpack.c.b16 %v4170, %v4169
          %v4186 = vpack.c.b16 %v4172, %v4171
          %v4187 = vpack.c.b16 %v4174, %v4173
          %v4188 = vpack.c.b16 %v4176, %v4175
          %v4189 = vpack.c.b16 %v4178, %v4177
          %v4190 = vpack.c.b16 %v4180, %v4179
          %v4191 = vpack.c.b16 %v4182, %v4181
          %v4192 = vpack.c.b16 %v4184, %v4183
          %4201 = vmatprep.subr.bf16.mxu0 0
          %4202 = vmatpush1.bf16.msra.mxu0 %v4185
          %4203 = vmatprep.subr.bf16.mxu0 0
          %4204 = vmatpush1.bf16.msra.mxu0 %v4186
          %4205 = vmatprep.subr.bf16.mxu0 0
          %4206 = vmatpush1.bf16.msra.mxu0 %v4187
          %4207 = vmatprep.subr.bf16.mxu0 0
          %4208 = vmatpush1.bf16.msra.mxu0 %v4188
          %4209 = vmatprep.subr.bf16.mxu0 0
          %4210 = vmatpush1.bf16.msra.mxu0 %v4189
          %4211 = vmatprep.subr.bf16.mxu0 0
          %4212 = vmatpush1.bf16.msra.mxu0 %v4190
          %4213 = vmatprep.subr.bf16.mxu0 0
          %4214 = vmatpush1.bf16.msra.mxu0 %v4191
          %4215 = vmatprep.subr.bf16.mxu0 0
          %4216 = vmatpush1.bf16.msra.mxu0 %v4192
          %4217 = vmatprep.subr.bf16.mxu0 0
          %4218 = vmatpush1.bf16.msra.mxu0 0
          %4219 = vmatprep.subr.bf16.mxu0 0
          %4220 = vmatpush1.bf16.msra.mxu0 0
          %4221 = vmatprep.subr.bf16.mxu0 0
          %4222 = vmatpush1.bf16.msra.mxu0 0
          %4223 = vmatprep.subr.bf16.mxu0 0
          %4224 = vmatpush1.bf16.msra.mxu0 0
          %4225 = vmatprep.subr.bf16.mxu0 0
          %4226 = vmatpush1.bf16.msra.mxu0 0
          %4227 = vmatprep.subr.bf16.mxu0 0
          %4228 = vmatpush1.bf16.msra.mxu0 0
          %4229 = vmatprep.subr.bf16.mxu0 0
          %4230 = vmatpush1.bf16.msra.mxu0 0
          %4231 = vmatprep.subr.bf16.mxu0 0
          %4232 = vmatpush1.bf16.msra.mxu0 0
          %4233 = vmatprep.mubr.bf16.mxu0 0
          %4234 = vmatmul.mubr.bf16.gmra.mrb[0].mxu0 %v4129
          %v4235 = vpop.f32.mrb[0].mxu0
          %v4236 = vadd.f32 0.0, %v4235
          %v4237 = vpop.f32.mrb[0].mxu0
          %v4238 = vpop.f32.mrb[0].mxu0
          %v4239 = vadd.f32 0.0, %v4238
          %v4240 = vpop.f32.mrb[0].mxu0
          %4241 = vmatprep.mubr.bf16.mxu0 0
          %4242 = vmatmul.mubr.bf16.gmra.mrb[0].mxu0 %v4130
          %v4243 = vpop.f32.mrb[0].mxu0
          %v4244 = vadd.f32 0.0, %v4243
          %v4245 = vpop.f32.mrb[0].mxu0
          %v4246 = vpop.f32.mrb[0].mxu0
          %v4247 = vadd.f32 0.0, %v4246
          %v4248 = vpop.f32.mrb[0].mxu0
          %4249 = vmatprep.mubr.bf16.mxu0 0
          %4250 = vmatmul.mubr.bf16.gmra.mrb[0].mxu0 %v4131
          %v4251 = vpop.f32.mrb[0].mxu0
          %v4252 = vadd.f32 0.0, %v4251
          %v4253 = vpop.f32.mrb[0].mxu0
          %v4254 = vpop.f32.mrb[0].mxu0
          %v4255 = vadd.f32 0.0, %v4254
          %v4256 = vpop.f32.mrb[0].mxu0
          %4257 = vmatprep.mubr.bf16.mxu0 0
          %4258 = vmatmul.mubr.bf16.gmra.mrb[0].mxu0 %v4132
          %v4259 = vpop.f32.mrb[0].mxu0
          %v4260 = vadd.f32 0.0, %v4259
          %v4261 = vpop.f32.mrb[0].mxu0
          %v4262 = vpop.f32.mrb[0].mxu0
          %v4263 = vadd.f32 0.0, %v4262
          %v4264 = vpop.f32.mrb[0].mxu0
          %4265 = vmatprep.mubr.bf16.mxu0 0
          %4266 = vmatmul.mubr.bf16.gmra.mrb[0].mxu0 %v4133
          %v4267 = vpop.f32.mrb[0].mxu0
          %v4268 = vadd.f32 0.0, %v4267
          %v4269 = vpop.f32.mrb[0].mxu0
          %v4270 = vpop.f32.mrb[0].mxu0
          %v4271 = vadd.f32 0.0, %v4270
          %v4272 = vpop.f32.mrb[0].mxu0
          %4273 = vmatprep.mubr.bf16.mxu0 0
          %4274 = vmatmul.mubr.bf16.gmra.mrb[0].mxu0 %v4134
          %v4275 = vpop.f32.mrb[0].mxu0
          %v4276 = vadd.f32 0.0, %v4275
          %v4277 = vpop.f32.mrb[0].mxu0
          %v4278 = vpop.f32.mrb[0].mxu0
          %v4279 = vadd.f32 0.0, %v4278
          %v4280 = vpop.f32.mrb[0].mxu0
          %4281 = vmatprep.mubr.bf16.mxu0 0
          %4282 = vmatmul.mubr.bf16.gmra.mrb[0].mxu0 %v4135
          %v4283 = vpop.f32.mrb[0].mxu0
          %v4284 = vadd.f32 0.0, %v4283
          %v4285 = vpop.f32.mrb[0].mxu0
          %v4286 = vpop.f32.mrb[0].mxu0
          %v4287 = vadd.f32 0.0, %v4286
          %v4288 = vpop.f32.mrb[0].mxu0
          %4289 = vmatprep.mubr.bf16.mxu0 0
          %4290 = vmatmul.mubr.bf16.gmra.mrb[0].mxu0 %v4136
          %v4291 = vpop.f32.mrb[0].mxu0
          %v4292 = vadd.f32 0.0, %v4291
          %v4293 = vpop.f32.mrb[0].mxu0
          %v4294 = vpop.f32.mrb[0].mxu0
          %v4295 = vadd.f32 0.0, %v4294
          %v4296 = vpop.f32.mrb[0].mxu0
          %4297 = vdwg.mxu0
          %v4298 = vadd.f32 %v4067, %v4236
          %v4299 = vadd.f32 %v4070, %v4239
          %v4300 = vadd.f32 %v4075, %v4244
          %v4301 = vadd.f32 %v4078, %v4247
          %v4302 = vadd.f32 %v4083, %v4252
          %v4303 = vadd.f32 %v4086, %v4255
          %v4304 = vadd.f32 %v4091, %v4260
          %v4305 = vadd.f32 %v4094, %v4263
          %v4306 = vadd.f32 %v4099, %v4268
          %v4307 = vadd.f32 %v4102, %v4271
          %v4308 = vadd.f32 %v4107, %v4276
          %v4309 = vadd.f32 %v4110, %v4279
          %v4310 = vadd.f32 %v4115, %v4284
          %v4311 = vadd.f32 %v4118, %v4287
          %v4312 = vadd.f32 %v4123, %v4292
          %v4313 = vadd.f32 %v4126, %v4295
          %v4314 = vld [vmem:[#allocation26] sm:$0x1]
          %v4316 = vlaneseq
          %v4317 = vshrl.u32 %v4316, 7
          %v4318 = vsub.s32 0, %v4317
          %v4319 = vrot.slane %v4314, %v4318
          %v4321 = vadd.f32 %v4298, %v4319
          %v4322 = vadd.f32 %v4299, %v4319
          %v4323 = vadd.f32 %v4300, %v4319
          %v4324 = vadd.f32 %v4301, %v4319
          %v4325 = vadd.f32 %v4302, %v4319
          %v4326 = vadd.f32 %v4303, %v4319
          %v4327 = vadd.f32 %v4304, %v4319
          %v4328 = vadd.f32 %v4305, %v4319
          %v4329 = vadd.f32 %v4306, %v4319
          %v4330 = vadd.f32 %v4307, %v4319
          %v4331 = vadd.f32 %v4308, %v4319
          %v4332 = vadd.f32 %v4309, %v4319
          %v4333 = vadd.f32 %v4310, %v4319
          %v4334 = vadd.f32 %v4311, %v4319
          %v4335 = vadd.f32 %v4312, %v4319
          %v4336 = vadd.f32 %v4313, %v4319
          %v4337 = vmax.f32 %v4321, 0.0
          %v4338 = vmax.f32 %v4322, 0.0
          %v4339 = vmax.f32 %v4323, 0.0
          %v4340 = vmax.f32 %v4324, 0.0
          %v4341 = vmax.f32 %v4325, 0.0
          %v4342 = vmax.f32 %v4326, 0.0
          %v4343 = vmax.f32 %v4327, 0.0
          %v4344 = vmax.f32 %v4328, 0.0
          %v4345 = vmax.f32 %v4329, 0.0
          %v4346 = vmax.f32 %v4330, 0.0
          %v4347 = vmax.f32 %v4331, 0.0
          %v4348 = vmax.f32 %v4332, 0.0
          %v4349 = vmax.f32 %v4333, 0.0
          %v4350 = vmax.f32 %v4334, 0.0
          %v4351 = vmax.f32 %v4335, 0.0
          %v4352 = vmax.f32 %v4336, 0.0
          %v4353 = vpack.c.bf16 %v4338, %v4337
          %v4354 = vpack.c.bf16 %v4340, %v4339
          %v4355 = vpack.c.bf16 %v4342, %v4341
          %v4356 = vpack.c.bf16 %v4344, %v4343
          %v4357 = vpack.c.bf16 %v4346, %v4345
          %v4358 = vpack.c.bf16 %v4348, %v4347
          %v4359 = vpack.c.bf16 %v4350, %v4349
          %v4360 = vpack.c.bf16 %v4352, %v4351
          %v4361 = vld [vmem:[%s24] sm:$0xf]
          %v4362 = vld [vmem:[%s24 + $0x4] sm:$0xf]
          %v4363 = vld [vmem:[%s24 + $0x8] sm:$0xf]
          %v4364 = vld [vmem:[%s24 + $0xc] sm:$0xf]
          %v4365 = vld [vmem:[%s24 + $0x10] sm:$0xf]
          %v4366 = vld [vmem:[%s24 + $0x14] sm:$0xf]
          %v4367 = vld [vmem:[%s24 + $0x18] sm:$0xf]
          %v4368 = vld [vmem:[%s24 + $0x1c] sm:$0xf]
          %v4369 = vld [vmem:[%s24 + $0x20] sm:$0xf]
          %v4370 = vld [vmem:[%s24 + $0x24] sm:$0xf]
          %v4371 = vld [vmem:[%s24 + $0x28] sm:$0xf]
          %v4372 = vld [vmem:[%s24 + $0x2c] sm:$0xf]
          %v4373 = vld [vmem:[%s24 + $0x30] sm:$0xf]
          %v4374 = vld [vmem:[%s24 + $0x34] sm:$0xf]
          %v4375 = vld [vmem:[%s24 + $0x38] sm:$0xf]
          %v4376 = vld [vmem:[%s24 + $0x3c] sm:$0xf]
          %v4377 = vld [vmem:[#allocation27] sm:$0x1]
          %v4379 = vlaneseq
          %v4380 = vshrl.u32 %v4379, 7
          %v4381 = vsub.s32 0, %v4380
          %v4382 = vrot.slane %v4377, %v4381
          %v4400 = vunpack.c.l.b16 %v4361
          %v4401 = vunpack.c.l.b16 %v4362
          %v4402 = vunpack.c.l.b16 %v4363
          %v4403 = vunpack.c.l.b16 %v4364
          %v4404 = vunpack.c.l.b16 %v4365
          %v4405 = vunpack.c.l.b16 %v4366
          %v4406 = vunpack.c.l.b16 %v4367
          %v4407 = vunpack.c.l.b16 %v4368
          %v4408 = vunpack.c.l.b16 %v4369
          %v4409 = vunpack.c.l.b16 %v4370
          %v4410 = vunpack.c.l.b16 %v4371
          %v4411 = vunpack.c.l.b16 %v4372
          %v4412 = vunpack.c.l.b16 %v4373
          %v4413 = vunpack.c.l.b16 %v4374
          %v4414 = vunpack.c.l.b16 %v4375
          %v4415 = vunpack.c.l.b16 %v4376
          %v4416 = vpack.c.b16 %v4401, %v4400
          %v4417 = vpack.c.b16 %v4403, %v4402
          %v4418 = vpack.c.b16 %v4405, %v4404
          %v4419 = vpack.c.b16 %v4407, %v4406
          %v4420 = vpack.c.b16 %v4409, %v4408
          %v4421 = vpack.c.b16 %v4411, %v4410
          %v4422 = vpack.c.b16 %v4413, %v4412
          %v4423 = vpack.c.b16 %v4415, %v4414
          %4432 = vmatprep.subr.bf16.mxu0 0
          %4433 = vmatpush1.bf16.msra.mxu0 %v4416
          %4434 = vmatprep.subr.bf16.mxu0 0
          %4435 = vmatpush1.bf16.msra.mxu0 %v4417
          %4436 = vmatprep.subr.bf16.mxu0 0
          %4437 = vmatpush1.bf16.msra.mxu0 %v4418
          %4438 = vmatprep.subr.bf16.mxu0 0
          %4439 = vmatpush1.bf16.msra.mxu0 %v4419
          %4440 = vmatprep.subr.bf16.mxu0 0
          %4441 = vmatpush1.bf16.msra.mxu0 %v4420
          %4442 = vmatprep.subr.bf16.mxu0 0
          %4443 = vmatpush1.bf16.msra.mxu0 %v4421
          %4444 = vmatprep.subr.bf16.mxu0 0
          %4445 = vmatpush1.bf16.msra.mxu0 %v4422
          %4446 = vmatprep.subr.bf16.mxu0 0
          %4447 = vmatpush1.bf16.msra.mxu0 %v4423
          %4448 = vmatprep.subr.bf16.mxu0 0
          %4449 = vmatpush1.bf16.msra.mxu0 0
          %4450 = vmatprep.subr.bf16.mxu0 0
          %4451 = vmatpush1.bf16.msra.mxu0 0
          %4452 = vmatprep.subr.bf16.mxu0 0
          %4453 = vmatpush1.bf16.msra.mxu0 0
          %4454 = vmatprep.subr.bf16.mxu0 0
          %4455 = vmatpush1.bf16.msra.mxu0 0
          %4456 = vmatprep.subr.bf16.mxu0 0
          %4457 = vmatpush1.bf16.msra.mxu0 0
          %4458 = vmatprep.subr.bf16.mxu0 0
          %4459 = vmatpush1.bf16.msra.mxu0 0
          %4460 = vmatprep.subr.bf16.mxu0 0
          %4461 = vmatpush1.bf16.msra.mxu0 0
          %4462 = vmatprep.subr.bf16.mxu0 0
          %4463 = vmatpush1.bf16.msra.mxu0 0
          %4464 = vmatprep.mubr.bf16.mxu0 0
          %4465 = vmatmul.mubr.bf16.gmra.mrb[0].mxu0 %v4353
          %v4466 = vpop.f32.mrb[0].mxu0
          %v4467 = vadd.f32 %v4382, %v4466
          %v4468 = vpop.f32.mrb[0].mxu0
          %v4469 = vpop.f32.mrb[0].mxu0
          %v4470 = vadd.f32 %v4382, %v4469
          %v4471 = vpop.f32.mrb[0].mxu0
          %4472 = vmatprep.mubr.bf16.mxu0 0
          %4473 = vmatmul.mubr.bf16.gmra.mrb[0].mxu0 %v4354
          %v4474 = vpop.f32.mrb[0].mxu0
          %v4475 = vadd.f32 %v4382, %v4474
          %v4476 = vpop.f32.mrb[0].mxu0
          %v4477 = vpop.f32.mrb[0].mxu0
          %v4478 = vadd.f32 %v4382, %v4477
          %v4479 = vpop.f32.mrb[0].mxu0
          %4480 = vmatprep.mubr.bf16.mxu0 0
          %4481 = vmatmul.mubr.bf16.gmra.mrb[0].mxu0 %v4355
          %v4482 = vpop.f32.mrb[0].mxu0
          %v4483 = vadd.f32 %v4382, %v4482
          %v4484 = vpop.f32.mrb[0].mxu0
          %v4485 = vpop.f32.mrb[0].mxu0
          %v4486 = vadd.f32 %v4382, %v4485
          %v4487 = vpop.f32.mrb[0].mxu0
          %4488 = vmatprep.mubr.bf16.mxu0 0
          %4489 = vmatmul.mubr.bf16.gmra.mrb[0].mxu0 %v4356
          %v4490 = vpop.f32.mrb[0].mxu0
          %v4491 = vadd.f32 %v4382, %v4490
          %v4492 = vpop.f32.mrb[0].mxu0
          %v4493 = vpop.f32.mrb[0].mxu0
          %v4494 = vadd.f32 %v4382, %v4493
          %v4495 = vpop.f32.mrb[0].mxu0
          %4496 = vmatprep.mubr.bf16.mxu0 0
          %4497 = vmatmul.mubr.bf16.gmra.mrb[0].mxu0 %v4357
          %v4498 = vpop.f32.mrb[0].mxu0
          %v4499 = vadd.f32 %v4382, %v4498
          %v4500 = vpop.f32.mrb[0].mxu0
          %v4501 = vpop.f32.mrb[0].mxu0
          %v4502 = vadd.f32 %v4382, %v4501
          %v4503 = vpop.f32.mrb[0].mxu0
          %4504 = vmatprep.mubr.bf16.mxu0 0
          %4505 = vmatmul.mubr.bf16.gmra.mrb[0].mxu0 %v4358
          %v4506 = vpop.f32.mrb[0].mxu0
          %v4507 = vadd.f32 %v4382, %v4506
          %v4508 = vpop.f32.mrb[0].mxu0
          %v4509 = vpop.f32.mrb[0].mxu0
          %v4510 = vadd.f32 %v4382, %v4509
          %v4511 = vpop.f32.mrb[0].mxu0
          %4512 = vmatprep.mubr.bf16.mxu0 0
          %4513 = vmatmul.mubr.bf16.gmra.mrb[0].mxu0 %v4359
          %v4514 = vpop.f32.mrb[0].mxu0
          %v4515 = vadd.f32 %v4382, %v4514
          %v4516 = vpop.f32.mrb[0].mxu0
          %v4517 = vpop.f32.mrb[0].mxu0
          %v4518 = vadd.f32 %v4382, %v4517
          %v4519 = vpop.f32.mrb[0].mxu0
          %4520 = vmatprep.mubr.bf16.mxu0 0
          %4521 = vmatmul.mubr.bf16.gmra.mrb[0].mxu0 %v4360
          %v4522 = vpop.f32.mrb[0].mxu0
          %v4523 = vadd.f32 %v4382, %v4522
          %v4524 = vpop.f32.mrb[0].mxu0
          %v4525 = vpop.f32.mrb[0].mxu0
          %v4526 = vadd.f32 %v4382, %v4525
          %v4527 = vpop.f32.mrb[0].mxu0
          %4528 = vdwg.mxu0
          %4529 = vst [vmem:[%s26] sm:$0xff] %v4467
          %4530 = vst [vmem:[%s26 + $0x8] sm:$0xff] %v4470
          %4531 = vst [vmem:[%s26 + $0x10] sm:$0xff] %v4475
          %4532 = vst [vmem:[%s26 + $0x18] sm:$0xff] %v4478
          %4533 = vst [vmem:[%s26 + $0x20] sm:$0xff] %v4483
          %4534 = vst [vmem:[%s26 + $0x28] sm:$0xff] %v4486
          %4535 = vst [vmem:[%s26 + $0x30] sm:$0xff] %v4491
          %4536 = vst [vmem:[%s26 + $0x38] sm:$0xff] %v4494
          %4537 = vst [vmem:[%s26 + $0x40] sm:$0xff] %v4499
          %4538 = vst [vmem:[%s26 + $0x48] sm:$0xff] %v4502
          %4539 = vst [vmem:[%s26 + $0x50] sm:$0xff] %v4507
          %4540 = vst [vmem:[%s26 + $0x58] sm:$0xff] %v4510
          %4541 = vst [vmem:[%s26 + $0x60] sm:$0xff] %v4515
          %4542 = vst [vmem:[%s26 + $0x68] sm:$0xff] %v4518
          %4543 = vst [vmem:[%s26 + $0x70] sm:$0xff] %v4523
          %4544 = vst [vmem:[%s26 + $0x78] sm:$0xff] %v4526
        $region200: #{forward_pallas.1} parent=123 // pred_fallthru
          _
        // Predicated region
        $region201: #{forward_pallas.1} parent=123 // pred_check
          %p4545 = pneg %p632
        $region202: #{forward_pallas.1} parent=123 // pred_check_branch
          %4547 = sbr.rel (%p4545) target = $region204
        $region203: #{forward_pallas.1} parent=123 // pred_region
          _
        $region204: #{forward_pallas.1} parent=123 // pred_fallthru
          _
        // Predicated region
        $region205: #{forward_pallas.1} parent=123 // pred_check
          %p4548 = pneg %p632
        $region206: #{forward_pallas.1} parent=123 // pred_check_branch
          %4550 = sbr.rel (%p4548) target = $region208
        $region207: #{forward_pallas.1} parent=123 // pred_region
          _
        $region208: #{forward_pallas.1} parent=123 // pred_fallthru
          _
      $region124: #{forward_pallas.1} parent=5 // pred_fallthru
        _
      %p4551 = scmp.le.s32.totalorder 2, %s38
      // Predicated region
      $region209: #{forward_pallas.1} parent=5 // pred_check
        %p4552 = pneg %p4551
      $region210: #{forward_pallas.1} parent=5 // pred_check_branch
        %4554 = sbr.rel (%p4552) target = $region212
      $region211: #{forward_pallas.1} parent=5 // pred_region
        %s4555 = ssub.s32 %s38, 2
      $region212: #{forward_pallas.1} parent=5 // pred_fallthru
        _
    $region6: #{forward_pallas.1} parent=1 // loop_footer
      %s42 = sadd.s32 1, %s38
    $region7: #{forward_pallas.1} parent=1 // loop_footer_branch
      %37 = sbr.rel target = $region3
    $region8: #{forward_pallas.1} parent=1 // loop_exit
      _
    %4556 = vsyncpa [#allocation6], 1
    %s4557 = scalar_lea.sflag [#allocation6], 1
    %4558 = vsyncpa %s4557, 1
    %4559 = vsyncpa [#allocation8], 1
    %4560 = vsyncpa [#allocation11], 1
    %4561 = vsyncpa [#allocation14], 1
    %4562 = vsyncpa [#allocation17], 1
    %4563 = vsyncpa [#allocation20], 1

</llo_original>
